<compile_context>
chip_gen: v7x
topology: tpu7x:2x2x1
jax: 0.10.0
libtpu: 0.0.40
codegen_flags: <defaults>
</compile_context>

<pallas_src>
import functools
import math

import numpy as np
import jax
import jax.numpy as jnp
from jax.experimental import pallas as pl
from jax.experimental.pallas import tpu as pltpu


def _round_up(x, m):
    return (x + m - 1) // m * m


# -----------------------------------------------------------------------------
# pallas_call builder: one grid step == one (batch, row-strip) tile.
# -----------------------------------------------------------------------------
def _resblock_pallas(x_flat, mask, w1, b1, w2, b2, *, C, Q, m1, m2,
                     in_rows, h1_rows, n_strips):
    B = x_flat.shape[0]

    base1 = Q + 1            # first flat position of the conv1 run
    base2 = 2 * Q + 1        # first flat position of the conv2 / output run
    off = 7                  # h1 scratch index = flat position + off (=> aligned store)
    d_offsets = (-(Q + 1), -Q, -(Q - 1), -1, 0, 1, Q - 1, Q, Q + 1)
    t1 = tuple(base1 + d for d in d_offsets)          # conv1 tap starts (x buffer)
    t2 = tuple(base2 + d + off for d in d_offsets)    # conv2 tap starts (h1 buffer)
    st = base1 + off                                  # aligned h1 store offset
    res_tap = d_offsets.index(base2 - base1)          # conv1 tap reused as residual

    def kernel(x_ref, w1_ref, b1_ref, w2_ref, b2_ref, mask_ref, o_ref, h1_ref):
        # ---- conv1: 9 taps concatenated along K -> one (m1, 9C) @ (9C, C) ----
        taps = [x_ref[t:t + m1, :] for t in t1]              # 9 x (m1, C) bf16
        lhs1 = jnp.concatenate(taps, axis=1)                 # (m1, 9C) bf16
        h1 = jnp.dot(lhs1, w1_ref[...], preferred_element_type=jnp.float32)
        # BN1 bias + ReLU, then zero the pad-column / out-of-image-row garbage
        h1 = jnp.maximum(h1 + b1_ref[...], 0.0) * mask_ref[...]

        # ---- h1 stays in VMEM (bf16).  Only the small never-written halo rows
        #      are zeroed (done every step: cheap, and megacore-safe). ----
        h1_ref[0:st, :] = jnp.zeros((st, C), jnp.bfloat16)
        h1_ref[st + m1:h1_rows, :] = jnp.zeros((h1_rows - st - m1, C), jnp.bfloat16)
        h1_ref[st:st + m1, :] = h1.astype(jnp.bfloat16)       # tile-aligned store

        # ---- conv2: same merged-K scheme, reading the bf16 scratch ----
        taps2 = [h1_ref[t:t + m2, :] for t in t2]             # 9 x (m2, C) bf16
        lhs2 = jnp.concatenate(taps2, axis=1)                 # (m2, 9C) bf16
        h2 = jnp.dot(lhs2, w2_ref[...], preferred_element_type=jnp.float32)
        h2 = h2 + b2_ref[...]

        # ---- residual add (reuses an already-sliced conv1 tap) + final ReLU ----
        x_res = taps[res_tap][:m2, :].astype(jnp.float32)
        o_ref[...] = jnp.maximum(h2 + x_res, 0.0)

    return pl.pallas_call(
        kernel,
        grid=(B, n_strips),
        in_specs=[
            pl.BlockSpec((None, None, in_rows, C), lambda b, s: (b, s, 0, 0)),
            pl.BlockSpec((9 * C, C), lambda b, s: (0, 0)),
            pl.BlockSpec((1, C), lambda b, s: (0, 0)),
            pl.BlockSpec((9 * C, C), lambda b, s: (0, 0)),
            pl.BlockSpec((1, C), lambda b, s: (0, 0)),
            pl.BlockSpec((None, m1, 1), lambda b, s: (s, 0, 0)),
        ],
        out_specs=pl.BlockSpec((None, None, m2, C), lambda b, s: (b, s, 0, 0)),
        out_shape=jax.ShapeDtypeStruct((B, n_strips, m2, C), jnp.float32),
        scratch_shapes=[pltpu.VMEM((h1_rows, C), jnp.bfloat16)],
        compiler_params=pltpu.CompilerParams(
            dimension_semantics=("parallel", "parallel"),
            vmem_limit_bytes=16 * 1024 * 1024,
        ),
    )(x_flat, w1, b1, w2, b2, mask)


# -----------------------------------------------------------------------------
# Wrapper: layout plumbing only (NCHW<->NHWC, halo strips, flat padded layout).
# -----------------------------------------------------------------------------
def resblock_forward(params, x_nchw, *, n_row_strips=2):
    """relu(BN2(conv2(relu(BN1(conv1(x))))) + x); NCHW in/out like PyTorch."""
    x = jnp.transpose(x_nchw, (0, 2, 3, 1)).astype(jnp.bfloat16)  # NHWC, bf16 DMA
    B, H, W, C = x.shape
    assert H % n_row_strips == 0, "row strips must divide H"
    S = H // n_row_strips                  # output rows per grid step
    Q = _round_up(W + 2, 8)                # padded row pitch (sublane aligned)
    m1 = (S + 2) * Q                       # conv1 run length (h1 rows incl. halo)
    m2 = S * Q                             # conv2 / output run length
    in_rows = (S + 4) * Q + 8              # >= max conv1 tap read, multiple of 8
    h1_rows = 3 * Q + m2 + 16              # >= max conv2 tap read, multiple of 8

    # Flat padded layout: (batch, strip, flat padded pixel, channel).
    # Each strip carries a 2-row input halo so conv1 can recompute the h1 halo.
    xp = jnp.pad(x, ((0, 0), (2, 2), (1, Q - W - 1), (0, 0)))     # (B, H+4, Q, C)
    strips = jnp.stack(
        [xp[:, s * S:s * S + S + 4] for s in range(n_row_strips)], axis=1)
    x_flat = strips.reshape(B, n_row_strips, (S + 4) * Q, C)
    x_flat = jnp.pad(x_flat, ((0, 0), (0, 0), (0, in_rows - (S + 4) * Q), (0, 0)))

    # Per-strip keep-mask for the conv1 run (1 on real pixels, 0 on conv padding
    # columns / rows outside the image).  Host-side constant: no in-kernel div.
    a = np.arange(m1) + (Q + 1)
    col = a % Q
    row_in_buf = a // Q
    mask = np.zeros((n_row_strips, m1, 1), np.float32)
    for s in range(n_row_strips):
        img_row = s * S - 2 + row_in_buf
        keep = (col >= 1) & (col <= W) & (img_row >= 0) & (img_row < H)
        mask[s, :, 0] = keep.astype(np.float32)
    mask = jnp.asarray(mask)

    out = _resblock_pallas(
        x_flat, mask, params["w1"], params["b1"], params["w2"], params["b2"],
        C=C, Q=Q, m1=m1, m2=m2, in_rows=in_rows, h1_rows=h1_rows,
        n_strips=n_row_strips)

    # Flat padded-run layout back to NHWC, then NCHW.
    out = out.reshape(B, n_row_strips, S, Q, C)[:, :, :, :W, :]
    out = out.reshape(B, H, W, C)
    return jnp.transpose(out, (0, 3, 1, 2))


# -----------------------------------------------------------------------------
# Parameter init (deterministic, BN in eval mode, scale folded into weights)
# -----------------------------------------------------------------------------
def init_resblock(key, channel_size):
    ks = jax.random.split(key, 10)
    c = channel_size

    def conv_w(kk):
        return jax.random.normal(kk, (3, 3, c, c), jnp.float32) / math.sqrt(9 * c)

    def bn(kg, kb, km, kv):
        gamma = jax.random.uniform(kg, (c,), minval=0.5, maxval=1.5)
        beta = jax.random.normal(kb, (c,)) * 0.1
        mean = jax.random.normal(km, (c,)) * 0.1
        var = jax.random.uniform(kv, (c,), minval=0.5, maxval=1.5)
        scale = gamma / jnp.sqrt(var + 1e-5)
        bias = beta - mean * scale
        return scale.astype(jnp.float32), bias.astype(jnp.float32)

    w1 = conv_w(ks[0]); s1, b1 = bn(ks[1], ks[2], ks[3], ks[4])
    w2 = conv_w(ks[5]); s2, b2 = bn(ks[6], ks[7], ks[8], ks[9])

    params = {
        # BN scale folded into the conv output channels; (ki, kj, cin) flattened
        # along K to match the kernel's im2col tap order; stored bf16 for MXU.
        "w1": (w1 * s1).reshape(9 * c, c).astype(jnp.bfloat16),
        "b1": b1.reshape(1, c),
        "w2": (w2 * s2).reshape(9 * c, c).astype(jnp.bfloat16),
        "b2": b2.reshape(1, c),
    }
    raw = {"w1": w1, "s1": s1, "b1": b1, "w2": w2, "s2": s2, "b2": b2}
    return params, raw


# -----------------------------------------------------------------------------
# Pure-JAX f32 reference (same math, unfused) for a sanity check
# -----------------------------------------------------------------------------
def resblock_reference(raw, x_nchw):
    # The kernel consumes a bf16 copy of x; mirror that so the check isolates
    # matmul/activation rounding rather than input quantization.
    x = jnp.transpose(x_nchw, (0, 2, 3, 1)).astype(jnp.bfloat16).astype(jnp.float32)

    def conv(h, w):
        return jax.lax.conv_general_dilated(
            h, w, window_strides=(1, 1), padding="SAME",
            dimension_numbers=("NHWC", "HWIO", "NHWC"),
            precision=jax.lax.Precision.HIGHEST)

    h = jnp.maximum(conv(x, raw["w1"]) * raw["s1"] + raw["b1"], 0.0)
    h = conv(h, raw["w2"]) * raw["s2"] + raw["b2"]
    out = jnp.maximum(h + x, 0.0)
    return jnp.transpose(out, (0, 3, 1, 2))


# -----------------------------------------------------------------------------
if __name__ == "__main__":
    # channel_size = 128 keeps every load/store lane-dense (128-lane vregs).
    B, C, H, W = 2, 128, 16, 16
    key = jax.random.PRNGKey(0)
    kp, kx = jax.random.split(key)

    params, raw = init_resblock(kp, C)
    x = jax.random.normal(kx, (B, C, H, W), dtype=jnp.float32)   # NCHW like PyTorch

    fwd = jax.jit(functools.partial(resblock_forward, n_row_strips=2))
    out = fwd(params, x)
    jax.block_until_ready(out)

    assert out.shape == (B, C, H, W), out.shape
    assert bool(jnp.all(jnp.isfinite(out)))
    assert bool(jnp.all(out >= 0.0))

    # Loose-tolerance check vs. f32 reference (kernel uses bf16 MXU operands
    # and a bf16 intermediate activation).
    ref = resblock_reference(raw, x)
    rel_err = float(jnp.max(jnp.abs(out - ref)) / (jnp.max(jnp.abs(ref)) + 1e-6))
    assert rel_err < 5e-2, rel_err

    print("KERNEL_OK")
</pallas_src>

<mosaic_0001>
module attributes {stable_mosaic.version = 11 : i64} {
  func.func @kernel(%arg0: i32, %arg1: i32, %arg2: memref<1x1x296x128xbf16, #tpu.memory_space<vmem>>, %arg3: memref<1152x128xbf16, #tpu.memory_space<vmem>>, %arg4: memref<1x128xf32, #tpu.memory_space<vmem>>, %arg5: memref<1152x128xbf16, #tpu.memory_space<vmem>>, %arg6: memref<1x128xf32, #tpu.memory_space<vmem>>, %arg7: memref<1x240x1xf32, #tpu.memory_space<vmem>>, %arg8: memref<1x1x192x128xf32, #tpu.memory_space<vmem>>, %arg9: memref<280x128xbf16, #tpu.memory_space<vmem>>) attributes {dimension_semantics = [#tpu.dimension_semantics<parallel>, #tpu.dimension_semantics<parallel>], iteration_bounds = array<i64: 2, 2>, scalar_prefetch = 0 : i64, scratch_operands = 1 : i64, tpu.core_type = #tpu.core_type<tc>, window_params = [{transform_indices = @transform_0, window_bounds = array<i64: 1, 1, 296, 128>}, {pipeline_mode = #tpu.pipeline_mode<synchronous>, transform_indices = @transform_1, window_bounds = array<i64: 1152, 128>}, {pipeline_mode = #tpu.pipeline_mode<synchronous>, transform_indices = @transform_2, window_bounds = array<i64: 1, 128>}, {pipeline_mode = #tpu.pipeline_mode<synchronous>, transform_indices = @transform_3, window_bounds = array<i64: 1152, 128>}, {pipeline_mode = #tpu.pipeline_mode<synchronous>, transform_indices = @transform_4, window_bounds = array<i64: 1, 128>}, {transform_indices = @transform_5, window_bounds = array<i64: 1, 240, 1>}, {transform_indices = @transform_6, window_bounds = array<i64: 1, 1, 192, 128>}]} {
    %c0 = arith.constant 0 : index
    %c0_0 = arith.constant 0 : index
    %c0_1 = arith.constant 0 : index
    %c0_2 = arith.constant 0 : index
    %0 = vector.load %arg2[%c0, %c0_0, %c0_1, %c0_2] : memref<1x1x296x128xbf16, #tpu.memory_space<vmem>>, vector<1x1x240x128xbf16>
    %1 = vector.shape_cast %0 : vector<1x1x240x128xbf16> to vector<240x128xbf16>
    %c0_3 = arith.constant 0 : index
    %c0_4 = arith.constant 0 : index
    %c1 = arith.constant 1 : index
    %c0_5 = arith.constant 0 : index
    %2 = vector.load %arg2[%c0_3, %c0_4, %c1, %c0_5] : memref<1x1x296x128xbf16, #tpu.memory_space<vmem>>, vector<1x1x240x128xbf16>
    %3 = vector.shape_cast %2 : vector<1x1x240x128xbf16> to vector<240x128xbf16>
    %c0_6 = arith.constant 0 : index
    %c0_7 = arith.constant 0 : index
    %c2 = arith.constant 2 : index
    %c0_8 = arith.constant 0 : index
    %4 = vector.load %arg2[%c0_6, %c0_7, %c2, %c0_8] : memref<1x1x296x128xbf16, #tpu.memory_space<vmem>>, vector<1x1x240x128xbf16>
    %5 = vector.shape_cast %4 : vector<1x1x240x128xbf16> to vector<240x128xbf16>
    %c0_9 = arith.constant 0 : index
    %c0_10 = arith.constant 0 : index
    %c24 = arith.constant 24 : index
    %c0_11 = arith.constant 0 : index
    %6 = vector.load %arg2[%c0_9, %c0_10, %c24, %c0_11] : memref<1x1x296x128xbf16, #tpu.memory_space<vmem>>, vector<1x1x240x128xbf16>
    %7 = vector.shape_cast %6 : vector<1x1x240x128xbf16> to vector<240x128xbf16>
    %c0_12 = arith.constant 0 : index
    %c0_13 = arith.constant 0 : index
    %c25 = arith.constant 25 : index
    %c0_14 = arith.constant 0 : index
    %8 = vector.load %arg2[%c0_12, %c0_13, %c25, %c0_14] : memref<1x1x296x128xbf16, #tpu.memory_space<vmem>>, vector<1x1x240x128xbf16>
    %9 = vector.shape_cast %8 : vector<1x1x240x128xbf16> to vector<240x128xbf16>
    %c0_15 = arith.constant 0 : index
    %c0_16 = arith.constant 0 : index
    %c26 = arith.constant 26 : index
    %c0_17 = arith.constant 0 : index
    %10 = vector.load %arg2[%c0_15, %c0_16, %c26, %c0_17] : memref<1x1x296x128xbf16, #tpu.memory_space<vmem>>, vector<1x1x240x128xbf16>
    %11 = vector.shape_cast %10 : vector<1x1x240x128xbf16> to vector<240x128xbf16>
    %c0_18 = arith.constant 0 : index
    %c0_19 = arith.constant 0 : index
    %c48 = arith.constant 48 : index
    %c0_20 = arith.constant 0 : index
    %12 = vector.load %arg2[%c0_18, %c0_19, %c48, %c0_20] : memref<1x1x296x128xbf16, #tpu.memory_space<vmem>>, vector<1x1x240x128xbf16>
    %13 = vector.shape_cast %12 : vector<1x1x240x128xbf16> to vector<240x128xbf16>
    %c0_21 = arith.constant 0 : index
    %c0_22 = arith.constant 0 : index
    %c49 = arith.constant 49 : index
    %c0_23 = arith.constant 0 : index
    %14 = vector.load %arg2[%c0_21, %c0_22, %c49, %c0_23] : memref<1x1x296x128xbf16, #tpu.memory_space<vmem>>, vector<1x1x240x128xbf16>
    %15 = vector.shape_cast %14 : vector<1x1x240x128xbf16> to vector<240x128xbf16>
    %c0_24 = arith.constant 0 : index
    %c0_25 = arith.constant 0 : index
    %c50 = arith.constant 50 : index
    %c0_26 = arith.constant 0 : index
    %16 = vector.load %arg2[%c0_24, %c0_25, %c50, %c0_26] : memref<1x1x296x128xbf16, #tpu.memory_space<vmem>>, vector<1x1x240x128xbf16>
    %17 = vector.shape_cast %16 : vector<1x1x240x128xbf16> to vector<240x128xbf16>
    %18 = tpu.concatenate %1, %3, %5, %7, %9, %11, %13, %15, %17 in 1 : vector<240x128xbf16>, vector<240x128xbf16>, vector<240x128xbf16>, vector<240x128xbf16>, vector<240x128xbf16>, vector<240x128xbf16>, vector<240x128xbf16>, vector<240x128xbf16>, vector<240x128xbf16> -> vector<240x1152xbf16>
    %c0_27 = arith.constant 0 : index
    %c0_28 = arith.constant 0 : index
    %19 = vector.load %arg3[%c0_27, %c0_28] : memref<1152x128xbf16, #tpu.memory_space<vmem>>, vector<1152x128xbf16>
    %cst = arith.constant dense<0.000000e+00> : vector<240x128xf32>
    %20 = tpu.matmul %18, %19, %cst {dimension_numbers = #tpu.dot_dimension_numbers<[1], [0], [0], [1], [0, 0, 1, 1], [], []>} : vector<240x1152xbf16>, vector<1152x128xbf16>, vector<240x128xf32> -> vector<240x128xf32>
    %c0_29 = arith.constant 0 : index
    %c0_30 = arith.constant 0 : index
    %21 = vector.load %arg4[%c0_29, %c0_30] : memref<1x128xf32, #tpu.memory_space<vmem>>, vector<1x128xf32>
    %22 = vector.broadcast %21 : vector<1x128xf32> to vector<240x128xf32>
    %23 = arith.addf %20, %22 : vector<240x128xf32>
    %cst_31 = arith.constant 0.000000e+00 : f32
    %24 = vector.broadcast %cst_31 : f32 to vector<240x128xf32>
    %25 = arith.maximumf %23, %24 : vector<240x128xf32>
    %c0_32 = arith.constant 0 : index
    %c0_33 = arith.constant 0 : index
    %c0_34 = arith.constant 0 : index
    %26 = vector.load %arg7[%c0_32, %c0_33, %c0_34] : memref<1x240x1xf32, #tpu.memory_space<vmem>>, vector<1x240x1xf32>
    %27 = vector.shape_cast %26 : vector<1x240x1xf32> to vector<240x1xf32>
    %28 = vector.broadcast %27 : vector<240x1xf32> to vector<240x128xf32>
    %29 = arith.mulf %25, %28 : vector<240x128xf32>
    %cst_35 = arith.constant 0.000000e+00 : bf16
    %30 = vector.broadcast %cst_35 : bf16 to vector<32x128xbf16>
    %c0_36 = arith.constant 0 : index
    %c0_37 = arith.constant 0 : index
    %31 = vector.load %arg9[%c0_36, %c0_37] : memref<280x128xbf16, #tpu.memory_space<vmem>>, vector<32x128xbf16>
    tpu.vector_store %arg9[%c0_36, %c0_37], %30 {strides = array<i32>} : memref<280x128xbf16, #tpu.memory_space<vmem>>, vector<32x128xbf16>,
    %cst_38 = arith.constant 0.000000e+00 : bf16
    %32 = vector.broadcast %cst_38 : bf16 to vector<8x128xbf16>
    %c272 = arith.constant 272 : index
    %c0_39 = arith.constant 0 : index
    %33 = vector.load %arg9[%c272, %c0_39] : memref<280x128xbf16, #tpu.memory_space<vmem>>, vector<8x128xbf16>
    tpu.vector_store %arg9[%c272, %c0_39], %32 {strides = array<i32>} : memref<280x128xbf16, #tpu.memory_space<vmem>>, vector<8x128xbf16>,
    %34 = arith.truncf %29 : vector<240x128xf32> to vector<240x128xbf16>
    %c32 = arith.constant 32 : index
    %c0_40 = arith.constant 0 : index
    %35 = vector.load %arg9[%c32, %c0_40] : memref<280x128xbf16, #tpu.memory_space<vmem>>, vector<240x128xbf16>
    tpu.vector_store %arg9[%c32, %c0_40], %34 {strides = array<i32>} : memref<280x128xbf16, #tpu.memory_space<vmem>>, vector<240x128xbf16>,
    %c31 = arith.constant 31 : index
    %c0_41 = arith.constant 0 : index
    %36 = vector.load %arg9[%c31, %c0_41] : memref<280x128xbf16, #tpu.memory_space<vmem>>, vector<192x128xbf16>
    %c32_42 = arith.constant 32 : index
    %c0_43 = arith.constant 0 : index
    %37 = vector.load %arg9[%c32_42, %c0_43] : memref<280x128xbf16, #tpu.memory_space<vmem>>, vector<192x128xbf16>
    %c33 = arith.constant 33 : index
    %c0_44 = arith.constant 0 : index
    %38 = vector.load %arg9[%c33, %c0_44] : memref<280x128xbf16, #tpu.memory_space<vmem>>, vector<192x128xbf16>
    %c55 = arith.constant 55 : index
    %c0_45 = arith.constant 0 : index
    %39 = vector.load %arg9[%c55, %c0_45] : memref<280x128xbf16, #tpu.memory_space<vmem>>, vector<192x128xbf16>
    %c56 = arith.constant 56 : index
    %c0_46 = arith.constant 0 : index
    %40 = vector.load %arg9[%c56, %c0_46] : memref<280x128xbf16, #tpu.memory_space<vmem>>, vector<192x128xbf16>
    %c57 = arith.constant 57 : index
    %c0_47 = arith.constant 0 : index
    %41 = vector.load %arg9[%c57, %c0_47] : memref<280x128xbf16, #tpu.memory_space<vmem>>, vector<192x128xbf16>
    %c79 = arith.constant 79 : index
    %c0_48 = arith.constant 0 : index
    %42 = vector.load %arg9[%c79, %c0_48] : memref<280x128xbf16, #tpu.memory_space<vmem>>, vector<192x128xbf16>
    %c80 = arith.constant 80 : index
    %c0_49 = arith.constant 0 : index
    %43 = vector.load %arg9[%c80, %c0_49] : memref<280x128xbf16, #tpu.memory_space<vmem>>, vector<192x128xbf16>
    %c81 = arith.constant 81 : index
    %c0_50 = arith.constant 0 : index
    %44 = vector.load %arg9[%c81, %c0_50] : memref<280x128xbf16, #tpu.memory_space<vmem>>, vector<192x128xbf16>
    %45 = tpu.concatenate %36, %37, %38, %39, %40, %41, %42, %43, %44 in 1 : vector<192x128xbf16>, vector<192x128xbf16>, vector<192x128xbf16>, vector<192x128xbf16>, vector<192x128xbf16>, vector<192x128xbf16>, vector<192x128xbf16>, vector<192x128xbf16>, vector<192x128xbf16> -> vector<192x1152xbf16>
    %c0_51 = arith.constant 0 : index
    %c0_52 = arith.constant 0 : index
    %46 = vector.load %arg5[%c0_51, %c0_52] : memref<1152x128xbf16, #tpu.memory_space<vmem>>, vector<1152x128xbf16>
    %cst_53 = arith.constant dense<0.000000e+00> : vector<192x128xf32>
    %47 = tpu.matmul %45, %46, %cst_53 {dimension_numbers = #tpu.dot_dimension_numbers<[1], [0], [0], [1], [0, 0, 1, 1], [], []>} : vector<192x1152xbf16>, vector<1152x128xbf16>, vector<192x128xf32> -> vector<192x128xf32>
    %c0_54 = arith.constant 0 : index
    %c0_55 = arith.constant 0 : index
    %48 = vector.load %arg6[%c0_54, %c0_55] : memref<1x128xf32, #tpu.memory_space<vmem>>, vector<1x128xf32>
    %49 = vector.broadcast %48 : vector<1x128xf32> to vector<192x128xf32>
    %50 = arith.addf %47, %49 : vector<192x128xf32>
    %51 = vector.extract_strided_slice %15 {offsets = [0, 0], sizes = [192, 128], strides = [1, 1]} : vector<240x128xbf16> to vector<192x128xbf16>
    %52 = arith.extf %51 : vector<192x128xbf16> to vector<192x128xf32>
    %53 = arith.addf %50, %52 : vector<192x128xf32>
    %cst_56 = arith.constant 0.000000e+00 : f32
    %54 = vector.broadcast %cst_56 : f32 to vector<192x128xf32>
    %55 = arith.maximumf %53, %54 : vector<192x128xf32>
    %c0_57 = arith.constant 0 : index
    %c0_58 = arith.constant 0 : index
    %c0_59 = arith.constant 0 : index
    %c0_60 = arith.constant 0 : index
    %56 = vector.load %arg8[%c0_57, %c0_58, %c0_59, %c0_60] : memref<1x1x192x128xf32, #tpu.memory_space<vmem>>, vector<1x1x192x128xf32>
    %57 = vector.shape_cast %56 : vector<1x1x192x128xf32> to vector<192x128xf32>
    %58 = vector.shape_cast %55 : vector<192x128xf32> to vector<1x1x192x128xf32>
    tpu.vector_store %arg8[%c0_57, %c0_58, %c0_59, %c0_60], %58 {strides = array<i32>} : memref<1x1x192x128xf32, #tpu.memory_space<vmem>>, vector<1x1x192x128xf32>,
    return
  }
  func.func @transform_0(%arg0: i32, %arg1: i32) -> (i32, i32, i32, i32) {
    %c0_i32 = arith.constant 0 : i32
    %c0_i32_0 = arith.constant 0 : i32
    %c0_i32_1 = arith.constant 0 : i32
    return %arg0, %arg1, %c0_i32, %c0_i32_0 : i32, i32, i32, i32
  }
  func.func @transform_1(%arg0: i32, %arg1: i32) -> (i32, i32) {
    %c0_i32 = arith.constant 0 : i32
    %c0_i32_0 = arith.constant 0 : i32
    %c0_i32_1 = arith.constant 0 : i32
    return %c0_i32, %c0_i32_0 : i32, i32
  }
  func.func @transform_2(%arg0: i32, %arg1: i32) -> (i32, i32) {
    %c0_i32 = arith.constant 0 : i32
    %c0_i32_0 = arith.constant 0 : i32
    %c0_i32_1 = arith.constant 0 : i32
    return %c0_i32, %c0_i32_0 : i32, i32
  }
  func.func @transform_3(%arg0: i32, %arg1: i32) -> (i32, i32) {
    %c0_i32 = arith.constant 0 : i32
    %c0_i32_0 = arith.constant 0 : i32
    %c0_i32_1 = arith.constant 0 : i32
    return %c0_i32, %c0_i32_0 : i32, i32
  }
  func.func @transform_4(%arg0: i32, %arg1: i32) -> (i32, i32) {
    %c0_i32 = arith.constant 0 : i32
    %c0_i32_0 = arith.constant 0 : i32
    %c0_i32_1 = arith.constant 0 : i32
    return %c0_i32, %c0_i32_0 : i32, i32
  }
  func.func @transform_5(%arg0: i32, %arg1: i32) -> (i32, i32, i32) {
    %c0_i32 = arith.constant 0 : i32
    %c0_i32_0 = arith.constant 0 : i32
    %c0_i32_1 = arith.constant 0 : i32
    return %arg1, %c0_i32, %c0_i32_0 : i32, i32, i32
  }
  func.func @transform_6(%arg0: i32, %arg1: i32) -> (i32, i32, i32, i32) {
    %c0_i32 = arith.constant 0 : i32
    %c0_i32_0 = arith.constant 0 : i32
    %c0_i32_1 = arith.constant 0 : i32
    return %arg0, %arg1, %c0_i32, %c0_i32_0 : i32, i32, i32, i32
  }
}

</mosaic_0001>

<llo_original>
// kernel: resblock_forward.1
$region0: #{resblock_forward.1}
  #allocation0 [shape = 'u32[]', space=smem, size = 0x4, offset = 0x4, fixed_abs, tag = 'smem constant byte address 0x4 - core index']
  #allocation1 [shape = 'u32[144,128]{1,0:T(1,128)}', space=vmem, size = 0x12000, scoped, tag = 'internal scratch']
  #allocation2 [shape = 'bf16[280,128]{1,0:T(8,128)(2,1)}', space=vmem, size = 0x11800, scoped, tag = 'scratch operand']
  %s0 = inlined_call_operand.vmem [shape: bf16[2,2,296,128], index: 0, kind: input, shape index: {}]
  %s1 = inlined_call_operand.vmem [shape: bf16[1152,128], index: 1, kind: input, shape index: {}]
  %s2 = inlined_call_operand.vmem [shape: f32[1,128], index: 2, kind: input, shape index: {}]
  %s3 = inlined_call_operand.vmem [shape: bf16[1152,128], index: 3, kind: input, shape index: {}]
  %s4 = inlined_call_operand.vmem [shape: f32[1,128], index: 4, kind: input, shape index: {}]
  %s5 = inlined_call_operand.vmem [shape: f32[2,240,1], index: 5, kind: input, shape index: {}]
  %s6 = inlined_call_operand.vmem [shape: f32[2,2,192,128], index: 6, kind: output, shape index: {}]
  %s7 = sld [smem:[#allocation0]]
  $region57: #{resblock_forward.1} parent=0
    _
  %s9 = ssub.s32 1, %s7
  %s10 = scalar_select 0, %s9, %s7
  loop: start=0, step=1, limit=6
  $region2: #{resblock_forward.1} parent=0 // loop_pre_header
    _
  $region3: #{resblock_forward.1} parent=0 // loop_header
    %s12 = sphi 0, %s16
    %p13 = scmp.ge.s32.totalorder %s12, 6
    %s19 = sphi 0, %s31
    %s20 = sphi 0, %s27
    %s21 = sphi 0, %s19
    %s22 = sphi 0, %s20
    %s23 = sphi 0, %s21
    %s24 = sphi 0, %s22
    %s36 = sphi 0, %s38
    %s39 = sphi 0, %s36
    %s40 = sphi 0, %s39
    %s56 = sphi 0, %s40
    %s60 = sphi 0, %s60
    %s62 = sphi 0, %s60
    %s63 = sphi 0, %s62
    %s77 = sphi 0, %s63
    %s81 = sphi 0, %s81
    %s83 = sphi 0, %s81
    %s84 = sphi 0, %s83
    %s98 = sphi 0, %s84
    %s102 = sphi 0, %s102
    %s104 = sphi 0, %s102
    %s105 = sphi 0, %s104
    %s119 = sphi 0, %s105
    %s123 = sphi 0, %s123
    %s125 = sphi 0, %s123
    %s126 = sphi 0, %s125
    %s140 = sphi 0, %s126
    %s146 = sphi 0, %s148
    %s149 = sphi 0, %s146
    %s150 = sphi 0, %s149
    %s166 = sphi 0, %s150
    %s174 = sphi 0, %s176
    %s177 = sphi 0, %s174
    %s178 = sphi 0, %s177
    %s194 = sphi 0, %s178
  $region4: #{resblock_forward.1} parent=0 // loop_header_branch
    %15 = sbr.rel (%p13) target = $region8
  $region5: #{resblock_forward.1} parent=0 // loop_body
    %s17 = ssub.s32 %s12, 1
    %s18 = ssub.s32 %s12, 2
    %s25 = sadd.s32 1, %s20
    %p26 = scmp.ge.s32.totalorder %s25, 2
    %s27 = scalar_select %p26, 0, %s25
    %s28 = sadd.s32 1, %s19
    %s29 = scalar_select %p26, %s28, %s19
    %p30 = scmp.ge.s32.totalorder %s29, 2
    %s31 = scalar_select %p30, 0, %s29
    %s32 = ssub.s32 %s19, %s31
    %s33 = ssub.s32 %s20, %s27
    %s34 = sor.u32 %s32, %s33
    %p35 = scmp.eq.s32.totalorder %s34, 0
    %s37 = sadd.s32 %s36, 1
    %s38 = scalar_select %p35, %s36, %s37
    %p41 = pneg %p35
    %p42 = scmp.eq.s32.totalorder %s12, 3
    %p43 = por %p41, %p42
    %p44 = scmp.ne.s32.totalorder %s36, %s39
    %p45 = scmp.eq.s32.totalorder %s12, 0
    %p46 = por %p44, %p45
    %p47 = scmp.ne.s32.totalorder %s36, %s39
    %p48 = scmp.eq.s32.totalorder %s17, 3
    %p49 = por %p47, %p48
    %p50 = scmp.ne.s32.totalorder %s39, %s40
    %p51 = scmp.eq.s32.totalorder %s17, 0
    %p52 = por %p50, %p51
    %p53 = scmp.ne.s32.totalorder %s39, %s40
    %p54 = scmp.eq.s32.totalorder %s18, 3
    %p55 = por %p53, %p54
    %p57 = scmp.ne.s32.totalorder %s40, %s56
    %p58 = scmp.eq.s32.totalorder %s18, 0
    %p59 = por %p57, %p58
    %s61 = sadd.s32 %s60, 1
    %p64 = scmp.eq.s32.totalorder %s12, 3
    %p65 = scmp.ne.s32.totalorder %s60, %s62
    %p66 = scmp.eq.s32.totalorder %s12, 0
    %p67 = por %p65, %p66
    %p68 = scmp.ne.s32.totalorder %s60, %s62
    %p69 = scmp.eq.s32.totalorder %s17, 3
    %p70 = por %p68, %p69
    %p71 = scmp.ne.s32.totalorder %s62, %s63
    %p72 = scmp.eq.s32.totalorder %s17, 0
    %p73 = por %p71, %p72
    %p74 = scmp.ne.s32.totalorder %s62, %s63
    %p75 = scmp.eq.s32.totalorder %s18, 3
    %p76 = por %p74, %p75
    %p78 = scmp.ne.s32.totalorder %s63, %s77
    %p79 = scmp.eq.s32.totalorder %s18, 0
    %p80 = por %p78, %p79
    %s82 = sadd.s32 %s81, 1
    %p85 = scmp.eq.s32.totalorder %s12, 3
    %p86 = scmp.ne.s32.totalorder %s81, %s83
    %p87 = scmp.eq.s32.totalorder %s12, 0
    %p88 = por %p86, %p87
    %p89 = scmp.ne.s32.totalorder %s81, %s83
    %p90 = scmp.eq.s32.totalorder %s17, 3
    %p91 = por %p89, %p90
    %p92 = scmp.ne.s32.totalorder %s83, %s84
    %p93 = scmp.eq.s32.totalorder %s17, 0
    %p94 = por %p92, %p93
    %p95 = scmp.ne.s32.totalorder %s83, %s84
    %p96 = scmp.eq.s32.totalorder %s18, 3
    %p97 = por %p95, %p96
    %p99 = scmp.ne.s32.totalorder %s84, %s98
    %p100 = scmp.eq.s32.totalorder %s18, 0
    %p101 = por %p99, %p100
    %s103 = sadd.s32 %s102, 1
    %p106 = scmp.eq.s32.totalorder %s12, 3
    %p107 = scmp.ne.s32.totalorder %s102, %s104
    %p108 = scmp.eq.s32.totalorder %s12, 0
    %p109 = por %p107, %p108
    %p110 = scmp.ne.s32.totalorder %s102, %s104
    %p111 = scmp.eq.s32.totalorder %s17, 3
    %p112 = por %p110, %p111
    %p113 = scmp.ne.s32.totalorder %s104, %s105
    %p114 = scmp.eq.s32.totalorder %s17, 0
    %p115 = por %p113, %p114
    %p116 = scmp.ne.s32.totalorder %s104, %s105
    %p117 = scmp.eq.s32.totalorder %s18, 3
    %p118 = por %p116, %p117
    %p120 = scmp.ne.s32.totalorder %s105, %s119
    %p121 = scmp.eq.s32.totalorder %s18, 0
    %p122 = por %p120, %p121
    %s124 = sadd.s32 %s123, 1
    %p127 = scmp.eq.s32.totalorder %s12, 3
    %p128 = scmp.ne.s32.totalorder %s123, %s125
    %p129 = scmp.eq.s32.totalorder %s12, 0
    %p130 = por %p128, %p129
    %p131 = scmp.ne.s32.totalorder %s123, %s125
    %p132 = scmp.eq.s32.totalorder %s17, 3
    %p133 = por %p131, %p132
    %p134 = scmp.ne.s32.totalorder %s125, %s126
    %p135 = scmp.eq.s32.totalorder %s17, 0
    %p136 = por %p134, %p135
    %p137 = scmp.ne.s32.totalorder %s125, %s126
    %p138 = scmp.eq.s32.totalorder %s18, 3
    %p139 = por %p137, %p138
    %p141 = scmp.ne.s32.totalorder %s126, %s140
    %p142 = scmp.eq.s32.totalorder %s18, 0
    %p143 = por %p141, %p142
    %s144 = ssub.s32 %s20, %s27
    %p145 = scmp.eq.s32.totalorder %s144, 0
    %s147 = sadd.s32 %s146, 1
    %s148 = scalar_select %p145, %s146, %s147
    %p151 = pneg %p145
    %p152 = scmp.eq.s32.totalorder %s12, 3
    %p153 = por %p151, %p152
    %p154 = scmp.ne.s32.totalorder %s146, %s149
    %p155 = scmp.eq.s32.totalorder %s12, 0
    %p156 = por %p154, %p155
    %p157 = scmp.ne.s32.totalorder %s146, %s149
    %p158 = scmp.eq.s32.totalorder %s17, 3
    %p159 = por %p157, %p158
    %p160 = scmp.ne.s32.totalorder %s149, %s150
    %p161 = scmp.eq.s32.totalorder %s17, 0
    %p162 = por %p160, %p161
    %p163 = scmp.ne.s32.totalorder %s149, %s150
    %p164 = scmp.eq.s32.totalorder %s18, 3
    %p165 = por %p163, %p164
    %p167 = scmp.ne.s32.totalorder %s150, %s166
    %p168 = scmp.eq.s32.totalorder %s18, 0
    %p169 = por %p167, %p168
    %s170 = ssub.s32 %s19, %s31
    %s171 = ssub.s32 %s20, %s27
    %s172 = sor.u32 %s170, %s171
    %p173 = scmp.eq.s32.totalorder %s172, 0
    %s175 = sadd.s32 %s174, 1
    %s176 = scalar_select %p173, %s174, %s175
    %p179 = pneg %p173
    %p180 = scmp.eq.s32.totalorder %s12, 3
    %p181 = por %p179, %p180
    %p182 = scmp.ne.s32.totalorder %s174, %s177
    %p183 = scmp.eq.s32.totalorder %s12, 0
    %p184 = por %p182, %p183
    %p185 = scmp.ne.s32.totalorder %s174, %s177
    %p186 = scmp.eq.s32.totalorder %s17, 3
    %p187 = por %p185, %p186
    %p188 = scmp.ne.s32.totalorder %s177, %s178
    %p189 = scmp.eq.s32.totalorder %s17, 0
    %p190 = por %p188, %p189
    %p191 = scmp.ne.s32.totalorder %s177, %s178
    %p192 = scmp.eq.s32.totalorder %s18, 3
    %p193 = por %p191, %p192
    %p195 = scmp.ne.s32.totalorder %s178, %s194
    %p196 = scmp.eq.s32.totalorder %s18, 0
    %p197 = por %p195, %p196
    %p198 = scmp.le.s32.totalorder 1, %s12
    %p199 = scmp.lt.s32.totalorder %s12, 5
    %p200 = pnand %p198, %p199
    %p201 = pneg %p200
    // Predicated region
    $region9: #{resblock_forward.1} parent=5 // pred_check
      _
    $region10: #{resblock_forward.1} parent=5 // pred_check_branch
      %203 = sbr.rel (%p200) target = $region12
    $region11: #{resblock_forward.1} parent=5 // pred_region
      %s204 = ssub.s32 %s12, 1
      // Predicated region
      $region13: #{resblock_forward.1} parent=11 // pred_check
        %p205 = pneg %p73
      $region14: #{resblock_forward.1} parent=11 // pred_check_branch
        %207 = sbr.rel (%p205) target = $region16
      $region15: #{resblock_forward.1} parent=11 // pred_region
        _
      $region16: #{resblock_forward.1} parent=11 // pred_fallthru
        _
      // Predicated region
      $region17: #{resblock_forward.1} parent=11 // pred_check
        %p208 = pneg %p94
      $region18: #{resblock_forward.1} parent=11 // pred_check_branch
        %210 = sbr.rel (%p208) target = $region20
      $region19: #{resblock_forward.1} parent=11 // pred_region
        _
      $region20: #{resblock_forward.1} parent=11 // pred_fallthru
        _
      // Predicated region
      $region21: #{resblock_forward.1} parent=11 // pred_check
        %p211 = pneg %p115
      $region22: #{resblock_forward.1} parent=11 // pred_check_branch
        %213 = sbr.rel (%p211) target = $region24
      $region23: #{resblock_forward.1} parent=11 // pred_region
        _
      $region24: #{resblock_forward.1} parent=11 // pred_fallthru
        _
      // Predicated region
      $region25: #{resblock_forward.1} parent=11 // pred_check
        %p214 = pneg %p136
      $region26: #{resblock_forward.1} parent=11 // pred_check_branch
        %216 = sbr.rel (%p214) target = $region28
      $region27: #{resblock_forward.1} parent=11 // pred_region
        _
      $region28: #{resblock_forward.1} parent=11 // pred_fallthru
        _
    $region12: #{resblock_forward.1} parent=5 // pred_fallthru
      _
    %p217 = scmp.lt.s32.totalorder %s12, 4
    // Predicated region
    $region29: #{resblock_forward.1} parent=5 // pred_check
      %p218 = pneg %p217
    $region30: #{resblock_forward.1} parent=5 // pred_check_branch
      %220 = sbr.rel (%p218) target = $region32
    $region31: #{resblock_forward.1} parent=5 // pred_region
      // Predicated region
      $region33: #{resblock_forward.1} parent=31 // pred_check
        %p221 = pneg %p46
      $region34: #{resblock_forward.1} parent=31 // pred_check_branch
        %223 = sbr.rel (%p221) target = $region36
      $region35: #{resblock_forward.1} parent=31 // pred_region
        %p224 = scmp.lt.s32.totalorder %s19, 1
        %s225 = scalar_select %p224, %s19, 1
        %p226 = scmp.lt.s32.totalorder %s20, 1
        %s227 = scalar_select %p226, %s20, 1
        %s228 = smul.addr %s227, 37
        %s229 = smul.addr %s225, 74
        %s230 = sadd.s32 %s228, %s229
        %s231 = smul.addr %s230, 4
        %s232 = scalar_lea.vmem %s0, %s231
      $region36: #{resblock_forward.1} parent=31 // pred_fallthru
        _
      // Predicated region
      $region37: #{resblock_forward.1} parent=31 // pred_check
        %p233 = pneg %p156
      $region38: #{resblock_forward.1} parent=31 // pred_check_branch
        %235 = sbr.rel (%p233) target = $region40
      $region39: #{resblock_forward.1} parent=31 // pred_region
        %p236 = scmp.lt.s32.totalorder %s20, 1
        %s237 = scalar_select %p236, %s20, 1
        %s238 = smul.addr %s237, 30
        %s239 = smul.addr %s238, 8
        %s240 = scalar_lea.vmem %s5, %s239
      $region40: #{resblock_forward.1} parent=31 // pred_fallthru
        _
    $region32: #{resblock_forward.1} parent=5 // pred_fallthru
      _
    %p241 = scmp.le.s32.totalorder 1, %s12
    %p242 = scmp.lt.s32.totalorder %s12, 5
    %p243 = pnand %p241, %p242
    %p244 = pneg %p243
    // Predicated region
    $region41: #{resblock_forward.1} parent=5 // pred_check
      _
    $region42: #{resblock_forward.1} parent=5 // pred_check_branch
      %246 = sbr.rel (%p243) target = $region44
    $region43: #{resblock_forward.1} parent=5 // pred_region
      %s247 = ssub.s32 %s12, 1
      %p248 = scmp.lt.s32.totalorder %s21, 1
      %s249 = scalar_select %p248, %s21, 1
      %p250 = scmp.lt.s32.totalorder %s22, 1
      %s251 = scalar_select %p250, %s22, 1
      %s252 = smul.addr %s251, 37
      %s253 = smul.addr %s249, 74
      %s254 = sadd.s32 %s252, %s253
      %s255 = smul.addr %s254, 4
      %s256 = scalar_lea.vmem %s0, %s255
      %p257 = pneg %p52
      %p258 = pneg %p49
      %p259 = pneg %p73
      %p260 = pneg %p70
      %p261 = pneg %p94
      %p262 = pneg %p91
      %p263 = pneg %p115
      %p264 = pneg %p112
      %p265 = pneg %p136
      %p266 = pneg %p133
      %p267 = scmp.lt.s32.totalorder %s22, 1
      %s268 = scalar_select %p267, %s22, 1
      %s269 = smul.addr %s268, 30
      %s270 = smul.addr %s269, 8
      %s271 = scalar_lea.vmem %s5, %s270
      %p272 = pneg %p162
      %p273 = pneg %p159
      %p274 = pneg %p190
      %p275 = pneg %p187
      %p276 = scmp.lt.s32.totalorder %s21, 1
      %s277 = scalar_select %p276, %s21, 1
      %p278 = scmp.lt.s32.totalorder %s22, 1
      %s279 = scalar_select %p278, %s22, 1
      %s280 = smul.addr %s279, 24
      %s281 = smul.addr %s277, 48
      %s282 = sadd.s32 %s280, %s281
      %s283 = smul.addr %s282, 8
      %s284 = scalar_lea.vmem %s6, %s283
      %p285 = scmp.lt.s32.totalorder %s21, 1
      %s286 = scalar_select %p285, %s21, 1
      %p287 = scmp.lt.s32.totalorder %s22, 1
      %s288 = scalar_select %p287, %s22, 1
      %s289 = smul.addr %s288, 37
      %s290 = smul.addr %s286, 74
      %s291 = sadd.s32 %s289, %s290
      %s292 = smul.addr %s291, 4
      %s293 = scalar_lea.vmem %s0, %s292
      %p294 = scmp.lt.s32.totalorder %s22, 1
      %s295 = scalar_select %p294, %s22, 1
      %s296 = smul.addr %s295, 30
      %s297 = smul.addr %s296, 8
      %s298 = scalar_lea.vmem %s5, %s297
      %p299 = scmp.lt.s32.totalorder %s21, 1
      %s300 = scalar_select %p299, %s21, 1
      %p301 = scmp.lt.s32.totalorder %s22, 1
      %s302 = scalar_select %p301, %s22, 1
      %s303 = smul.addr %s302, 24
      %s304 = smul.addr %s300, 48
      %s305 = sadd.s32 %s303, %s304
      %s306 = smul.addr %s305, 8
      %s307 = scalar_lea.vmem %s6, %s306
      %v309 = vld [vmem:[%s293] sm:$0xf]
      %v310 = vld [vmem:[%s293 + $0x4] sm:$0xf]
      %v311 = vld [vmem:[%s293 + $0x8] sm:$0xf]
      %v312 = vld [vmem:[%s293 + $0xc] sm:$0xf]
      %v313 = vld [vmem:[%s293 + $0x10] sm:$0xf]
      %v314 = vld [vmem:[%s293 + $0x14] sm:$0xf]
      %v315 = vld [vmem:[%s293 + $0x18] sm:$0xf]
      %v316 = vld [vmem:[%s293 + $0x1c] sm:$0xf]
      %v317 = vld [vmem:[%s293 + $0x20] sm:$0xf]
      %v318 = vld [vmem:[%s293 + $0x24] sm:$0xf]
      %v319 = vld [vmem:[%s293 + $0x28] sm:$0xf]
      %v320 = vld [vmem:[%s293 + $0x2c] sm:$0xf]
      %v321 = vld [vmem:[%s293 + $0x30] sm:$0xf]
      %v322 = vld [vmem:[%s293 + $0x34] sm:$0xf]
      %v323 = vld [vmem:[%s293 + $0x38] sm:$0xf]
      %v324 = vld [vmem:[%s293 + $0x3c] sm:$0xf]
      %v325 = vld [vmem:[%s293 + $0x40] sm:$0xf]
      %v326 = vld [vmem:[%s293 + $0x44] sm:$0xf]
      %v327 = vld [vmem:[%s293 + $0x48] sm:$0xf]
      %v328 = vld [vmem:[%s293 + $0x4c] sm:$0xf]
      %v329 = vld [vmem:[%s293 + $0x50] sm:$0xf]
      %v330 = vld [vmem:[%s293 + $0x54] sm:$0xf]
      %v331 = vld [vmem:[%s293 + $0x58] sm:$0xf]
      %v332 = vld [vmem:[%s293 + $0x5c] sm:$0xf]
      %v333 = vld [vmem:[%s293 + $0x60] sm:$0xf]
      %v334 = vld [vmem:[%s293 + $0x64] sm:$0xf]
      %v335 = vld [vmem:[%s293 + $0x68] sm:$0xf]
      %v336 = vld [vmem:[%s293 + $0x6c] sm:$0xf]
      %v337 = vld [vmem:[%s293 + $0x70] sm:$0xf]
      %v338 = vld [vmem:[%s293 + $0x74] sm:$0xf]
      %v339 = vld [vmem:[%s293 + $0x78] sm:$0x1]
      %v340 = vld [vmem:[%s293] sm:$0xe]
      %v341 = vld [vmem:[%s293 + $0x78] sm:$0xf]
      %v342 = vld [vmem:[%s293 + $0x7c] sm:$0xf]
      %v343 = vld [vmem:[%s293 + $0x80] sm:$0xf]
      %v344 = vld [vmem:[%s293 + $0x84] sm:$0x1]
      %v345 = vld [vmem:[%s293 + $0xc] sm:$0xe]
      %v346 = vld [vmem:[%s293 + $0x84] sm:$0xf]
      %v347 = vld [vmem:[%s293 + $0x88] sm:$0xf]
      %v348 = vld [vmem:[%s293 + $0x8c] sm:$0xf]
      %v349 = vld [vmem:[%s293 + $0x18] sm:$0xf]
      %v350 = vld [vmem:[%s293 + $0x1c] sm:$0xf]
      %v351 = vld [vmem:[%s293 + $0x20] sm:$0xf]
      %v352 = vld [vmem:[%s293 + $0x24] sm:$0xf]
      %v353 = vld [vmem:[%s293 + $0x28] sm:$0xf]
      %v354 = vld [vmem:[%s293 + $0x2c] sm:$0xf]
      %v355 = vld [vmem:[%s293 + $0x30] sm:$0xf]
      %v356 = vld [vmem:[%s293 + $0x34] sm:$0xf]
      %v357 = vld [vmem:[%s293 + $0x38] sm:$0xf]
      %v358 = vld [vmem:[%s293 + $0x3c] sm:$0xf]
      %v359 = vld [vmem:[%s293 + $0x40] sm:$0xf]
      %v360 = vld [vmem:[%s293 + $0x44] sm:$0xf]
      %v361 = vld [vmem:[%s293 + $0x48] sm:$0xf]
      %v362 = vld [vmem:[%s293 + $0x4c] sm:$0xf]
      %v363 = vld [vmem:[%s293 + $0x50] sm:$0xf]
      %v364 = vld [vmem:[%s293 + $0x54] sm:$0xf]
      %v365 = vld [vmem:[%s293 + $0x58] sm:$0xf]
      %v366 = vld [vmem:[%s293 + $0x5c] sm:$0xf]
      %v367 = vld [vmem:[%s293 + $0x60] sm:$0xf]
      %v368 = vld [vmem:[%s293 + $0x64] sm:$0xf]
      %v369 = vld [vmem:[%s293 + $0x68] sm:$0xf]
      %v370 = vld [vmem:[%s293 + $0x6c] sm:$0xf]
      %v371 = vld [vmem:[%s293 + $0x70] sm:$0xf]
      %v372 = vld [vmem:[%s293 + $0x74] sm:$0xf]
      %v373 = vld [vmem:[%s293 + $0x78] sm:$0xf]
      %v374 = vld [vmem:[%s293 + $0x7c] sm:$0xf]
      %v375 = vld [vmem:[%s293 + $0x80] sm:$0xf]
      %v376 = vld [vmem:[%s293 + $0x84] sm:$0xf]
      %v377 = vld [vmem:[%s293 + $0x88] sm:$0xf]
      %v378 = vld [vmem:[%s293 + $0x8c] sm:$0xf]
      %v379 = vld [vmem:[%s293 + $0x90] sm:$0x1]
      %v380 = vld [vmem:[%s293 + $0x18] sm:$0xe]
      %v411 = vunpack.c.l.b16 %v309
      %v412 = vunpack.c.l.b16 %v310
      %v413 = vunpack.c.l.b16 %v311
      %v414 = vunpack.c.l.b16 %v312
      %v415 = vunpack.c.l.b16 %v313
      %v416 = vunpack.c.l.b16 %v314
      %v417 = vunpack.c.l.b16 %v315
      %v418 = vunpack.c.l.b16 %v316
      %v419 = vunpack.c.l.b16 %v317
      %v420 = vunpack.c.l.b16 %v318
      %v421 = vunpack.c.l.b16 %v319
      %v422 = vunpack.c.l.b16 %v320
      %v423 = vunpack.c.l.b16 %v321
      %v424 = vunpack.c.l.b16 %v322
      %v425 = vunpack.c.l.b16 %v323
      %v426 = vunpack.c.l.b16 %v324
      %v427 = vunpack.c.l.b16 %v325
      %v428 = vunpack.c.l.b16 %v326
      %v429 = vunpack.c.l.b16 %v327
      %v430 = vunpack.c.l.b16 %v328
      %v431 = vunpack.c.l.b16 %v329
      %v432 = vunpack.c.l.b16 %v330
      %v433 = vunpack.c.l.b16 %v331
      %v434 = vunpack.c.l.b16 %v332
      %v435 = vunpack.c.l.b16 %v333
      %v436 = vunpack.c.l.b16 %v334
      %v437 = vunpack.c.l.b16 %v335
      %v438 = vunpack.c.l.b16 %v336
      %v439 = vunpack.c.l.b16 %v337
      %v440 = vunpack.c.l.b16 %v338
      %v441 = vpack.c.b16 %v412, %v411
      %v442 = vpack.c.b16 %v414, %v413
      %v443 = vpack.c.b16 %v416, %v415
      %v444 = vpack.c.b16 %v418, %v417
      %v445 = vpack.c.b16 %v420, %v419
      %v446 = vpack.c.b16 %v422, %v421
      %v447 = vpack.c.b16 %v424, %v423
      %v448 = vpack.c.b16 %v426, %v425
      %v449 = vpack.c.b16 %v428, %v427
      %v450 = vpack.c.b16 %v430, %v429
      %v451 = vpack.c.b16 %v432, %v431
      %v452 = vpack.c.b16 %v434, %v433
      %v453 = vpack.c.b16 %v436, %v435
      %v454 = vpack.c.b16 %v438, %v437
      %v455 = vpack.c.b16 %v440, %v439
      %v472 = vunpack.c.l.b16 %v339
      %v473 = vpack.c.b16 %v472, %v472
      %vm474 = vsmask.f32 7424
      %v476 = vshrl.u32 %v441, 16
      %v478 = vshll.u32 %v441, 16
      %v480 = vrot.slane %v478, 1
      %v481 = vor.u32 %v476, %v480
      %v483 = vshll.u32 %v442, 16
      %v485 = vrot.slane %v483, 1
      %v486 = vsel %vm474, %v481, %v485
      %v487 = vshrl.u32 %v442, 16
      %v489 = vor.u32 %v487, %v485
      %v491 = vshll.u32 %v443, 16
      %v493 = vrot.slane %v491, 1
      %v494 = vsel %vm474, %v489, %v493
      %v495 = vshrl.u32 %v443, 16
      %v497 = vor.u32 %v495, %v493
      %v499 = vshll.u32 %v444, 16
      %v501 = vrot.slane %v499, 1
      %v502 = vsel %vm474, %v497, %v501
      %v503 = vshrl.u32 %v444, 16
      %v505 = vor.u32 %v503, %v501
      %v507 = vshll.u32 %v445, 16
      %v509 = vrot.slane %v507, 1
      %v510 = vsel %vm474, %v505, %v509
      %v511 = vshrl.u32 %v445, 16
      %v513 = vor.u32 %v511, %v509
      %v515 = vshll.u32 %v446, 16
      %v517 = vrot.slane %v515, 1
      %v518 = vsel %vm474, %v513, %v517
      %v519 = vshrl.u32 %v446, 16
      %v521 = vor.u32 %v519, %v517
      %v523 = vshll.u32 %v447, 16
      %v525 = vrot.slane %v523, 1
      %v526 = vsel %vm474, %v521, %v525
      %v527 = vshrl.u32 %v447, 16
      %v529 = vor.u32 %v527, %v525
      %v531 = vshll.u32 %v448, 16
      %v533 = vrot.slane %v531, 1
      %v534 = vsel %vm474, %v529, %v533
      %v535 = vshrl.u32 %v448, 16
      %v537 = vor.u32 %v535, %v533
      %v539 = vshll.u32 %v449, 16
      %v541 = vrot.slane %v539, 1
      %v542 = vsel %vm474, %v537, %v541
      %v543 = vshrl.u32 %v449, 16
      %v545 = vor.u32 %v543, %v541
      %v547 = vshll.u32 %v450, 16
      %v549 = vrot.slane %v547, 1
      %v550 = vsel %vm474, %v545, %v549
      %v551 = vshrl.u32 %v450, 16
      %v553 = vor.u32 %v551, %v549
      %v555 = vshll.u32 %v451, 16
      %v557 = vrot.slane %v555, 1
      %v558 = vsel %vm474, %v553, %v557
      %v559 = vshrl.u32 %v451, 16
      %v561 = vor.u32 %v559, %v557
      %v563 = vshll.u32 %v452, 16
      %v565 = vrot.slane %v563, 1
      %v566 = vsel %vm474, %v561, %v565
      %v567 = vshrl.u32 %v452, 16
      %v569 = vor.u32 %v567, %v565
      %v571 = vshll.u32 %v453, 16
      %v573 = vrot.slane %v571, 1
      %v574 = vsel %vm474, %v569, %v573
      %v575 = vshrl.u32 %v453, 16
      %v577 = vor.u32 %v575, %v573
      %v579 = vshll.u32 %v454, 16
      %v581 = vrot.slane %v579, 1
      %v582 = vsel %vm474, %v577, %v581
      %v583 = vshrl.u32 %v454, 16
      %v585 = vor.u32 %v583, %v581
      %v587 = vshll.u32 %v455, 16
      %v589 = vrot.slane %v587, 1
      %v590 = vsel %vm474, %v585, %v589
      %v591 = vshrl.u32 %v455, 16
      %v593 = vor.u32 %v591, %v589
      %v595 = vshll.u32 %v473, 16
      %v597 = vrot.slane %v595, 1
      %v598 = vsel %vm474, %v593, %v597
      %v615 = vunpack.c.l.b16 %v340
      %v616 = vpack.c.b16 %v412, %v615
      %vm617 = vcmask 1046528
      %v618 = vrot.slane %v616, 1
      %v619 = vrot.slane %v442, 1
      %v620 = vsel %vm617, %v618, %v619
      %v621 = vrot.slane %v443, 1
      %v622 = vsel %vm617, %v619, %v621
      %v623 = vrot.slane %v444, 1
      %v624 = vsel %vm617, %v621, %v623
      %v625 = vrot.slane %v445, 1
      %v626 = vsel %vm617, %v623, %v625
      %v627 = vrot.slane %v446, 1
      %v628 = vsel %vm617, %v625, %v627
      %v629 = vrot.slane %v447, 1
      %v630 = vsel %vm617, %v627, %v629
      %v631 = vrot.slane %v448, 1
      %v632 = vsel %vm617, %v629, %v631
      %v633 = vrot.slane %v449, 1
      %v634 = vsel %vm617, %v631, %v633
      %v635 = vrot.slane %v450, 1
      %v636 = vsel %vm617, %v633, %v635
      %v637 = vrot.slane %v451, 1
      %v638 = vsel %vm617, %v635, %v637
      %v639 = vrot.slane %v452, 1
      %v640 = vsel %vm617, %v637, %v639
      %v641 = vrot.slane %v453, 1
      %v642 = vsel %vm617, %v639, %v641
      %v643 = vrot.slane %v454, 1
      %v644 = vsel %vm617, %v641, %v643
      %v645 = vrot.slane %v455, 1
      %v646 = vsel %vm617, %v643, %v645
      %v647 = vrot.slane %v473, 1
      %v648 = vsel %vm617, %v645, %v647
      %v667 = vunpack.c.l.b16 %v341
      %v668 = vunpack.c.l.b16 %v342
      %v669 = vunpack.c.l.b16 %v343
      %v670 = vpack.c.b16 %v415, %v414
      %v671 = vpack.c.b16 %v417, %v416
      %v672 = vpack.c.b16 %v419, %v418
      %v673 = vpack.c.b16 %v421, %v420
      %v674 = vpack.c.b16 %v423, %v422
      %v675 = vpack.c.b16 %v425, %v424
      %v676 = vpack.c.b16 %v427, %v426
      %v677 = vpack.c.b16 %v429, %v428
      %v678 = vpack.c.b16 %v431, %v430
      %v679 = vpack.c.b16 %v433, %v432
      %v680 = vpack.c.b16 %v435, %v434
      %v681 = vpack.c.b16 %v437, %v436
      %v682 = vpack.c.b16 %v439, %v438
      %v683 = vpack.c.b16 %v667, %v440
      %v684 = vpack.c.b16 %v669, %v668
      %v701 = vunpack.c.l.b16 %v344
      %v702 = vpack.c.b16 %v701, %v701
      %v704 = vshrl.u32 %v670, 16
      %v706 = vshll.u32 %v670, 16
      %v708 = vrot.slane %v706, 1
      %v709 = vor.u32 %v704, %v708
      %v711 = vshll.u32 %v671, 16
      %v713 = vrot.slane %v711, 1
      %v714 = vsel %vm474, %v709, %v713
      %v715 = vshrl.u32 %v671, 16
      %v717 = vor.u32 %v715, %v713
      %v719 = vshll.u32 %v672, 16
      %v721 = vrot.slane %v719, 1
      %v722 = vsel %vm474, %v717, %v721
      %v723 = vshrl.u32 %v672, 16
      %v725 = vor.u32 %v723, %v721
      %v727 = vshll.u32 %v673, 16
      %v729 = vrot.slane %v727, 1
      %v730 = vsel %vm474, %v725, %v729
      %v731 = vshrl.u32 %v673, 16
      %v733 = vor.u32 %v731, %v729
      %v735 = vshll.u32 %v674, 16
      %v737 = vrot.slane %v735, 1
      %v738 = vsel %vm474, %v733, %v737
      %v739 = vshrl.u32 %v674, 16
      %v741 = vor.u32 %v739, %v737
      %v743 = vshll.u32 %v675, 16
      %v745 = vrot.slane %v743, 1
      %v746 = vsel %vm474, %v741, %v745
      %v747 = vshrl.u32 %v675, 16
      %v749 = vor.u32 %v747, %v745
      %v751 = vshll.u32 %v676, 16
      %v753 = vrot.slane %v751, 1
      %v754 = vsel %vm474, %v749, %v753
      %v755 = vshrl.u32 %v676, 16
      %v757 = vor.u32 %v755, %v753
      %v759 = vshll.u32 %v677, 16
      %v761 = vrot.slane %v759, 1
      %v762 = vsel %vm474, %v757, %v761
      %v763 = vshrl.u32 %v677, 16
      %v765 = vor.u32 %v763, %v761
      %v767 = vshll.u32 %v678, 16
      %v769 = vrot.slane %v767, 1
      %v770 = vsel %vm474, %v765, %v769
      %v771 = vshrl.u32 %v678, 16
      %v773 = vor.u32 %v771, %v769
      %v775 = vshll.u32 %v679, 16
      %v777 = vrot.slane %v775, 1
      %v778 = vsel %vm474, %v773, %v777
      %v779 = vshrl.u32 %v679, 16
      %v781 = vor.u32 %v779, %v777
      %v783 = vshll.u32 %v680, 16
      %v785 = vrot.slane %v783, 1
      %v786 = vsel %vm474, %v781, %v785
      %v787 = vshrl.u32 %v680, 16
      %v789 = vor.u32 %v787, %v785
      %v791 = vshll.u32 %v681, 16
      %v793 = vrot.slane %v791, 1
      %v794 = vsel %vm474, %v789, %v793
      %v795 = vshrl.u32 %v681, 16
      %v797 = vor.u32 %v795, %v793
      %v799 = vshll.u32 %v682, 16
      %v801 = vrot.slane %v799, 1
      %v802 = vsel %vm474, %v797, %v801
      %v803 = vshrl.u32 %v682, 16
      %v805 = vor.u32 %v803, %v801
      %v807 = vshll.u32 %v683, 16
      %v809 = vrot.slane %v807, 1
      %v810 = vsel %vm474, %v805, %v809
      %v811 = vshrl.u32 %v683, 16
      %v813 = vor.u32 %v811, %v809
      %v815 = vshll.u32 %v684, 16
      %v817 = vrot.slane %v815, 1
      %v818 = vsel %vm474, %v813, %v817
      %v819 = vshrl.u32 %v684, 16
      %v821 = vor.u32 %v819, %v817
      %v823 = vshll.u32 %v702, 16
      %v825 = vrot.slane %v823, 1
      %v826 = vsel %vm474, %v821, %v825
      %v843 = vunpack.c.l.b16 %v345
      %v844 = vpack.c.b16 %v415, %v843
      %v845 = vrot.slane %v844, 1
      %v846 = vrot.slane %v671, 1
      %v847 = vsel %vm617, %v845, %v846
      %v848 = vrot.slane %v672, 1
      %v849 = vsel %vm617, %v846, %v848
      %v850 = vrot.slane %v673, 1
      %v851 = vsel %vm617, %v848, %v850
      %v852 = vrot.slane %v674, 1
      %v853 = vsel %vm617, %v850, %v852
      %v854 = vrot.slane %v675, 1
      %v855 = vsel %vm617, %v852, %v854
      %v856 = vrot.slane %v676, 1
      %v857 = vsel %vm617, %v854, %v856
      %v858 = vrot.slane %v677, 1
      %v859 = vsel %vm617, %v856, %v858
      %v860 = vrot.slane %v678, 1
      %v861 = vsel %vm617, %v858, %v860
      %v862 = vrot.slane %v679, 1
      %v863 = vsel %vm617, %v860, %v862
      %v864 = vrot.slane %v680, 1
      %v865 = vsel %vm617, %v862, %v864
      %v866 = vrot.slane %v681, 1
      %v867 = vsel %vm617, %v864, %v866
      %v868 = vrot.slane %v682, 1
      %v869 = vsel %vm617, %v866, %v868
      %v870 = vrot.slane %v683, 1
      %v871 = vsel %vm617, %v868, %v870
      %v872 = vrot.slane %v684, 1
      %v873 = vsel %vm617, %v870, %v872
      %v874 = vrot.slane %v702, 1
      %v875 = vsel %vm617, %v872, %v874
      %v894 = vunpack.c.l.b16 %v346
      %v895 = vunpack.c.l.b16 %v347
      %v896 = vunpack.c.l.b16 %v348
      %v897 = vpack.c.b16 %v668, %v667
      %v898 = vpack.c.b16 %v894, %v669
      %v899 = vpack.c.b16 %v896, %v895
      %v934 = vunpack.c.l.b16 %v349
      %v935 = vunpack.c.l.b16 %v350
      %v936 = vunpack.c.l.b16 %v351
      %v937 = vunpack.c.l.b16 %v352
      %v938 = vunpack.c.l.b16 %v353
      %v939 = vunpack.c.l.b16 %v354
      %v940 = vunpack.c.l.b16 %v355
      %v941 = vunpack.c.l.b16 %v356
      %v942 = vunpack.c.l.b16 %v357
      %v943 = vunpack.c.l.b16 %v358
      %v944 = vunpack.c.l.b16 %v359
      %v945 = vunpack.c.l.b16 %v360
      %v946 = vunpack.c.l.b16 %v361
      %v947 = vunpack.c.l.b16 %v362
      %v948 = vunpack.c.l.b16 %v363
      %v949 = vunpack.c.l.b16 %v364
      %v950 = vunpack.c.l.b16 %v365
      %v951 = vunpack.c.l.b16 %v366
      %v952 = vunpack.c.l.b16 %v367
      %v953 = vunpack.c.l.b16 %v368
      %v954 = vunpack.c.l.b16 %v369
      %v955 = vunpack.c.l.b16 %v370
      %v956 = vunpack.c.l.b16 %v371
      %v957 = vunpack.c.l.b16 %v372
      %v958 = vunpack.c.l.b16 %v373
      %v959 = vunpack.c.l.b16 %v374
      %v960 = vunpack.c.l.b16 %v375
      %v961 = vunpack.c.l.b16 %v376
      %v962 = vunpack.c.l.b16 %v377
      %v963 = vunpack.c.l.b16 %v378
      %v964 = vunpack.c.l.b16 %v379
      %v965 = vpack.c.b16 %v935, %v934
      %v966 = vpack.c.b16 %v937, %v936
      %v967 = vpack.c.b16 %v939, %v938
      %v968 = vpack.c.b16 %v941, %v940
      %v969 = vpack.c.b16 %v943, %v942
      %v970 = vpack.c.b16 %v945, %v944
      %v971 = vpack.c.b16 %v947, %v946
      %v972 = vpack.c.b16 %v949, %v948
      %v973 = vpack.c.b16 %v951, %v950
      %v974 = vpack.c.b16 %v953, %v952
      %v975 = vpack.c.b16 %v955, %v954
      %v976 = vpack.c.b16 %v957, %v956
      %v977 = vpack.c.b16 %v959, %v958
      %v978 = vpack.c.b16 %v961, %v960
      %v979 = vpack.c.b16 %v963, %v962
      %v980 = vpack.c.b16 %v964, %v964
      %v982 = vshrl.u32 %v965, 16
      %v984 = vshll.u32 %v965, 16
      %v986 = vrot.slane %v984, 1
      %v987 = vor.u32 %v982, %v986
      %v989 = vshll.u32 %v966, 16
      %v991 = vrot.slane %v989, 1
      %v992 = vsel %vm474, %v987, %v991
      %v993 = vshrl.u32 %v966, 16
      %v995 = vor.u32 %v993, %v991
      %v997 = vshll.u32 %v967, 16
      %v999 = vrot.slane %v997, 1
      %v1000 = vsel %vm474, %v995, %v999
      %v1001 = vshrl.u32 %v967, 16
      %v1003 = vor.u32 %v1001, %v999
      %v1005 = vshll.u32 %v968, 16
      %v1007 = vrot.slane %v1005, 1
      %v1008 = vsel %vm474, %v1003, %v1007
      %v1009 = vshrl.u32 %v968, 16
      %v1011 = vor.u32 %v1009, %v1007
      %v1013 = vshll.u32 %v969, 16
      %v1015 = vrot.slane %v1013, 1
      %v1016 = vsel %vm474, %v1011, %v1015
      %v1017 = vshrl.u32 %v969, 16
      %v1019 = vor.u32 %v1017, %v1015
      %v1021 = vshll.u32 %v970, 16
      %v1023 = vrot.slane %v1021, 1
      %v1024 = vsel %vm474, %v1019, %v1023
      %v1025 = vshrl.u32 %v970, 16
      %v1027 = vor.u32 %v1025, %v1023
      %v1029 = vshll.u32 %v971, 16
      %v1031 = vrot.slane %v1029, 1
      %v1032 = vsel %vm474, %v1027, %v1031
      %v1033 = vshrl.u32 %v971, 16
      %v1035 = vor.u32 %v1033, %v1031
      %v1037 = vshll.u32 %v972, 16
      %v1039 = vrot.slane %v1037, 1
      %v1040 = vsel %vm474, %v1035, %v1039
      %v1041 = vshrl.u32 %v972, 16
      %v1043 = vor.u32 %v1041, %v1039
      %v1045 = vshll.u32 %v973, 16
      %v1047 = vrot.slane %v1045, 1
      %v1048 = vsel %vm474, %v1043, %v1047
      %v1049 = vshrl.u32 %v973, 16
      %v1051 = vor.u32 %v1049, %v1047
      %v1053 = vshll.u32 %v974, 16
      %v1055 = vrot.slane %v1053, 1
      %v1056 = vsel %vm474, %v1051, %v1055
      %v1057 = vshrl.u32 %v974, 16
      %v1059 = vor.u32 %v1057, %v1055
      %v1061 = vshll.u32 %v975, 16
      %v1063 = vrot.slane %v1061, 1
      %v1064 = vsel %vm474, %v1059, %v1063
      %v1065 = vshrl.u32 %v975, 16
      %v1067 = vor.u32 %v1065, %v1063
      %v1069 = vshll.u32 %v976, 16
      %v1071 = vrot.slane %v1069, 1
      %v1072 = vsel %vm474, %v1067, %v1071
      %v1073 = vshrl.u32 %v976, 16
      %v1075 = vor.u32 %v1073, %v1071
      %v1077 = vshll.u32 %v977, 16
      %v1079 = vrot.slane %v1077, 1
      %v1080 = vsel %vm474, %v1075, %v1079
      %v1081 = vshrl.u32 %v977, 16
      %v1083 = vor.u32 %v1081, %v1079
      %v1085 = vshll.u32 %v978, 16
      %v1087 = vrot.slane %v1085, 1
      %v1088 = vsel %vm474, %v1083, %v1087
      %v1089 = vshrl.u32 %v978, 16
      %v1091 = vor.u32 %v1089, %v1087
      %v1093 = vshll.u32 %v979, 16
      %v1095 = vrot.slane %v1093, 1
      %v1096 = vsel %vm474, %v1091, %v1095
      %v1097 = vshrl.u32 %v979, 16
      %v1099 = vor.u32 %v1097, %v1095
      %v1101 = vshll.u32 %v980, 16
      %v1103 = vrot.slane %v1101, 1
      %v1104 = vsel %vm474, %v1099, %v1103
      %v1121 = vunpack.c.l.b16 %v380
      %v1122 = vpack.c.b16 %v935, %v1121
      %v1123 = vrot.slane %v1122, 1
      %v1124 = vrot.slane %v966, 1
      %v1125 = vsel %vm617, %v1123, %v1124
      %v1126 = vrot.slane %v967, 1
      %v1127 = vsel %vm617, %v1124, %v1126
      %v1128 = vrot.slane %v968, 1
      %v1129 = vsel %vm617, %v1126, %v1128
      %v1130 = vrot.slane %v969, 1
      %v1131 = vsel %vm617, %v1128, %v1130
      %v1132 = vrot.slane %v970, 1
      %v1133 = vsel %vm617, %v1130, %v1132
      %v1134 = vrot.slane %v971, 1
      %v1135 = vsel %vm617, %v1132, %v1134
      %v1136 = vrot.slane %v972, 1
      %v1137 = vsel %vm617, %v1134, %v1136
      %v1138 = vrot.slane %v973, 1
      %v1139 = vsel %vm617, %v1136, %v1138
      %v1140 = vrot.slane %v974, 1
      %v1141 = vsel %vm617, %v1138, %v1140
      %v1142 = vrot.slane %v975, 1
      %v1143 = vsel %vm617, %v1140, %v1142
      %v1144 = vrot.slane %v976, 1
      %v1145 = vsel %vm617, %v1142, %v1144
      %v1146 = vrot.slane %v977, 1
      %v1147 = vsel %vm617, %v1144, %v1146
      %v1148 = vrot.slane %v978, 1
      %v1149 = vsel %vm617, %v1146, %v1148
      %v1150 = vrot.slane %v979, 1
      %v1151 = vsel %vm617, %v1148, %v1150
      %v1152 = vrot.slane %v980, 1
      %v1153 = vsel %vm617, %v1150, %v1152
      %v1169 = vld [vmem:[%s1] sm:$0xf]
      %v1170 = vld [vmem:[%s1 + $0x4] sm:$0xf]
      %v1171 = vld [vmem:[%s1 + $0x8] sm:$0xf]
      %v1172 = vld [vmem:[%s1 + $0xc] sm:$0xf]
      %v1173 = vld [vmem:[%s1 + $0x10] sm:$0xf]
      %v1174 = vld [vmem:[%s1 + $0x14] sm:$0xf]
      %v1175 = vld [vmem:[%s1 + $0x18] sm:$0xf]
      %v1176 = vld [vmem:[%s1 + $0x1c] sm:$0xf]
      %v1177 = vld [vmem:[%s1 + $0x20] sm:$0xf]
      %v1178 = vld [vmem:[%s1 + $0x24] sm:$0xf]
      %v1179 = vld [vmem:[%s1 + $0x28] sm:$0xf]
      %v1180 = vld [vmem:[%s1 + $0x2c] sm:$0xf]
      %v1181 = vld [vmem:[%s1 + $0x30] sm:$0xf]
      %v1182 = vld [vmem:[%s1 + $0x34] sm:$0xf]
      %v1183 = vld [vmem:[%s1 + $0x38] sm:$0xf]
      %v1184 = vld [vmem:[%s1 + $0x3c] sm:$0xf]
      %v1185 = vld [vmem:[%s1 + $0x40] sm:$0xf]
      %v1186 = vld [vmem:[%s1 + $0x44] sm:$0xf]
      %v1187 = vld [vmem:[%s1 + $0x48] sm:$0xf]
      %v1188 = vld [vmem:[%s1 + $0x4c] sm:$0xf]
      %v1189 = vld [vmem:[%s1 + $0x50] sm:$0xf]
      %v1190 = vld [vmem:[%s1 + $0x54] sm:$0xf]
      %v1191 = vld [vmem:[%s1 + $0x58] sm:$0xf]
      %v1192 = vld [vmem:[%s1 + $0x5c] sm:$0xf]
      %v1193 = vld [vmem:[%s1 + $0x60] sm:$0xf]
      %v1194 = vld [vmem:[%s1 + $0x64] sm:$0xf]
      %v1195 = vld [vmem:[%s1 + $0x68] sm:$0xf]
      %v1196 = vld [vmem:[%s1 + $0x6c] sm:$0xf]
      %v1197 = vld [vmem:[%s1 + $0x70] sm:$0xf]
      %v1198 = vld [vmem:[%s1 + $0x74] sm:$0xf]
      %v1199 = vld [vmem:[%s1 + $0x78] sm:$0xf]
      %v1200 = vld [vmem:[%s1 + $0x7c] sm:$0xf]
      %v1201 = vld [vmem:[%s1 + $0x80] sm:$0xf]
      %v1202 = vld [vmem:[%s1 + $0x84] sm:$0xf]
      %v1203 = vld [vmem:[%s1 + $0x88] sm:$0xf]
      %v1204 = vld [vmem:[%s1 + $0x8c] sm:$0xf]
      %v1205 = vld [vmem:[%s1 + $0x90] sm:$0xf]
      %v1206 = vld [vmem:[%s1 + $0x94] sm:$0xf]
      %v1207 = vld [vmem:[%s1 + $0x98] sm:$0xf]
      %v1208 = vld [vmem:[%s1 + $0x9c] sm:$0xf]
      %v1209 = vld [vmem:[%s1 + $0xa0] sm:$0xf]
      %v1210 = vld [vmem:[%s1 + $0xa4] sm:$0xf]
      %v1211 = vld [vmem:[%s1 + $0xa8] sm:$0xf]
      %v1212 = vld [vmem:[%s1 + $0xac] sm:$0xf]
      %v1213 = vld [vmem:[%s1 + $0xb0] sm:$0xf]
      %v1214 = vld [vmem:[%s1 + $0xb4] sm:$0xf]
      %v1215 = vld [vmem:[%s1 + $0xb8] sm:$0xf]
      %v1216 = vld [vmem:[%s1 + $0xbc] sm:$0xf]
      %v1217 = vld [vmem:[%s1 + $0xc0] sm:$0xf]
      %v1218 = vld [vmem:[%s1 + $0xc4] sm:$0xf]
      %v1219 = vld [vmem:[%s1 + $0xc8] sm:$0xf]
      %v1220 = vld [vmem:[%s1 + $0xcc] sm:$0xf]
      %v1221 = vld [vmem:[%s1 + $0xd0] sm:$0xf]
      %v1222 = vld [vmem:[%s1 + $0xd4] sm:$0xf]
      %v1223 = vld [vmem:[%s1 + $0xd8] sm:$0xf]
      %v1224 = vld [vmem:[%s1 + $0xdc] sm:$0xf]
      %v1225 = vld [vmem:[%s1 + $0xe0] sm:$0xf]
      %v1226 = vld [vmem:[%s1 + $0xe4] sm:$0xf]
      %v1227 = vld [vmem:[%s1 + $0xe8] sm:$0xf]
      %v1228 = vld [vmem:[%s1 + $0xec] sm:$0xf]
      %v1229 = vld [vmem:[%s1 + $0xf0] sm:$0xf]
      %v1230 = vld [vmem:[%s1 + $0xf4] sm:$0xf]
      %v1231 = vld [vmem:[%s1 + $0xf8] sm:$0xf]
      %v1232 = vld [vmem:[%s1 + $0xfc] sm:$0xf]
      %v1233 = vld [vmem:[%s1 + $0x100] sm:$0xf]
      %v1234 = vld [vmem:[%s1 + $0x104] sm:$0xf]
      %v1235 = vld [vmem:[%s1 + $0x108] sm:$0xf]
      %v1236 = vld [vmem:[%s1 + $0x10c] sm:$0xf]
      %v1237 = vld [vmem:[%s1 + $0x110] sm:$0xf]
      %v1238 = vld [vmem:[%s1 + $0x114] sm:$0xf]
      %v1239 = vld [vmem:[%s1 + $0x118] sm:$0xf]
      %v1240 = vld [vmem:[%s1 + $0x11c] sm:$0xf]
      %v1241 = vld [vmem:[%s1 + $0x120] sm:$0xf]
      %v1242 = vld [vmem:[%s1 + $0x124] sm:$0xf]
      %v1243 = vld [vmem:[%s1 + $0x128] sm:$0xf]
      %v1244 = vld [vmem:[%s1 + $0x12c] sm:$0xf]
      %v1245 = vld [vmem:[%s1 + $0x130] sm:$0xf]
      %v1246 = vld [vmem:[%s1 + $0x134] sm:$0xf]
      %v1247 = vld [vmem:[%s1 + $0x138] sm:$0xf]
      %v1248 = vld [vmem:[%s1 + $0x13c] sm:$0xf]
      %v1249 = vld [vmem:[%s1 + $0x140] sm:$0xf]
      %v1250 = vld [vmem:[%s1 + $0x144] sm:$0xf]
      %v1251 = vld [vmem:[%s1 + $0x148] sm:$0xf]
      %v1252 = vld [vmem:[%s1 + $0x14c] sm:$0xf]
      %v1253 = vld [vmem:[%s1 + $0x150] sm:$0xf]
      %v1254 = vld [vmem:[%s1 + $0x154] sm:$0xf]
      %v1255 = vld [vmem:[%s1 + $0x158] sm:$0xf]
      %v1256 = vld [vmem:[%s1 + $0x15c] sm:$0xf]
      %v1257 = vld [vmem:[%s1 + $0x160] sm:$0xf]
      %v1258 = vld [vmem:[%s1 + $0x164] sm:$0xf]
      %v1259 = vld [vmem:[%s1 + $0x168] sm:$0xf]
      %v1260 = vld [vmem:[%s1 + $0x16c] sm:$0xf]
      %v1261 = vld [vmem:[%s1 + $0x170] sm:$0xf]
      %v1262 = vld [vmem:[%s1 + $0x174] sm:$0xf]
      %v1263 = vld [vmem:[%s1 + $0x178] sm:$0xf]
      %v1264 = vld [vmem:[%s1 + $0x17c] sm:$0xf]
      %v1265 = vld [vmem:[%s1 + $0x180] sm:$0xf]
      %v1266 = vld [vmem:[%s1 + $0x184] sm:$0xf]
      %v1267 = vld [vmem:[%s1 + $0x188] sm:$0xf]
      %v1268 = vld [vmem:[%s1 + $0x18c] sm:$0xf]
      %v1269 = vld [vmem:[%s1 + $0x190] sm:$0xf]
      %v1270 = vld [vmem:[%s1 + $0x194] sm:$0xf]
      %v1271 = vld [vmem:[%s1 + $0x198] sm:$0xf]
      %v1272 = vld [vmem:[%s1 + $0x19c] sm:$0xf]
      %v1273 = vld [vmem:[%s1 + $0x1a0] sm:$0xf]
      %v1274 = vld [vmem:[%s1 + $0x1a4] sm:$0xf]
      %v1275 = vld [vmem:[%s1 + $0x1a8] sm:$0xf]
      %v1276 = vld [vmem:[%s1 + $0x1ac] sm:$0xf]
      %v1277 = vld [vmem:[%s1 + $0x1b0] sm:$0xf]
      %v1278 = vld [vmem:[%s1 + $0x1b4] sm:$0xf]
      %v1279 = vld [vmem:[%s1 + $0x1b8] sm:$0xf]
      %v1280 = vld [vmem:[%s1 + $0x1bc] sm:$0xf]
      %v1281 = vld [vmem:[%s1 + $0x1c0] sm:$0xf]
      %v1282 = vld [vmem:[%s1 + $0x1c4] sm:$0xf]
      %v1283 = vld [vmem:[%s1 + $0x1c8] sm:$0xf]
      %v1284 = vld [vmem:[%s1 + $0x1cc] sm:$0xf]
      %v1285 = vld [vmem:[%s1 + $0x1d0] sm:$0xf]
      %v1286 = vld [vmem:[%s1 + $0x1d4] sm:$0xf]
      %v1287 = vld [vmem:[%s1 + $0x1d8] sm:$0xf]
      %v1288 = vld [vmem:[%s1 + $0x1dc] sm:$0xf]
      %v1289 = vld [vmem:[%s1 + $0x1e0] sm:$0xf]
      %v1290 = vld [vmem:[%s1 + $0x1e4] sm:$0xf]
      %v1291 = vld [vmem:[%s1 + $0x1e8] sm:$0xf]
      %v1292 = vld [vmem:[%s1 + $0x1ec] sm:$0xf]
      %v1293 = vld [vmem:[%s1 + $0x1f0] sm:$0xf]
      %v1294 = vld [vmem:[%s1 + $0x1f4] sm:$0xf]
      %v1295 = vld [vmem:[%s1 + $0x1f8] sm:$0xf]
      %v1296 = vld [vmem:[%s1 + $0x1fc] sm:$0xf]
      %v1297 = vld [vmem:[%s1 + $0x200] sm:$0xf]
      %v1298 = vld [vmem:[%s1 + $0x204] sm:$0xf]
      %v1299 = vld [vmem:[%s1 + $0x208] sm:$0xf]
      %v1300 = vld [vmem:[%s1 + $0x20c] sm:$0xf]
      %v1301 = vld [vmem:[%s1 + $0x210] sm:$0xf]
      %v1302 = vld [vmem:[%s1 + $0x214] sm:$0xf]
      %v1303 = vld [vmem:[%s1 + $0x218] sm:$0xf]
      %v1304 = vld [vmem:[%s1 + $0x21c] sm:$0xf]
      %v1305 = vld [vmem:[%s1 + $0x220] sm:$0xf]
      %v1306 = vld [vmem:[%s1 + $0x224] sm:$0xf]
      %v1307 = vld [vmem:[%s1 + $0x228] sm:$0xf]
      %v1308 = vld [vmem:[%s1 + $0x22c] sm:$0xf]
      %v1309 = vld [vmem:[%s1 + $0x230] sm:$0xf]
      %v1310 = vld [vmem:[%s1 + $0x234] sm:$0xf]
      %v1311 = vld [vmem:[%s1 + $0x238] sm:$0xf]
      %v1312 = vld [vmem:[%s1 + $0x23c] sm:$0xf]
      %v1313 = vld [vmem:[%s2] sm:$0x1]
      %v1315 = vlaneseq
      %v1316 = vshrl.u32 %v1315, 7
      %v1317 = vsub.s32 0, %v1316
      %v1318 = vrot.slane %v1313, %v1317
      %v1464 = vunpack.c.l.b16 %v1169
      %v1465 = vunpack.c.l.b16 %v1170
      %v1466 = vunpack.c.l.b16 %v1171
      %v1467 = vunpack.c.l.b16 %v1172
      %v1468 = vunpack.c.l.b16 %v1173
      %v1469 = vunpack.c.l.b16 %v1174
      %v1470 = vunpack.c.l.b16 %v1175
      %v1471 = vunpack.c.l.b16 %v1176
      %v1472 = vunpack.c.l.b16 %v1177
      %v1473 = vunpack.c.l.b16 %v1178
      %v1474 = vunpack.c.l.b16 %v1179
      %v1475 = vunpack.c.l.b16 %v1180
      %v1476 = vunpack.c.l.b16 %v1181
      %v1477 = vunpack.c.l.b16 %v1182
      %v1478 = vunpack.c.l.b16 %v1183
      %v1479 = vunpack.c.l.b16 %v1184
      %v1480 = vunpack.c.l.b16 %v1185
      %v1481 = vunpack.c.l.b16 %v1186
      %v1482 = vunpack.c.l.b16 %v1187
      %v1483 = vunpack.c.l.b16 %v1188
      %v1484 = vunpack.c.l.b16 %v1189
      %v1485 = vunpack.c.l.b16 %v1190
      %v1486 = vunpack.c.l.b16 %v1191
      %v1487 = vunpack.c.l.b16 %v1192
      %v1488 = vunpack.c.l.b16 %v1193
      %v1489 = vunpack.c.l.b16 %v1194
      %v1490 = vunpack.c.l.b16 %v1195
      %v1491 = vunpack.c.l.b16 %v1196
      %v1492 = vunpack.c.l.b16 %v1197
      %v1493 = vunpack.c.l.b16 %v1198
      %v1494 = vunpack.c.l.b16 %v1199
      %v1495 = vunpack.c.l.b16 %v1200
      %v1496 = vunpack.c.l.b16 %v1201
      %v1497 = vunpack.c.l.b16 %v1202
      %v1498 = vunpack.c.l.b16 %v1203
      %v1499 = vunpack.c.l.b16 %v1204
      %v1500 = vunpack.c.l.b16 %v1205
      %v1501 = vunpack.c.l.b16 %v1206
      %v1502 = vunpack.c.l.b16 %v1207
      %v1503 = vunpack.c.l.b16 %v1208
      %v1504 = vunpack.c.l.b16 %v1209
      %v1505 = vunpack.c.l.b16 %v1210
      %v1506 = vunpack.c.l.b16 %v1211
      %v1507 = vunpack.c.l.b16 %v1212
      %v1508 = vunpack.c.l.b16 %v1213
      %v1509 = vunpack.c.l.b16 %v1214
      %v1510 = vunpack.c.l.b16 %v1215
      %v1511 = vunpack.c.l.b16 %v1216
      %v1512 = vunpack.c.l.b16 %v1217
      %v1513 = vunpack.c.l.b16 %v1218
      %v1514 = vunpack.c.l.b16 %v1219
      %v1515 = vunpack.c.l.b16 %v1220
      %v1516 = vunpack.c.l.b16 %v1221
      %v1517 = vunpack.c.l.b16 %v1222
      %v1518 = vunpack.c.l.b16 %v1223
      %v1519 = vunpack.c.l.b16 %v1224
      %v1520 = vunpack.c.l.b16 %v1225
      %v1521 = vunpack.c.l.b16 %v1226
      %v1522 = vunpack.c.l.b16 %v1227
      %v1523 = vunpack.c.l.b16 %v1228
      %v1524 = vunpack.c.l.b16 %v1229
      %v1525 = vunpack.c.l.b16 %v1230
      %v1526 = vunpack.c.l.b16 %v1231
      %v1527 = vunpack.c.l.b16 %v1232
      %v1528 = vunpack.c.l.b16 %v1233
      %v1529 = vunpack.c.l.b16 %v1234
      %v1530 = vunpack.c.l.b16 %v1235
      %v1531 = vunpack.c.l.b16 %v1236
      %v1532 = vunpack.c.l.b16 %v1237
      %v1533 = vunpack.c.l.b16 %v1238
      %v1534 = vunpack.c.l.b16 %v1239
      %v1535 = vunpack.c.l.b16 %v1240
      %v1536 = vunpack.c.l.b16 %v1241
      %v1537 = vunpack.c.l.b16 %v1242
      %v1538 = vunpack.c.l.b16 %v1243
      %v1539 = vunpack.c.l.b16 %v1244
      %v1540 = vunpack.c.l.b16 %v1245
      %v1541 = vunpack.c.l.b16 %v1246
      %v1542 = vunpack.c.l.b16 %v1247
      %v1543 = vunpack.c.l.b16 %v1248
      %v1544 = vunpack.c.l.b16 %v1249
      %v1545 = vunpack.c.l.b16 %v1250
      %v1546 = vunpack.c.l.b16 %v1251
      %v1547 = vunpack.c.l.b16 %v1252
      %v1548 = vunpack.c.l.b16 %v1253
      %v1549 = vunpack.c.l.b16 %v1254
      %v1550 = vunpack.c.l.b16 %v1255
      %v1551 = vunpack.c.l.b16 %v1256
      %v1552 = vunpack.c.l.b16 %v1257
      %v1553 = vunpack.c.l.b16 %v1258
      %v1554 = vunpack.c.l.b16 %v1259
      %v1555 = vunpack.c.l.b16 %v1260
      %v1556 = vunpack.c.l.b16 %v1261
      %v1557 = vunpack.c.l.b16 %v1262
      %v1558 = vunpack.c.l.b16 %v1263
      %v1559 = vunpack.c.l.b16 %v1264
      %v1560 = vunpack.c.l.b16 %v1265
      %v1561 = vunpack.c.l.b16 %v1266
      %v1562 = vunpack.c.l.b16 %v1267
      %v1563 = vunpack.c.l.b16 %v1268
      %v1564 = vunpack.c.l.b16 %v1269
      %v1565 = vunpack.c.l.b16 %v1270
      %v1566 = vunpack.c.l.b16 %v1271
      %v1567 = vunpack.c.l.b16 %v1272
      %v1568 = vunpack.c.l.b16 %v1273
      %v1569 = vunpack.c.l.b16 %v1274
      %v1570 = vunpack.c.l.b16 %v1275
      %v1571 = vunpack.c.l.b16 %v1276
      %v1572 = vunpack.c.l.b16 %v1277
      %v1573 = vunpack.c.l.b16 %v1278
      %v1574 = vunpack.c.l.b16 %v1279
      %v1575 = vunpack.c.l.b16 %v1280
      %v1576 = vunpack.c.l.b16 %v1281
      %v1577 = vunpack.c.l.b16 %v1282
      %v1578 = vunpack.c.l.b16 %v1283
      %v1579 = vunpack.c.l.b16 %v1284
      %v1580 = vunpack.c.l.b16 %v1285
      %v1581 = vunpack.c.l.b16 %v1286
      %v1582 = vunpack.c.l.b16 %v1287
      %v1583 = vunpack.c.l.b16 %v1288
      %v1584 = vunpack.c.l.b16 %v1289
      %v1585 = vunpack.c.l.b16 %v1290
      %v1586 = vunpack.c.l.b16 %v1291
      %v1587 = vunpack.c.l.b16 %v1292
      %v1588 = vunpack.c.l.b16 %v1293
      %v1589 = vunpack.c.l.b16 %v1294
      %v1590 = vunpack.c.l.b16 %v1295
      %v1591 = vunpack.c.l.b16 %v1296
      %v1592 = vunpack.c.l.b16 %v1297
      %v1593 = vunpack.c.l.b16 %v1298
      %v1594 = vunpack.c.l.b16 %v1299
      %v1595 = vunpack.c.l.b16 %v1300
      %v1596 = vunpack.c.l.b16 %v1301
      %v1597 = vunpack.c.l.b16 %v1302
      %v1598 = vunpack.c.l.b16 %v1303
      %v1599 = vunpack.c.l.b16 %v1304
      %v1600 = vunpack.c.l.b16 %v1305
      %v1601 = vunpack.c.l.b16 %v1306
      %v1602 = vunpack.c.l.b16 %v1307
      %v1603 = vunpack.c.l.b16 %v1308
      %v1604 = vunpack.c.l.b16 %v1309
      %v1605 = vunpack.c.l.b16 %v1310
      %v1606 = vunpack.c.l.b16 %v1311
      %v1607 = vunpack.c.l.b16 %v1312
      %v1608 = vpack.c.b16 %v1465, %v1464
      %v1609 = vpack.c.b16 %v1467, %v1466
      %v1610 = vpack.c.b16 %v1469, %v1468
      %v1611 = vpack.c.b16 %v1471, %v1470
      %v1612 = vpack.c.b16 %v1473, %v1472
      %v1613 = vpack.c.b16 %v1475, %v1474
      %v1614 = vpack.c.b16 %v1477, %v1476
      %v1615 = vpack.c.b16 %v1479, %v1478
      %v1616 = vpack.c.b16 %v1481, %v1480
      %v1617 = vpack.c.b16 %v1483, %v1482
      %v1618 = vpack.c.b16 %v1485, %v1484
      %v1619 = vpack.c.b16 %v1487, %v1486
      %v1620 = vpack.c.b16 %v1489, %v1488
      %v1621 = vpack.c.b16 %v1491, %v1490
      %v1622 = vpack.c.b16 %v1493, %v1492
      %v1623 = vpack.c.b16 %v1495, %v1494
      %v1624 = vpack.c.b16 %v1497, %v1496
      %v1625 = vpack.c.b16 %v1499, %v1498
      %v1626 = vpack.c.b16 %v1501, %v1500
      %v1627 = vpack.c.b16 %v1503, %v1502
      %v1628 = vpack.c.b16 %v1505, %v1504
      %v1629 = vpack.c.b16 %v1507, %v1506
      %v1630 = vpack.c.b16 %v1509, %v1508
      %v1631 = vpack.c.b16 %v1511, %v1510
      %v1632 = vpack.c.b16 %v1513, %v1512
      %v1633 = vpack.c.b16 %v1515, %v1514
      %v1634 = vpack.c.b16 %v1517, %v1516
      %v1635 = vpack.c.b16 %v1519, %v1518
      %v1636 = vpack.c.b16 %v1521, %v1520
      %v1637 = vpack.c.b16 %v1523, %v1522
      %v1638 = vpack.c.b16 %v1525, %v1524
      %v1639 = vpack.c.b16 %v1527, %v1526
      %v1640 = vpack.c.b16 %v1529, %v1528
      %v1641 = vpack.c.b16 %v1531, %v1530
      %v1642 = vpack.c.b16 %v1533, %v1532
      %v1643 = vpack.c.b16 %v1535, %v1534
      %v1644 = vpack.c.b16 %v1537, %v1536
      %v1645 = vpack.c.b16 %v1539, %v1538
      %v1646 = vpack.c.b16 %v1541, %v1540
      %v1647 = vpack.c.b16 %v1543, %v1542
      %v1648 = vpack.c.b16 %v1545, %v1544
      %v1649 = vpack.c.b16 %v1547, %v1546
      %v1650 = vpack.c.b16 %v1549, %v1548
      %v1651 = vpack.c.b16 %v1551, %v1550
      %v1652 = vpack.c.b16 %v1553, %v1552
      %v1653 = vpack.c.b16 %v1555, %v1554
      %v1654 = vpack.c.b16 %v1557, %v1556
      %v1655 = vpack.c.b16 %v1559, %v1558
      %v1656 = vpack.c.b16 %v1561, %v1560
      %v1657 = vpack.c.b16 %v1563, %v1562
      %v1658 = vpack.c.b16 %v1565, %v1564
      %v1659 = vpack.c.b16 %v1567, %v1566
      %v1660 = vpack.c.b16 %v1569, %v1568
      %v1661 = vpack.c.b16 %v1571, %v1570
      %v1662 = vpack.c.b16 %v1573, %v1572
      %v1663 = vpack.c.b16 %v1575, %v1574
      %v1664 = vpack.c.b16 %v1577, %v1576
      %v1665 = vpack.c.b16 %v1579, %v1578
      %v1666 = vpack.c.b16 %v1581, %v1580
      %v1667 = vpack.c.b16 %v1583, %v1582
      %v1668 = vpack.c.b16 %v1585, %v1584
      %v1669 = vpack.c.b16 %v1587, %v1586
      %v1670 = vpack.c.b16 %v1589, %v1588
      %v1671 = vpack.c.b16 %v1591, %v1590
      %v1672 = vpack.c.b16 %v1593, %v1592
      %v1673 = vpack.c.b16 %v1595, %v1594
      %v1674 = vpack.c.b16 %v1597, %v1596
      %v1675 = vpack.c.b16 %v1599, %v1598
      %v1676 = vpack.c.b16 %v1601, %v1600
      %v1677 = vpack.c.b16 %v1603, %v1602
      %v1678 = vpack.c.b16 %v1605, %v1604
      %v1679 = vpack.c.b16 %v1607, %v1606
      %1752 = vmatprep.subr.bf16.mxu0 0
      %1753 = vmatpush1.bf16.msra.mxu0 %v1608
      %1754 = vmatprep.subr.bf16.mxu0 0
      %1755 = vmatpush1.bf16.msra.mxu0 %v1609
      %1756 = vmatprep.subr.bf16.mxu0 0
      %1757 = vmatpush1.bf16.msra.mxu0 %v1610
      %1758 = vmatprep.subr.bf16.mxu0 0
      %1759 = vmatpush1.bf16.msra.mxu0 %v1611
      %1760 = vmatprep.subr.bf16.mxu0 0
      %1761 = vmatpush1.bf16.msra.mxu0 %v1612
      %1762 = vmatprep.subr.bf16.mxu0 0
      %1763 = vmatpush1.bf16.msra.mxu0 %v1613
      %1764 = vmatprep.subr.bf16.mxu0 0
      %1765 = vmatpush1.bf16.msra.mxu0 %v1614
      %1766 = vmatprep.subr.bf16.mxu0 0
      %1767 = vmatpush1.bf16.msra.mxu0 %v1615
      %1768 = vmatprep.subr.bf16.mxu0 0
      %1769 = vmatpush1.bf16.msra.mxu0 %v1616
      %1770 = vmatprep.subr.bf16.mxu0 0
      %1771 = vmatpush1.bf16.msra.mxu0 %v1617
      %1772 = vmatprep.subr.bf16.mxu0 0
      %1773 = vmatpush1.bf16.msra.mxu0 %v1618
      %1774 = vmatprep.subr.bf16.mxu0 0
      %1775 = vmatpush1.bf16.msra.mxu0 %v1619
      %1776 = vmatprep.subr.bf16.mxu0 0
      %1777 = vmatpush1.bf16.msra.mxu0 %v1620
      %1778 = vmatprep.subr.bf16.mxu0 0
      %1779 = vmatpush1.bf16.msra.mxu0 %v1621
      %1780 = vmatprep.subr.bf16.mxu0 0
      %1781 = vmatpush1.bf16.msra.mxu0 %v1622
      %1782 = vmatprep.subr.bf16.mxu0 0
      %1783 = vmatpush1.bf16.msra.mxu0 %v1623
      %1784 = vmatprep.mubr.bf16.mxu0 %v486
      %1785 = vmatmul.mubr.bf16.gmra.mrb[0].mxu0 %v441
      %v1786 = vpop.f32.mrb[0].mxu0
      %v1787 = vadd.f32 %v1318, %v1786
      %v1788 = vpop.f32.mrb[0].mxu0
      %v1789 = vpop.f32.mrb[0].mxu0
      %v1790 = vadd.f32 %v1318, %v1789
      %v1791 = vpop.f32.mrb[0].mxu0
      %1792 = vmatprep.mubr.bf16.mxu0 %v494
      %1793 = vmatmul.mubr.bf16.gmra.mrb[0].mxu0 %v442
      %v1794 = vpop.f32.mrb[0].mxu0
      %v1795 = vadd.f32 %v1318, %v1794
      %v1796 = vpop.f32.mrb[0].mxu0
      %v1797 = vpop.f32.mrb[0].mxu0
      %v1798 = vadd.f32 %v1318, %v1797
      %v1799 = vpop.f32.mrb[0].mxu0
      %1800 = vmatprep.mubr.bf16.mxu0 %v502
      %1801 = vmatmul.mubr.bf16.gmra.mrb[0].mxu0 %v443
      %v1802 = vpop.f32.mrb[0].mxu0
      %v1803 = vadd.f32 %v1318, %v1802
      %v1804 = vpop.f32.mrb[0].mxu0
      %v1805 = vpop.f32.mrb[0].mxu0
      %v1806 = vadd.f32 %v1318, %v1805
      %v1807 = vpop.f32.mrb[0].mxu0
      %1808 = vmatprep.mubr.bf16.mxu0 %v510
      %1809 = vmatmul.mubr.bf16.gmra.mrb[0].mxu0 %v444
      %v1810 = vpop.f32.mrb[0].mxu0
      %v1811 = vadd.f32 %v1318, %v1810
      %v1812 = vpop.f32.mrb[0].mxu0
      %v1813 = vpop.f32.mrb[0].mxu0
      %v1814 = vadd.f32 %v1318, %v1813
      %v1815 = vpop.f32.mrb[0].mxu0
      %1816 = vmatprep.mubr.bf16.mxu0 %v518
      %1817 = vmatmul.mubr.bf16.gmra.mrb[0].mxu0 %v445
      %v1818 = vpop.f32.mrb[0].mxu0
      %v1819 = vadd.f32 %v1318, %v1818
      %v1820 = vpop.f32.mrb[0].mxu0
      %v1821 = vpop.f32.mrb[0].mxu0
      %v1822 = vadd.f32 %v1318, %v1821
      %v1823 = vpop.f32.mrb[0].mxu0
      %1824 = vmatprep.mubr.bf16.mxu0 %v526
      %1825 = vmatmul.mubr.bf16.gmra.mrb[0].mxu0 %v446
      %v1826 = vpop.f32.mrb[0].mxu0
      %v1827 = vadd.f32 %v1318, %v1826
      %v1828 = vpop.f32.mrb[0].mxu0
      %v1829 = vpop.f32.mrb[0].mxu0
      %v1830 = vadd.f32 %v1318, %v1829
      %v1831 = vpop.f32.mrb[0].mxu0
      %1832 = vmatprep.mubr.bf16.mxu0 %v534
      %1833 = vmatmul.mubr.bf16.gmra.mrb[0].mxu0 %v447
      %v1834 = vpop.f32.mrb[0].mxu0
      %v1835 = vadd.f32 %v1318, %v1834
      %v1836 = vpop.f32.mrb[0].mxu0
      %v1837 = vpop.f32.mrb[0].mxu0
      %v1838 = vadd.f32 %v1318, %v1837
      %v1839 = vpop.f32.mrb[0].mxu0
      %1840 = vmatprep.mubr.bf16.mxu0 %v542
      %1841 = vmatmul.mubr.bf16.gmra.mrb[0].mxu0 %v448
      %v1842 = vpop.f32.mrb[0].mxu0
      %v1843 = vadd.f32 %v1318, %v1842
      %v1844 = vpop.f32.mrb[0].mxu0
      %v1845 = vpop.f32.mrb[0].mxu0
      %v1846 = vadd.f32 %v1318, %v1845
      %v1847 = vpop.f32.mrb[0].mxu0
      %1848 = vmatprep.mubr.bf16.mxu0 %v550
      %1849 = vmatmul.mubr.bf16.gmra.mrb[0].mxu0 %v449
      %v1850 = vpop.f32.mrb[0].mxu0
      %v1851 = vadd.f32 %v1318, %v1850
      %v1852 = vpop.f32.mrb[0].mxu0
      %v1853 = vpop.f32.mrb[0].mxu0
      %v1854 = vadd.f32 %v1318, %v1853
      %v1855 = vpop.f32.mrb[0].mxu0
      %1856 = vmatprep.mubr.bf16.mxu0 %v558
      %1857 = vmatmul.mubr.bf16.gmra.mrb[0].mxu0 %v450
      %v1858 = vpop.f32.mrb[0].mxu0
      %v1859 = vadd.f32 %v1318, %v1858
      %v1860 = vpop.f32.mrb[0].mxu0
      %v1861 = vpop.f32.mrb[0].mxu0
      %v1862 = vadd.f32 %v1318, %v1861
      %v1863 = vpop.f32.mrb[0].mxu0
      %1864 = vmatprep.mubr.bf16.mxu0 %v566
      %1865 = vmatmul.mubr.bf16.gmra.mrb[0].mxu0 %v451
      %v1866 = vpop.f32.mrb[0].mxu0
      %v1867 = vadd.f32 %v1318, %v1866
      %v1868 = vpop.f32.mrb[0].mxu0
      %v1869 = vpop.f32.mrb[0].mxu0
      %v1870 = vadd.f32 %v1318, %v1869
      %v1871 = vpop.f32.mrb[0].mxu0
      %1872 = vmatprep.mubr.bf16.mxu0 %v574
      %1873 = vmatmul.mubr.bf16.gmra.mrb[0].mxu0 %v452
      %v1874 = vpop.f32.mrb[0].mxu0
      %v1875 = vadd.f32 %v1318, %v1874
      %v1876 = vpop.f32.mrb[0].mxu0
      %v1877 = vpop.f32.mrb[0].mxu0
      %v1878 = vadd.f32 %v1318, %v1877
      %v1879 = vpop.f32.mrb[0].mxu0
      %1880 = vmatprep.mubr.bf16.mxu0 %v582
      %1881 = vmatmul.mubr.bf16.gmra.mrb[0].mxu0 %v453
      %v1882 = vpop.f32.mrb[0].mxu0
      %v1883 = vadd.f32 %v1318, %v1882
      %v1884 = vpop.f32.mrb[0].mxu0
      %v1885 = vpop.f32.mrb[0].mxu0
      %v1886 = vadd.f32 %v1318, %v1885
      %v1887 = vpop.f32.mrb[0].mxu0
      %1888 = vmatprep.mubr.bf16.mxu0 %v590
      %1889 = vmatmul.mubr.bf16.gmra.mrb[0].mxu0 %v454
      %v1890 = vpop.f32.mrb[0].mxu0
      %v1891 = vadd.f32 %v1318, %v1890
      %v1892 = vpop.f32.mrb[0].mxu0
      %v1893 = vpop.f32.mrb[0].mxu0
      %v1894 = vadd.f32 %v1318, %v1893
      %v1895 = vpop.f32.mrb[0].mxu0
      %1896 = vmatprep.mubr.bf16.mxu0 %v598
      %1897 = vmatmul.mubr.bf16.gmra.mrb[0].mxu0 %v455
      %v1898 = vpop.f32.mrb[0].mxu0
      %v1899 = vadd.f32 %v1318, %v1898
      %v1900 = vpop.f32.mrb[0].mxu0
      %v1901 = vpop.f32.mrb[0].mxu0
      %v1902 = vadd.f32 %v1318, %v1901
      %v1903 = vpop.f32.mrb[0].mxu0
      %1904 = vdwg.mxu0
      %1905 = vmatprep.subr.bf16.mxu0 0
      %1906 = vmatpush1.bf16.msra.mxu0 %v1624
      %1907 = vmatprep.subr.bf16.mxu0 0
      %1908 = vmatpush1.bf16.msra.mxu0 %v1625
      %1909 = vmatprep.subr.bf16.mxu0 0
      %1910 = vmatpush1.bf16.msra.mxu0 %v1626
      %1911 = vmatprep.subr.bf16.mxu0 0
      %1912 = vmatpush1.bf16.msra.mxu0 %v1627
      %1913 = vmatprep.subr.bf16.mxu0 0
      %1914 = vmatpush1.bf16.msra.mxu0 %v1628
      %1915 = vmatprep.subr.bf16.mxu0 0
      %1916 = vmatpush1.bf16.msra.mxu0 %v1629
      %1917 = vmatprep.subr.bf16.mxu0 0
      %1918 = vmatpush1.bf16.msra.mxu0 %v1630
      %1919 = vmatprep.subr.bf16.mxu0 0
      %1920 = vmatpush1.bf16.msra.mxu0 %v1631
      %1921 = vmatprep.subr.bf16.mxu0 0
      %1922 = vmatpush1.bf16.msra.mxu0 %v1632
      %1923 = vmatprep.subr.bf16.mxu0 0
      %1924 = vmatpush1.bf16.msra.mxu0 %v1633
      %1925 = vmatprep.subr.bf16.mxu0 0
      %1926 = vmatpush1.bf16.msra.mxu0 %v1634
      %1927 = vmatprep.subr.bf16.mxu0 0
      %1928 = vmatpush1.bf16.msra.mxu0 %v1635
      %1929 = vmatprep.subr.bf16.mxu0 0
      %1930 = vmatpush1.bf16.msra.mxu0 %v1636
      %1931 = vmatprep.subr.bf16.mxu0 0
      %1932 = vmatpush1.bf16.msra.mxu0 %v1637
      %1933 = vmatprep.subr.bf16.mxu0 0
      %1934 = vmatpush1.bf16.msra.mxu0 %v1638
      %1935 = vmatprep.subr.bf16.mxu0 0
      %1936 = vmatpush1.bf16.msra.mxu0 %v1639
      %1937 = vmatprep.mubr.bf16.mxu0 %v670
      %1938 = vmatmul.mubr.bf16.gmra.mrb[0].mxu0 %v620
      %v1939 = vpop.f32.mrb[0].mxu0
      %v1940 = vadd.f32 %v1787, %v1939
      %v1941 = vpop.f32.mrb[0].mxu0
      %v1942 = vpop.f32.mrb[0].mxu0
      %v1943 = vadd.f32 %v1790, %v1942
      %v1944 = vpop.f32.mrb[0].mxu0
      %1945 = vmatprep.mubr.bf16.mxu0 %v671
      %1946 = vmatmul.mubr.bf16.gmra.mrb[0].mxu0 %v622
      %v1947 = vpop.f32.mrb[0].mxu0
      %v1948 = vadd.f32 %v1795, %v1947
      %v1949 = vpop.f32.mrb[0].mxu0
      %v1950 = vpop.f32.mrb[0].mxu0
      %v1951 = vadd.f32 %v1798, %v1950
      %v1952 = vpop.f32.mrb[0].mxu0
      %1953 = vmatprep.mubr.bf16.mxu0 %v672
      %1954 = vmatmul.mubr.bf16.gmra.mrb[0].mxu0 %v624
      %v1955 = vpop.f32.mrb[0].mxu0
      %v1956 = vadd.f32 %v1803, %v1955
      %v1957 = vpop.f32.mrb[0].mxu0
      %v1958 = vpop.f32.mrb[0].mxu0
      %v1959 = vadd.f32 %v1806, %v1958
      %v1960 = vpop.f32.mrb[0].mxu0
      %1961 = vmatprep.mubr.bf16.mxu0 %v673
      %1962 = vmatmul.mubr.bf16.gmra.mrb[0].mxu0 %v626
      %v1963 = vpop.f32.mrb[0].mxu0
      %v1964 = vadd.f32 %v1811, %v1963
      %v1965 = vpop.f32.mrb[0].mxu0
      %v1966 = vpop.f32.mrb[0].mxu0
      %v1967 = vadd.f32 %v1814, %v1966
      %v1968 = vpop.f32.mrb[0].mxu0
      %1969 = vmatprep.mubr.bf16.mxu0 %v674
      %1970 = vmatmul.mubr.bf16.gmra.mrb[0].mxu0 %v628
      %v1971 = vpop.f32.mrb[0].mxu0
      %v1972 = vadd.f32 %v1819, %v1971
      %v1973 = vpop.f32.mrb[0].mxu0
      %v1974 = vpop.f32.mrb[0].mxu0
      %v1975 = vadd.f32 %v1822, %v1974
      %v1976 = vpop.f32.mrb[0].mxu0
      %1977 = vmatprep.mubr.bf16.mxu0 %v675
      %1978 = vmatmul.mubr.bf16.gmra.mrb[0].mxu0 %v630
      %v1979 = vpop.f32.mrb[0].mxu0
      %v1980 = vadd.f32 %v1827, %v1979
      %v1981 = vpop.f32.mrb[0].mxu0
      %v1982 = vpop.f32.mrb[0].mxu0
      %v1983 = vadd.f32 %v1830, %v1982
      %v1984 = vpop.f32.mrb[0].mxu0
      %1985 = vmatprep.mubr.bf16.mxu0 %v676
      %1986 = vmatmul.mubr.bf16.gmra.mrb[0].mxu0 %v632
      %v1987 = vpop.f32.mrb[0].mxu0
      %v1988 = vadd.f32 %v1835, %v1987
      %v1989 = vpop.f32.mrb[0].mxu0
      %v1990 = vpop.f32.mrb[0].mxu0
      %v1991 = vadd.f32 %v1838, %v1990
      %v1992 = vpop.f32.mrb[0].mxu0
      %1993 = vmatprep.mubr.bf16.mxu0 %v677
      %1994 = vmatmul.mubr.bf16.gmra.mrb[0].mxu0 %v634
      %v1995 = vpop.f32.mrb[0].mxu0
      %v1996 = vadd.f32 %v1843, %v1995
      %v1997 = vpop.f32.mrb[0].mxu0
      %v1998 = vpop.f32.mrb[0].mxu0
      %v1999 = vadd.f32 %v1846, %v1998
      %v2000 = vpop.f32.mrb[0].mxu0
      %2001 = vmatprep.mubr.bf16.mxu0 %v678
      %2002 = vmatmul.mubr.bf16.gmra.mrb[0].mxu0 %v636
      %v2003 = vpop.f32.mrb[0].mxu0
      %v2004 = vadd.f32 %v1851, %v2003
      %v2005 = vpop.f32.mrb[0].mxu0
      %v2006 = vpop.f32.mrb[0].mxu0
      %v2007 = vadd.f32 %v1854, %v2006
      %v2008 = vpop.f32.mrb[0].mxu0
      %2009 = vmatprep.mubr.bf16.mxu0 %v679
      %2010 = vmatmul.mubr.bf16.gmra.mrb[0].mxu0 %v638
      %v2011 = vpop.f32.mrb[0].mxu0
      %v2012 = vadd.f32 %v1859, %v2011
      %v2013 = vpop.f32.mrb[0].mxu0
      %v2014 = vpop.f32.mrb[0].mxu0
      %v2015 = vadd.f32 %v1862, %v2014
      %v2016 = vpop.f32.mrb[0].mxu0
      %2017 = vmatprep.mubr.bf16.mxu0 %v680
      %2018 = vmatmul.mubr.bf16.gmra.mrb[0].mxu0 %v640
      %v2019 = vpop.f32.mrb[0].mxu0
      %v2020 = vadd.f32 %v1867, %v2019
      %v2021 = vpop.f32.mrb[0].mxu0
      %v2022 = vpop.f32.mrb[0].mxu0
      %v2023 = vadd.f32 %v1870, %v2022
      %v2024 = vpop.f32.mrb[0].mxu0
      %2025 = vmatprep.mubr.bf16.mxu0 %v681
      %2026 = vmatmul.mubr.bf16.gmra.mrb[0].mxu0 %v642
      %v2027 = vpop.f32.mrb[0].mxu0
      %v2028 = vadd.f32 %v1875, %v2027
      %v2029 = vpop.f32.mrb[0].mxu0
      %v2030 = vpop.f32.mrb[0].mxu0
      %v2031 = vadd.f32 %v1878, %v2030
      %v2032 = vpop.f32.mrb[0].mxu0
      %2033 = vmatprep.mubr.bf16.mxu0 %v682
      %2034 = vmatmul.mubr.bf16.gmra.mrb[0].mxu0 %v644
      %v2035 = vpop.f32.mrb[0].mxu0
      %v2036 = vadd.f32 %v1883, %v2035
      %v2037 = vpop.f32.mrb[0].mxu0
      %v2038 = vpop.f32.mrb[0].mxu0
      %v2039 = vadd.f32 %v1886, %v2038
      %v2040 = vpop.f32.mrb[0].mxu0
      %2041 = vmatprep.mubr.bf16.mxu0 %v683
      %2042 = vmatmul.mubr.bf16.gmra.mrb[0].mxu0 %v646
      %v2043 = vpop.f32.mrb[0].mxu0
      %v2044 = vadd.f32 %v1891, %v2043
      %v2045 = vpop.f32.mrb[0].mxu0
      %v2046 = vpop.f32.mrb[0].mxu0
      %v2047 = vadd.f32 %v1894, %v2046
      %v2048 = vpop.f32.mrb[0].mxu0
      %2049 = vmatprep.mubr.bf16.mxu0 %v684
      %2050 = vmatmul.mubr.bf16.gmra.mrb[0].mxu0 %v648
      %v2051 = vpop.f32.mrb[0].mxu0
      %v2052 = vadd.f32 %v1899, %v2051
      %v2053 = vpop.f32.mrb[0].mxu0
      %v2054 = vpop.f32.mrb[0].mxu0
      %v2055 = vadd.f32 %v1902, %v2054
      %v2056 = vpop.f32.mrb[0].mxu0
      %2057 = vdwg.mxu0
      %2058 = vmatprep.subr.bf16.mxu0 0
      %2059 = vmatpush1.bf16.msra.mxu0 %v1640
      %2060 = vmatprep.subr.bf16.mxu0 0
      %2061 = vmatpush1.bf16.msra.mxu0 %v1641
      %2062 = vmatprep.subr.bf16.mxu0 0
      %2063 = vmatpush1.bf16.msra.mxu0 %v1642
      %2064 = vmatprep.subr.bf16.mxu0 0
      %2065 = vmatpush1.bf16.msra.mxu0 %v1643
      %2066 = vmatprep.subr.bf16.mxu0 0
      %2067 = vmatpush1.bf16.msra.mxu0 %v1644
      %2068 = vmatprep.subr.bf16.mxu0 0
      %2069 = vmatpush1.bf16.msra.mxu0 %v1645
      %2070 = vmatprep.subr.bf16.mxu0 0
      %2071 = vmatpush1.bf16.msra.mxu0 %v1646
      %2072 = vmatprep.subr.bf16.mxu0 0
      %2073 = vmatpush1.bf16.msra.mxu0 %v1647
      %2074 = vmatprep.subr.bf16.mxu0 0
      %2075 = vmatpush1.bf16.msra.mxu0 %v1648
      %2076 = vmatprep.subr.bf16.mxu0 0
      %2077 = vmatpush1.bf16.msra.mxu0 %v1649
      %2078 = vmatprep.subr.bf16.mxu0 0
      %2079 = vmatpush1.bf16.msra.mxu0 %v1650
      %2080 = vmatprep.subr.bf16.mxu0 0
      %2081 = vmatpush1.bf16.msra.mxu0 %v1651
      %2082 = vmatprep.subr.bf16.mxu0 0
      %2083 = vmatpush1.bf16.msra.mxu0 %v1652
      %2084 = vmatprep.subr.bf16.mxu0 0
      %2085 = vmatpush1.bf16.msra.mxu0 %v1653
      %2086 = vmatprep.subr.bf16.mxu0 0
      %2087 = vmatpush1.bf16.msra.mxu0 %v1654
      %2088 = vmatprep.subr.bf16.mxu0 0
      %2089 = vmatpush1.bf16.msra.mxu0 %v1655
      %2090 = vmatprep.mubr.bf16.mxu0 %v847
      %2091 = vmatmul.mubr.bf16.gmra.mrb[0].mxu0 %v714
      %v2092 = vpop.f32.mrb[0].mxu0
      %v2093 = vadd.f32 %v1940, %v2092
      %v2094 = vpop.f32.mrb[0].mxu0
      %v2095 = vpop.f32.mrb[0].mxu0
      %v2096 = vadd.f32 %v1943, %v2095
      %v2097 = vpop.f32.mrb[0].mxu0
      %2098 = vmatprep.mubr.bf16.mxu0 %v849
      %2099 = vmatmul.mubr.bf16.gmra.mrb[0].mxu0 %v722
      %v2100 = vpop.f32.mrb[0].mxu0
      %v2101 = vadd.f32 %v1948, %v2100
      %v2102 = vpop.f32.mrb[0].mxu0
      %v2103 = vpop.f32.mrb[0].mxu0
      %v2104 = vadd.f32 %v1951, %v2103
      %v2105 = vpop.f32.mrb[0].mxu0
      %2106 = vmatprep.mubr.bf16.mxu0 %v851
      %2107 = vmatmul.mubr.bf16.gmra.mrb[0].mxu0 %v730
      %v2108 = vpop.f32.mrb[0].mxu0
      %v2109 = vadd.f32 %v1956, %v2108
      %v2110 = vpop.f32.mrb[0].mxu0
      %v2111 = vpop.f32.mrb[0].mxu0
      %v2112 = vadd.f32 %v1959, %v2111
      %v2113 = vpop.f32.mrb[0].mxu0
      %2114 = vmatprep.mubr.bf16.mxu0 %v853
      %2115 = vmatmul.mubr.bf16.gmra.mrb[0].mxu0 %v738
      %v2116 = vpop.f32.mrb[0].mxu0
      %v2117 = vadd.f32 %v1964, %v2116
      %v2118 = vpop.f32.mrb[0].mxu0
      %v2119 = vpop.f32.mrb[0].mxu0
      %v2120 = vadd.f32 %v1967, %v2119
      %v2121 = vpop.f32.mrb[0].mxu0
      %2122 = vmatprep.mubr.bf16.mxu0 %v855
      %2123 = vmatmul.mubr.bf16.gmra.mrb[0].mxu0 %v746
      %v2124 = vpop.f32.mrb[0].mxu0
      %v2125 = vadd.f32 %v1972, %v2124
      %v2126 = vpop.f32.mrb[0].mxu0
      %v2127 = vpop.f32.mrb[0].mxu0
      %v2128 = vadd.f32 %v1975, %v2127
      %v2129 = vpop.f32.mrb[0].mxu0
      %2130 = vmatprep.mubr.bf16.mxu0 %v857
      %2131 = vmatmul.mubr.bf16.gmra.mrb[0].mxu0 %v754
      %v2132 = vpop.f32.mrb[0].mxu0
      %v2133 = vadd.f32 %v1980, %v2132
      %v2134 = vpop.f32.mrb[0].mxu0
      %v2135 = vpop.f32.mrb[0].mxu0
      %v2136 = vadd.f32 %v1983, %v2135
      %v2137 = vpop.f32.mrb[0].mxu0
      %2138 = vmatprep.mubr.bf16.mxu0 %v859
      %2139 = vmatmul.mubr.bf16.gmra.mrb[0].mxu0 %v762
      %v2140 = vpop.f32.mrb[0].mxu0
      %v2141 = vadd.f32 %v1988, %v2140
      %v2142 = vpop.f32.mrb[0].mxu0
      %v2143 = vpop.f32.mrb[0].mxu0
      %v2144 = vadd.f32 %v1991, %v2143
      %v2145 = vpop.f32.mrb[0].mxu0
      %2146 = vmatprep.mubr.bf16.mxu0 %v861
      %2147 = vmatmul.mubr.bf16.gmra.mrb[0].mxu0 %v770
      %v2148 = vpop.f32.mrb[0].mxu0
      %v2149 = vadd.f32 %v1996, %v2148
      %v2150 = vpop.f32.mrb[0].mxu0
      %v2151 = vpop.f32.mrb[0].mxu0
      %v2152 = vadd.f32 %v1999, %v2151
      %v2153 = vpop.f32.mrb[0].mxu0
      %2154 = vmatprep.mubr.bf16.mxu0 %v863
      %2155 = vmatmul.mubr.bf16.gmra.mrb[0].mxu0 %v778
      %v2156 = vpop.f32.mrb[0].mxu0
      %v2157 = vadd.f32 %v2004, %v2156
      %v2158 = vpop.f32.mrb[0].mxu0
      %v2159 = vpop.f32.mrb[0].mxu0
      %v2160 = vadd.f32 %v2007, %v2159
      %v2161 = vpop.f32.mrb[0].mxu0
      %2162 = vmatprep.mubr.bf16.mxu0 %v865
      %2163 = vmatmul.mubr.bf16.gmra.mrb[0].mxu0 %v786
      %v2164 = vpop.f32.mrb[0].mxu0
      %v2165 = vadd.f32 %v2012, %v2164
      %v2166 = vpop.f32.mrb[0].mxu0
      %v2167 = vpop.f32.mrb[0].mxu0
      %v2168 = vadd.f32 %v2015, %v2167
      %v2169 = vpop.f32.mrb[0].mxu0
      %2170 = vmatprep.mubr.bf16.mxu0 %v867
      %2171 = vmatmul.mubr.bf16.gmra.mrb[0].mxu0 %v794
      %v2172 = vpop.f32.mrb[0].mxu0
      %v2173 = vadd.f32 %v2020, %v2172
      %v2174 = vpop.f32.mrb[0].mxu0
      %v2175 = vpop.f32.mrb[0].mxu0
      %v2176 = vadd.f32 %v2023, %v2175
      %v2177 = vpop.f32.mrb[0].mxu0
      %2178 = vmatprep.mubr.bf16.mxu0 %v869
      %2179 = vmatmul.mubr.bf16.gmra.mrb[0].mxu0 %v802
      %v2180 = vpop.f32.mrb[0].mxu0
      %v2181 = vadd.f32 %v2028, %v2180
      %v2182 = vpop.f32.mrb[0].mxu0
      %v2183 = vpop.f32.mrb[0].mxu0
      %v2184 = vadd.f32 %v2031, %v2183
      %v2185 = vpop.f32.mrb[0].mxu0
      %2186 = vmatprep.mubr.bf16.mxu0 %v871
      %2187 = vmatmul.mubr.bf16.gmra.mrb[0].mxu0 %v810
      %v2188 = vpop.f32.mrb[0].mxu0
      %v2189 = vadd.f32 %v2036, %v2188
      %v2190 = vpop.f32.mrb[0].mxu0
      %v2191 = vpop.f32.mrb[0].mxu0
      %v2192 = vadd.f32 %v2039, %v2191
      %v2193 = vpop.f32.mrb[0].mxu0
      %2194 = vmatprep.mubr.bf16.mxu0 %v873
      %2195 = vmatmul.mubr.bf16.gmra.mrb[0].mxu0 %v818
      %v2196 = vpop.f32.mrb[0].mxu0
      %v2197 = vadd.f32 %v2044, %v2196
      %v2198 = vpop.f32.mrb[0].mxu0
      %v2199 = vpop.f32.mrb[0].mxu0
      %v2200 = vadd.f32 %v2047, %v2199
      %v2201 = vpop.f32.mrb[0].mxu0
      %2202 = vmatprep.mubr.bf16.mxu0 %v875
      %2203 = vmatmul.mubr.bf16.gmra.mrb[0].mxu0 %v826
      %v2204 = vpop.f32.mrb[0].mxu0
      %v2205 = vadd.f32 %v2052, %v2204
      %v2206 = vpop.f32.mrb[0].mxu0
      %v2207 = vpop.f32.mrb[0].mxu0
      %v2208 = vadd.f32 %v2055, %v2207
      %v2209 = vpop.f32.mrb[0].mxu0
      %2210 = vdwg.mxu0
      %2211 = vmatprep.subr.bf16.mxu0 0
      %2212 = vmatpush1.bf16.msra.mxu0 %v1656
      %2213 = vmatprep.subr.bf16.mxu0 0
      %2214 = vmatpush1.bf16.msra.mxu0 %v1657
      %2215 = vmatprep.subr.bf16.mxu0 0
      %2216 = vmatpush1.bf16.msra.mxu0 %v1658
      %2217 = vmatprep.subr.bf16.mxu0 0
      %2218 = vmatpush1.bf16.msra.mxu0 %v1659
      %2219 = vmatprep.subr.bf16.mxu0 0
      %2220 = vmatpush1.bf16.msra.mxu0 %v1660
      %2221 = vmatprep.subr.bf16.mxu0 0
      %2222 = vmatpush1.bf16.msra.mxu0 %v1661
      %2223 = vmatprep.subr.bf16.mxu0 0
      %2224 = vmatpush1.bf16.msra.mxu0 %v1662
      %2225 = vmatprep.subr.bf16.mxu0 0
      %2226 = vmatpush1.bf16.msra.mxu0 %v1663
      %2227 = vmatprep.subr.bf16.mxu0 0
      %2228 = vmatpush1.bf16.msra.mxu0 %v1664
      %2229 = vmatprep.subr.bf16.mxu0 0
      %2230 = vmatpush1.bf16.msra.mxu0 %v1665
      %2231 = vmatprep.subr.bf16.mxu0 0
      %2232 = vmatpush1.bf16.msra.mxu0 %v1666
      %2233 = vmatprep.subr.bf16.mxu0 0
      %2234 = vmatpush1.bf16.msra.mxu0 %v1667
      %2235 = vmatprep.subr.bf16.mxu0 0
      %2236 = vmatpush1.bf16.msra.mxu0 %v1668
      %2237 = vmatprep.subr.bf16.mxu0 0
      %2238 = vmatpush1.bf16.msra.mxu0 %v1669
      %2239 = vmatprep.subr.bf16.mxu0 0
      %2240 = vmatpush1.bf16.msra.mxu0 %v1670
      %2241 = vmatprep.subr.bf16.mxu0 0
      %2242 = vmatpush1.bf16.msra.mxu0 %v1671
      %2243 = vmatprep.mubr.bf16.mxu0 %v992
      %2244 = vmatmul.mubr.bf16.gmra.mrb[0].mxu0 %v444
      %v2245 = vpop.f32.mrb[0].mxu0
      %v2246 = vadd.f32 %v2093, %v2245
      %v2247 = vpop.f32.mrb[0].mxu0
      %v2248 = vpop.f32.mrb[0].mxu0
      %v2249 = vadd.f32 %v2096, %v2248
      %v2250 = vpop.f32.mrb[0].mxu0
      %2251 = vmatprep.mubr.bf16.mxu0 %v1000
      %2252 = vmatmul.mubr.bf16.gmra.mrb[0].mxu0 %v445
      %v2253 = vpop.f32.mrb[0].mxu0
      %v2254 = vadd.f32 %v2101, %v2253
      %v2255 = vpop.f32.mrb[0].mxu0
      %v2256 = vpop.f32.mrb[0].mxu0
      %v2257 = vadd.f32 %v2104, %v2256
      %v2258 = vpop.f32.mrb[0].mxu0
      %2259 = vmatprep.mubr.bf16.mxu0 %v1008
      %2260 = vmatmul.mubr.bf16.gmra.mrb[0].mxu0 %v446
      %v2261 = vpop.f32.mrb[0].mxu0
      %v2262 = vadd.f32 %v2109, %v2261
      %v2263 = vpop.f32.mrb[0].mxu0
      %v2264 = vpop.f32.mrb[0].mxu0
      %v2265 = vadd.f32 %v2112, %v2264
      %v2266 = vpop.f32.mrb[0].mxu0
      %2267 = vmatprep.mubr.bf16.mxu0 %v1016
      %2268 = vmatmul.mubr.bf16.gmra.mrb[0].mxu0 %v447
      %v2269 = vpop.f32.mrb[0].mxu0
      %v2270 = vadd.f32 %v2117, %v2269
      %v2271 = vpop.f32.mrb[0].mxu0
      %v2272 = vpop.f32.mrb[0].mxu0
      %v2273 = vadd.f32 %v2120, %v2272
      %v2274 = vpop.f32.mrb[0].mxu0
      %2275 = vmatprep.mubr.bf16.mxu0 %v1024
      %2276 = vmatmul.mubr.bf16.gmra.mrb[0].mxu0 %v448
      %v2277 = vpop.f32.mrb[0].mxu0
      %v2278 = vadd.f32 %v2125, %v2277
      %v2279 = vpop.f32.mrb[0].mxu0
      %v2280 = vpop.f32.mrb[0].mxu0
      %v2281 = vadd.f32 %v2128, %v2280
      %v2282 = vpop.f32.mrb[0].mxu0
      %2283 = vmatprep.mubr.bf16.mxu0 %v1032
      %2284 = vmatmul.mubr.bf16.gmra.mrb[0].mxu0 %v449
      %v2285 = vpop.f32.mrb[0].mxu0
      %v2286 = vadd.f32 %v2133, %v2285
      %v2287 = vpop.f32.mrb[0].mxu0
      %v2288 = vpop.f32.mrb[0].mxu0
      %v2289 = vadd.f32 %v2136, %v2288
      %v2290 = vpop.f32.mrb[0].mxu0
      %2291 = vmatprep.mubr.bf16.mxu0 %v1040
      %2292 = vmatmul.mubr.bf16.gmra.mrb[0].mxu0 %v450
      %v2293 = vpop.f32.mrb[0].mxu0
      %v2294 = vadd.f32 %v2141, %v2293
      %v2295 = vpop.f32.mrb[0].mxu0
      %v2296 = vpop.f32.mrb[0].mxu0
      %v2297 = vadd.f32 %v2144, %v2296
      %v2298 = vpop.f32.mrb[0].mxu0
      %2299 = vmatprep.mubr.bf16.mxu0 %v1048
      %2300 = vmatmul.mubr.bf16.gmra.mrb[0].mxu0 %v451
      %v2301 = vpop.f32.mrb[0].mxu0
      %v2302 = vadd.f32 %v2149, %v2301
      %v2303 = vpop.f32.mrb[0].mxu0
      %v2304 = vpop.f32.mrb[0].mxu0
      %v2305 = vadd.f32 %v2152, %v2304
      %v2306 = vpop.f32.mrb[0].mxu0
      %2307 = vmatprep.mubr.bf16.mxu0 %v1056
      %2308 = vmatmul.mubr.bf16.gmra.mrb[0].mxu0 %v452
      %v2309 = vpop.f32.mrb[0].mxu0
      %v2310 = vadd.f32 %v2157, %v2309
      %v2311 = vpop.f32.mrb[0].mxu0
      %v2312 = vpop.f32.mrb[0].mxu0
      %v2313 = vadd.f32 %v2160, %v2312
      %v2314 = vpop.f32.mrb[0].mxu0
      %2315 = vmatprep.mubr.bf16.mxu0 %v1064
      %2316 = vmatmul.mubr.bf16.gmra.mrb[0].mxu0 %v453
      %v2317 = vpop.f32.mrb[0].mxu0
      %v2318 = vadd.f32 %v2165, %v2317
      %v2319 = vpop.f32.mrb[0].mxu0
      %v2320 = vpop.f32.mrb[0].mxu0
      %v2321 = vadd.f32 %v2168, %v2320
      %v2322 = vpop.f32.mrb[0].mxu0
      %2323 = vmatprep.mubr.bf16.mxu0 %v1072
      %2324 = vmatmul.mubr.bf16.gmra.mrb[0].mxu0 %v454
      %v2325 = vpop.f32.mrb[0].mxu0
      %v2326 = vadd.f32 %v2173, %v2325
      %v2327 = vpop.f32.mrb[0].mxu0
      %v2328 = vpop.f32.mrb[0].mxu0
      %v2329 = vadd.f32 %v2176, %v2328
      %v2330 = vpop.f32.mrb[0].mxu0
      %2331 = vmatprep.mubr.bf16.mxu0 %v1080
      %2332 = vmatmul.mubr.bf16.gmra.mrb[0].mxu0 %v455
      %v2333 = vpop.f32.mrb[0].mxu0
      %v2334 = vadd.f32 %v2181, %v2333
      %v2335 = vpop.f32.mrb[0].mxu0
      %v2336 = vpop.f32.mrb[0].mxu0
      %v2337 = vadd.f32 %v2184, %v2336
      %v2338 = vpop.f32.mrb[0].mxu0
      %2339 = vmatprep.mubr.bf16.mxu0 %v1088
      %2340 = vmatmul.mubr.bf16.gmra.mrb[0].mxu0 %v897
      %v2341 = vpop.f32.mrb[0].mxu0
      %v2342 = vadd.f32 %v2189, %v2341
      %v2343 = vpop.f32.mrb[0].mxu0
      %v2344 = vpop.f32.mrb[0].mxu0
      %v2345 = vadd.f32 %v2192, %v2344
      %v2346 = vpop.f32.mrb[0].mxu0
      %2347 = vmatprep.mubr.bf16.mxu0 %v1096
      %2348 = vmatmul.mubr.bf16.gmra.mrb[0].mxu0 %v898
      %v2349 = vpop.f32.mrb[0].mxu0
      %v2350 = vadd.f32 %v2197, %v2349
      %v2351 = vpop.f32.mrb[0].mxu0
      %v2352 = vpop.f32.mrb[0].mxu0
      %v2353 = vadd.f32 %v2200, %v2352
      %v2354 = vpop.f32.mrb[0].mxu0
      %2355 = vmatprep.mubr.bf16.mxu0 %v1104
      %2356 = vmatmul.mubr.bf16.gmra.mrb[0].mxu0 %v899
      %v2357 = vpop.f32.mrb[0].mxu0
      %v2358 = vadd.f32 %v2205, %v2357
      %v2359 = vpop.f32.mrb[0].mxu0
      %v2360 = vpop.f32.mrb[0].mxu0
      %v2361 = vadd.f32 %v2208, %v2360
      %v2362 = vpop.f32.mrb[0].mxu0
      %2363 = vdwg.mxu0
      %2364 = vmatprep.subr.bf16.mxu0 0
      %2365 = vmatpush1.bf16.msra.mxu0 %v1672
      %2366 = vmatprep.subr.bf16.mxu0 0
      %2367 = vmatpush1.bf16.msra.mxu0 %v1673
      %2368 = vmatprep.subr.bf16.mxu0 0
      %2369 = vmatpush1.bf16.msra.mxu0 %v1674
      %2370 = vmatprep.subr.bf16.mxu0 0
      %2371 = vmatpush1.bf16.msra.mxu0 %v1675
      %2372 = vmatprep.subr.bf16.mxu0 0
      %2373 = vmatpush1.bf16.msra.mxu0 %v1676
      %2374 = vmatprep.subr.bf16.mxu0 0
      %2375 = vmatpush1.bf16.msra.mxu0 %v1677
      %2376 = vmatprep.subr.bf16.mxu0 0
      %2377 = vmatpush1.bf16.msra.mxu0 %v1678
      %2378 = vmatprep.subr.bf16.mxu0 0
      %2379 = vmatpush1.bf16.msra.mxu0 %v1679
      %2380 = vmatprep.subr.bf16.mxu0 0
      %2381 = vmatpush1.bf16.msra.mxu0 0
      %2382 = vmatprep.subr.bf16.mxu0 0
      %2383 = vmatpush1.bf16.msra.mxu0 0
      %2384 = vmatprep.subr.bf16.mxu0 0
      %2385 = vmatpush1.bf16.msra.mxu0 0
      %2386 = vmatprep.subr.bf16.mxu0 0
      %2387 = vmatpush1.bf16.msra.mxu0 0
      %2388 = vmatprep.subr.bf16.mxu0 0
      %2389 = vmatpush1.bf16.msra.mxu0 0
      %2390 = vmatprep.subr.bf16.mxu0 0
      %2391 = vmatpush1.bf16.msra.mxu0 0
      %2392 = vmatprep.subr.bf16.mxu0 0
      %2393 = vmatpush1.bf16.msra.mxu0 0
      %2394 = vmatprep.subr.bf16.mxu0 0
      %2395 = vmatpush1.bf16.msra.mxu0 0
      %2396 = vmatprep.mubr.bf16.mxu0 0
      %2397 = vmatmul.mubr.bf16.gmra.mrb[0].mxu0 %v1125
      %v2398 = vpop.f32.mrb[0].mxu0
      %v2399 = vadd.f32 %v2246, %v2398
      %v2400 = vpop.f32.mrb[0].mxu0
      %v2401 = vpop.f32.mrb[0].mxu0
      %v2402 = vadd.f32 %v2249, %v2401
      %v2403 = vpop.f32.mrb[0].mxu0
      %2404 = vmatprep.mubr.bf16.mxu0 0
      %2405 = vmatmul.mubr.bf16.gmra.mrb[0].mxu0 %v1127
      %v2406 = vpop.f32.mrb[0].mxu0
      %v2407 = vadd.f32 %v2254, %v2406
      %v2408 = vpop.f32.mrb[0].mxu0
      %v2409 = vpop.f32.mrb[0].mxu0
      %v2410 = vadd.f32 %v2257, %v2409
      %v2411 = vpop.f32.mrb[0].mxu0
      %2412 = vmatprep.mubr.bf16.mxu0 0
      %2413 = vmatmul.mubr.bf16.gmra.mrb[0].mxu0 %v1129
      %v2414 = vpop.f32.mrb[0].mxu0
      %v2415 = vadd.f32 %v2262, %v2414
      %v2416 = vpop.f32.mrb[0].mxu0
      %v2417 = vpop.f32.mrb[0].mxu0
      %v2418 = vadd.f32 %v2265, %v2417
      %v2419 = vpop.f32.mrb[0].mxu0
      %2420 = vmatprep.mubr.bf16.mxu0 0
      %2421 = vmatmul.mubr.bf16.gmra.mrb[0].mxu0 %v1131
      %v2422 = vpop.f32.mrb[0].mxu0
      %v2423 = vadd.f32 %v2270, %v2422
      %v2424 = vpop.f32.mrb[0].mxu0
      %v2425 = vpop.f32.mrb[0].mxu0
      %v2426 = vadd.f32 %v2273, %v2425
      %v2427 = vpop.f32.mrb[0].mxu0
      %2428 = vmatprep.mubr.bf16.mxu0 0
      %2429 = vmatmul.mubr.bf16.gmra.mrb[0].mxu0 %v1133
      %v2430 = vpop.f32.mrb[0].mxu0
      %v2431 = vadd.f32 %v2278, %v2430
      %v2432 = vpop.f32.mrb[0].mxu0
      %v2433 = vpop.f32.mrb[0].mxu0
      %v2434 = vadd.f32 %v2281, %v2433
      %v2435 = vpop.f32.mrb[0].mxu0
      %2436 = vmatprep.mubr.bf16.mxu0 0
      %2437 = vmatmul.mubr.bf16.gmra.mrb[0].mxu0 %v1135
      %v2438 = vpop.f32.mrb[0].mxu0
      %v2439 = vadd.f32 %v2286, %v2438
      %v2440 = vpop.f32.mrb[0].mxu0
      %v2441 = vpop.f32.mrb[0].mxu0
      %v2442 = vadd.f32 %v2289, %v2441
      %v2443 = vpop.f32.mrb[0].mxu0
      %2444 = vmatprep.mubr.bf16.mxu0 0
      %2445 = vmatmul.mubr.bf16.gmra.mrb[0].mxu0 %v1137
      %v2446 = vpop.f32.mrb[0].mxu0
      %v2447 = vadd.f32 %v2294, %v2446
      %v2448 = vpop.f32.mrb[0].mxu0
      %v2449 = vpop.f32.mrb[0].mxu0
      %v2450 = vadd.f32 %v2297, %v2449
      %v2451 = vpop.f32.mrb[0].mxu0
      %2452 = vmatprep.mubr.bf16.mxu0 0
      %2453 = vmatmul.mubr.bf16.gmra.mrb[0].mxu0 %v1139
      %v2454 = vpop.f32.mrb[0].mxu0
      %v2455 = vadd.f32 %v2302, %v2454
      %v2456 = vpop.f32.mrb[0].mxu0
      %v2457 = vpop.f32.mrb[0].mxu0
      %v2458 = vadd.f32 %v2305, %v2457
      %v2459 = vpop.f32.mrb[0].mxu0
      %2460 = vmatprep.mubr.bf16.mxu0 0
      %2461 = vmatmul.mubr.bf16.gmra.mrb[0].mxu0 %v1141
      %v2462 = vpop.f32.mrb[0].mxu0
      %v2463 = vadd.f32 %v2310, %v2462
      %v2464 = vpop.f32.mrb[0].mxu0
      %v2465 = vpop.f32.mrb[0].mxu0
      %v2466 = vadd.f32 %v2313, %v2465
      %v2467 = vpop.f32.mrb[0].mxu0
      %2468 = vmatprep.mubr.bf16.mxu0 0
      %2469 = vmatmul.mubr.bf16.gmra.mrb[0].mxu0 %v1143
      %v2470 = vpop.f32.mrb[0].mxu0
      %v2471 = vadd.f32 %v2318, %v2470
      %v2472 = vpop.f32.mrb[0].mxu0
      %v2473 = vpop.f32.mrb[0].mxu0
      %v2474 = vadd.f32 %v2321, %v2473
      %v2475 = vpop.f32.mrb[0].mxu0
      %2476 = vmatprep.mubr.bf16.mxu0 0
      %2477 = vmatmul.mubr.bf16.gmra.mrb[0].mxu0 %v1145
      %v2478 = vpop.f32.mrb[0].mxu0
      %v2479 = vadd.f32 %v2326, %v2478
      %v2480 = vpop.f32.mrb[0].mxu0
      %v2481 = vpop.f32.mrb[0].mxu0
      %v2482 = vadd.f32 %v2329, %v2481
      %v2483 = vpop.f32.mrb[0].mxu0
      %2484 = vmatprep.mubr.bf16.mxu0 0
      %2485 = vmatmul.mubr.bf16.gmra.mrb[0].mxu0 %v1147
      %v2486 = vpop.f32.mrb[0].mxu0
      %v2487 = vadd.f32 %v2334, %v2486
      %v2488 = vpop.f32.mrb[0].mxu0
      %v2489 = vpop.f32.mrb[0].mxu0
      %v2490 = vadd.f32 %v2337, %v2489
      %v2491 = vpop.f32.mrb[0].mxu0
      %2492 = vmatprep.mubr.bf16.mxu0 0
      %2493 = vmatmul.mubr.bf16.gmra.mrb[0].mxu0 %v1149
      %v2494 = vpop.f32.mrb[0].mxu0
      %v2495 = vadd.f32 %v2342, %v2494
      %v2496 = vpop.f32.mrb[0].mxu0
      %v2497 = vpop.f32.mrb[0].mxu0
      %v2498 = vadd.f32 %v2345, %v2497
      %v2499 = vpop.f32.mrb[0].mxu0
      %2500 = vmatprep.mubr.bf16.mxu0 0
      %2501 = vmatmul.mubr.bf16.gmra.mrb[0].mxu0 %v1151
      %v2502 = vpop.f32.mrb[0].mxu0
      %v2503 = vadd.f32 %v2350, %v2502
      %v2504 = vpop.f32.mrb[0].mxu0
      %v2505 = vpop.f32.mrb[0].mxu0
      %v2506 = vadd.f32 %v2353, %v2505
      %v2507 = vpop.f32.mrb[0].mxu0
      %2508 = vmatprep.mubr.bf16.mxu0 0
      %2509 = vmatmul.mubr.bf16.gmra.mrb[0].mxu0 %v1153
      %v2510 = vpop.f32.mrb[0].mxu0
      %v2511 = vadd.f32 %v2358, %v2510
      %v2512 = vpop.f32.mrb[0].mxu0
      %v2513 = vpop.f32.mrb[0].mxu0
      %v2514 = vadd.f32 %v2361, %v2513
      %v2515 = vpop.f32.mrb[0].mxu0
      %2516 = vdwg.mxu0
      %v2517 = vmax.f32 %v2399, 0.0
      %v2518 = vmax.f32 %v2402, 0.0
      %v2519 = vmax.f32 %v2407, 0.0
      %v2520 = vmax.f32 %v2410, 0.0
      %v2521 = vmax.f32 %v2415, 0.0
      %v2522 = vmax.f32 %v2418, 0.0
      %v2523 = vmax.f32 %v2423, 0.0
      %v2524 = vmax.f32 %v2426, 0.0
      %v2525 = vmax.f32 %v2431, 0.0
      %v2526 = vmax.f32 %v2434, 0.0
      %v2527 = vmax.f32 %v2439, 0.0
      %v2528 = vmax.f32 %v2442, 0.0
      %v2529 = vmax.f32 %v2447, 0.0
      %v2530 = vmax.f32 %v2450, 0.0
      %v2531 = vmax.f32 %v2455, 0.0
      %v2532 = vmax.f32 %v2458, 0.0
      %v2533 = vmax.f32 %v2463, 0.0
      %v2534 = vmax.f32 %v2466, 0.0
      %v2535 = vmax.f32 %v2471, 0.0
      %v2536 = vmax.f32 %v2474, 0.0
      %v2537 = vmax.f32 %v2479, 0.0
      %v2538 = vmax.f32 %v2482, 0.0
      %v2539 = vmax.f32 %v2487, 0.0
      %v2540 = vmax.f32 %v2490, 0.0
      %v2541 = vmax.f32 %v2495, 0.0
      %v2542 = vmax.f32 %v2498, 0.0
      %v2543 = vmax.f32 %v2503, 0.0
      %v2544 = vmax.f32 %v2506, 0.0
      %v2545 = vmax.f32 %v2511, 0.0
      %v2546 = vmax.f32 %v2514, 0.0
      %v2547 = vld [vmem:[%s298] sm:$0xff]
      %v2548 = vld [vmem:[%s298 + $0x8] sm:$0xff]
      %v2549 = vld [vmem:[%s298 + $0x10] sm:$0xff]
      %v2550 = vld [vmem:[%s298 + $0x18] sm:$0xff]
      %v2551 = vld [vmem:[%s298 + $0x20] sm:$0xff]
      %v2552 = vld [vmem:[%s298 + $0x28] sm:$0xff]
      %v2553 = vld [vmem:[%s298 + $0x30] sm:$0xff]
      %v2554 = vld [vmem:[%s298 + $0x38] sm:$0xff]
      %v2555 = vld [vmem:[%s298 + $0x40] sm:$0xff]
      %v2556 = vld [vmem:[%s298 + $0x48] sm:$0xff]
      %v2557 = vld [vmem:[%s298 + $0x50] sm:$0xff]
      %v2558 = vld [vmem:[%s298 + $0x58] sm:$0xff]
      %v2559 = vld [vmem:[%s298 + $0x60] sm:$0xff]
      %v2560 = vld [vmem:[%s298 + $0x68] sm:$0xff]
      %v2561 = vld [vmem:[%s298 + $0x70] sm:$0xff]
      %v2562 = vld [vmem:[%s298 + $0x78] sm:$0xff]
      %v2563 = vld [vmem:[%s298 + $0x80] sm:$0xff]
      %v2564 = vld [vmem:[%s298 + $0x88] sm:$0xff]
      %v2565 = vld [vmem:[%s298 + $0x90] sm:$0xff]
      %v2566 = vld [vmem:[%s298 + $0x98] sm:$0xff]
      %v2567 = vld [vmem:[%s298 + $0xa0] sm:$0xff]
      %v2568 = vld [vmem:[%s298 + $0xa8] sm:$0xff]
      %v2569 = vld [vmem:[%s298 + $0xb0] sm:$0xff]
      %v2570 = vld [vmem:[%s298 + $0xb8] sm:$0xff]
      %v2571 = vld [vmem:[%s298 + $0xc0] sm:$0xff]
      %v2572 = vld [vmem:[%s298 + $0xc8] sm:$0xff]
      %v2573 = vld [vmem:[%s298 + $0xd0] sm:$0xff]
      %v2574 = vld [vmem:[%s298 + $0xd8] sm:$0xff]
      %v2575 = vld [vmem:[%s298 + $0xe0] sm:$0xff]
      %v2576 = vld [vmem:[%s298 + $0xe8] sm:$0xff]
      %2578 = vset.pattern.permute.xlu0 0
      %2579 = vperm.xlu0 %2578, %v2547
      %v2580 = vpop.permute.xlu0 %2579
      %2583 = vset.pattern.permute.xlu0 0
      %2584 = vperm.xlu0 %2583, %v2548
      %v2585 = vpop.permute.xlu0 %2584
      %2588 = vset.pattern.permute.xlu0 0
      %2589 = vperm.xlu0 %2588, %v2549
      %v2590 = vpop.permute.xlu0 %2589
      %2593 = vset.pattern.permute.xlu0 0
      %2594 = vperm.xlu0 %2593, %v2550
      %v2595 = vpop.permute.xlu0 %2594
      %2598 = vset.pattern.permute.xlu0 0
      %2599 = vperm.xlu0 %2598, %v2551
      %v2600 = vpop.permute.xlu0 %2599
      %2603 = vset.pattern.permute.xlu0 0
      %2604 = vperm.xlu0 %2603, %v2552
      %v2605 = vpop.permute.xlu0 %2604
      %2608 = vset.pattern.permute.xlu0 0
      %2609 = vperm.xlu0 %2608, %v2553
      %v2610 = vpop.permute.xlu0 %2609
      %2613 = vset.pattern.permute.xlu0 0
      %2614 = vperm.xlu0 %2613, %v2554
      %v2615 = vpop.permute.xlu0 %2614
      %2618 = vset.pattern.permute.xlu0 0
      %2619 = vperm.xlu0 %2618, %v2555
      %v2620 = vpop.permute.xlu0 %2619
      %2623 = vset.pattern.permute.xlu0 0
      %2624 = vperm.xlu0 %2623, %v2556
      %v2625 = vpop.permute.xlu0 %2624
      %2628 = vset.pattern.permute.xlu0 0
      %2629 = vperm.xlu0 %2628, %v2557
      %v2630 = vpop.permute.xlu0 %2629
      %2633 = vset.pattern.permute.xlu0 0
      %2634 = vperm.xlu0 %2633, %v2558
      %v2635 = vpop.permute.xlu0 %2634
      %2638 = vset.pattern.permute.xlu0 0
      %2639 = vperm.xlu0 %2638, %v2559
      %v2640 = vpop.permute.xlu0 %2639
      %2643 = vset.pattern.permute.xlu0 0
      %2644 = vperm.xlu0 %2643, %v2560
      %v2645 = vpop.permute.xlu0 %2644
      %2648 = vset.pattern.permute.xlu0 0
      %2649 = vperm.xlu0 %2648, %v2561
      %v2650 = vpop.permute.xlu0 %2649
      %2653 = vset.pattern.permute.xlu0 0
      %2654 = vperm.xlu0 %2653, %v2562
      %v2655 = vpop.permute.xlu0 %2654
      %2658 = vset.pattern.permute.xlu0 0
      %2659 = vperm.xlu0 %2658, %v2563
      %v2660 = vpop.permute.xlu0 %2659
      %2663 = vset.pattern.permute.xlu0 0
      %2664 = vperm.xlu0 %2663, %v2564
      %v2665 = vpop.permute.xlu0 %2664
      %2668 = vset.pattern.permute.xlu0 0
      %2669 = vperm.xlu0 %2668, %v2565
      %v2670 = vpop.permute.xlu0 %2669
      %2673 = vset.pattern.permute.xlu0 0
      %2674 = vperm.xlu0 %2673, %v2566
      %v2675 = vpop.permute.xlu0 %2674
      %2678 = vset.pattern.permute.xlu0 0
      %2679 = vperm.xlu0 %2678, %v2567
      %v2680 = vpop.permute.xlu0 %2679
      %2683 = vset.pattern.permute.xlu0 0
      %2684 = vperm.xlu0 %2683, %v2568
      %v2685 = vpop.permute.xlu0 %2684
      %2688 = vset.pattern.permute.xlu0 0
      %2689 = vperm.xlu0 %2688, %v2569
      %v2690 = vpop.permute.xlu0 %2689
      %2693 = vset.pattern.permute.xlu0 0
      %2694 = vperm.xlu0 %2693, %v2570
      %v2695 = vpop.permute.xlu0 %2694
      %2698 = vset.pattern.permute.xlu0 0
      %2699 = vperm.xlu0 %2698, %v2571
      %v2700 = vpop.permute.xlu0 %2699
      %2703 = vset.pattern.permute.xlu0 0
      %2704 = vperm.xlu0 %2703, %v2572
      %v2705 = vpop.permute.xlu0 %2704
      %2708 = vset.pattern.permute.xlu0 0
      %2709 = vperm.xlu0 %2708, %v2573
      %v2710 = vpop.permute.xlu0 %2709
      %2713 = vset.pattern.permute.xlu0 0
      %2714 = vperm.xlu0 %2713, %v2574
      %v2715 = vpop.permute.xlu0 %2714
      %2718 = vset.pattern.permute.xlu0 0
      %2719 = vperm.xlu0 %2718, %v2575
      %v2720 = vpop.permute.xlu0 %2719
      %2723 = vset.pattern.permute.xlu0 0
      %2724 = vperm.xlu0 %2723, %v2576
      %v2725 = vpop.permute.xlu0 %2724
      %v2727 = vmul.f32 %v2517, %v2580
      %v2728 = vmul.f32 %v2518, %v2585
      %v2729 = vmul.f32 %v2519, %v2590
      %v2730 = vmul.f32 %v2520, %v2595
      %v2731 = vmul.f32 %v2521, %v2600
      %v2732 = vmul.f32 %v2522, %v2605
      %v2733 = vmul.f32 %v2523, %v2610
      %v2734 = vmul.f32 %v2524, %v2615
      %v2735 = vmul.f32 %v2525, %v2620
      %v2736 = vmul.f32 %v2526, %v2625
      %v2737 = vmul.f32 %v2527, %v2630
      %v2738 = vmul.f32 %v2528, %v2635
      %v2739 = vmul.f32 %v2529, %v2640
      %v2740 = vmul.f32 %v2530, %v2645
      %v2741 = vmul.f32 %v2531, %v2650
      %v2742 = vmul.f32 %v2532, %v2655
      %v2743 = vmul.f32 %v2533, %v2660
      %v2744 = vmul.f32 %v2534, %v2665
      %v2745 = vmul.f32 %v2535, %v2670
      %v2746 = vmul.f32 %v2536, %v2675
      %v2747 = vmul.f32 %v2537, %v2680
      %v2748 = vmul.f32 %v2538, %v2685
      %v2749 = vmul.f32 %v2539, %v2690
      %v2750 = vmul.f32 %v2540, %v2695
      %v2751 = vmul.f32 %v2541, %v2700
      %v2752 = vmul.f32 %v2542, %v2705
      %v2753 = vmul.f32 %v2543, %v2710
      %v2754 = vmul.f32 %v2544, %v2715
      %v2755 = vmul.f32 %v2545, %v2720
      %v2756 = vmul.f32 %v2546, %v2725
      %2757 = vst [vmem:[#allocation2] sm:$0xf] 0
      %2758 = vst [vmem:[#allocation2 + $0x4] sm:$0xf] 0
      %2759 = vst [vmem:[#allocation2 + $0x8] sm:$0xf] 0
      %2760 = vst [vmem:[#allocation2 + $0xc] sm:$0xf] 0
      %2761 = vst [vmem:[#allocation2 + $0x88] sm:$0xf] 0
      %v2762 = vpack.c.bf16 %v2728, %v2727
      %v2763 = vpack.c.bf16 %v2730, %v2729
      %v2764 = vpack.c.bf16 %v2732, %v2731
      %v2765 = vpack.c.bf16 %v2734, %v2733
      %v2766 = vpack.c.bf16 %v2736, %v2735
      %v2767 = vpack.c.bf16 %v2738, %v2737
      %v2768 = vpack.c.bf16 %v2740, %v2739
      %v2769 = vpack.c.bf16 %v2742, %v2741
      %v2770 = vpack.c.bf16 %v2744, %v2743
      %v2771 = vpack.c.bf16 %v2746, %v2745
      %v2772 = vpack.c.bf16 %v2748, %v2747
      %v2773 = vpack.c.bf16 %v2750, %v2749
      %v2774 = vpack.c.bf16 %v2752, %v2751
      %v2775 = vpack.c.bf16 %v2754, %v2753
      %v2776 = vpack.c.bf16 %v2756, %v2755
      %v2792 = vunpack.c.l.b16 %v2762
      %v2793 = vunpack.c.h.b16 %v2762
      %v2794 = vunpack.c.l.b16 %v2763
      %v2795 = vunpack.c.h.b16 %v2763
      %v2796 = vunpack.c.l.b16 %v2764
      %v2797 = vunpack.c.h.b16 %v2764
      %v2798 = vunpack.c.l.b16 %v2765
      %v2799 = vunpack.c.h.b16 %v2765
      %v2800 = vunpack.c.l.b16 %v2766
      %v2801 = vunpack.c.h.b16 %v2766
      %v2802 = vunpack.c.l.b16 %v2767
      %v2803 = vunpack.c.h.b16 %v2767
      %v2804 = vunpack.c.l.b16 %v2768
      %v2805 = vunpack.c.h.b16 %v2768
      %v2806 = vunpack.c.l.b16 %v2769
      %v2807 = vunpack.c.h.b16 %v2769
      %v2808 = vunpack.c.l.b16 %v2770
      %v2809 = vunpack.c.h.b16 %v2770
      %v2810 = vunpack.c.l.b16 %v2771
      %v2811 = vunpack.c.h.b16 %v2771
      %v2812 = vunpack.c.l.b16 %v2772
      %v2813 = vunpack.c.h.b16 %v2772
      %v2814 = vunpack.c.l.b16 %v2773
      %v2815 = vunpack.c.h.b16 %v2773
      %v2816 = vunpack.c.l.b16 %v2774
      %v2817 = vunpack.c.h.b16 %v2774
      %v2818 = vunpack.c.l.b16 %v2775
      %v2819 = vunpack.c.h.b16 %v2775
      %v2820 = vunpack.c.l.b16 %v2776
      %v2821 = vunpack.c.h.b16 %v2776
      %v2822 = vpack.c.b16 %v2792, %v2792
      %v2823 = vpack.c.b16 %v2793, %v2793
      %v2824 = vpack.c.b16 %v2794, %v2794
      %v2825 = vpack.c.b16 %v2795, %v2795
      %v2826 = vpack.c.b16 %v2796, %v2796
      %v2827 = vpack.c.b16 %v2797, %v2797
      %v2828 = vpack.c.b16 %v2798, %v2798
      %v2829 = vpack.c.b16 %v2799, %v2799
      %v2830 = vpack.c.b16 %v2800, %v2800
      %v2831 = vpack.c.b16 %v2801, %v2801
      %v2832 = vpack.c.b16 %v2802, %v2802
      %v2833 = vpack.c.b16 %v2803, %v2803
      %v2834 = vpack.c.b16 %v2804, %v2804
      %v2835 = vpack.c.b16 %v2805, %v2805
      %v2836 = vpack.c.b16 %v2806, %v2806
      %v2837 = vpack.c.b16 %v2807, %v2807
      %v2838 = vpack.c.b16 %v2808, %v2808
      %v2839 = vpack.c.b16 %v2809, %v2809
      %v2840 = vpack.c.b16 %v2810, %v2810
      %v2841 = vpack.c.b16 %v2811, %v2811
      %v2842 = vpack.c.b16 %v2812, %v2812
      %v2843 = vpack.c.b16 %v2813, %v2813
      %v2844 = vpack.c.b16 %v2814, %v2814
      %v2845 = vpack.c.b16 %v2815, %v2815
      %v2846 = vpack.c.b16 %v2816, %v2816
      %v2847 = vpack.c.b16 %v2817, %v2817
      %v2848 = vpack.c.b16 %v2818, %v2818
      %v2849 = vpack.c.b16 %v2819, %v2819
      %v2850 = vpack.c.b16 %v2820, %v2820
      %v2851 = vpack.c.b16 %v2821, %v2821
      %2882 = vst [vmem:[#allocation2 + $0x10] sm:$0xf] %v2822
      %2883 = vst [vmem:[#allocation2 + $0x14] sm:$0xf] %v2823
      %2884 = vst [vmem:[#allocation2 + $0x18] sm:$0xf] %v2824
      %2885 = vst [vmem:[#allocation2 + $0x1c] sm:$0xf] %v2825
      %2886 = vst [vmem:[#allocation2 + $0x20] sm:$0xf] %v2826
      %2887 = vst [vmem:[#allocation2 + $0x24] sm:$0xf] %v2827
      %2888 = vst [vmem:[#allocation2 + $0x28] sm:$0xf] %v2828
      %2889 = vst [vmem:[#allocation2 + $0x2c] sm:$0xf] %v2829
      %2890 = vst [vmem:[#allocation2 + $0x30] sm:$0xf] %v2830
      %2891 = vst [vmem:[#allocation2 + $0x34] sm:$0xf] %v2831
      %2892 = vst [vmem:[#allocation2 + $0x38] sm:$0xf] %v2832
      %2893 = vst [vmem:[#allocation2 + $0x3c] sm:$0xf] %v2833
      %2894 = vst [vmem:[#allocation2 + $0x40] sm:$0xf] %v2834
      %2895 = vst [vmem:[#allocation2 + $0x44] sm:$0xf] %v2835
      %2896 = vst [vmem:[#allocation2 + $0x48] sm:$0xf] %v2836
      %2897 = vst [vmem:[#allocation2 + $0x4c] sm:$0xf] %v2837
      %2898 = vst [vmem:[#allocation2 + $0x50] sm:$0xf] %v2838
      %2899 = vst [vmem:[#allocation2 + $0x54] sm:$0xf] %v2839
      %2900 = vst [vmem:[#allocation2 + $0x58] sm:$0xf] %v2840
      %2901 = vst [vmem:[#allocation2 + $0x5c] sm:$0xf] %v2841
      %2902 = vst [vmem:[#allocation2 + $0x60] sm:$0xf] %v2842
      %2903 = vst [vmem:[#allocation2 + $0x64] sm:$0xf] %v2843
      %2904 = vst [vmem:[#allocation2 + $0x68] sm:$0xf] %v2844
      %2905 = vst [vmem:[#allocation2 + $0x6c] sm:$0xf] %v2845
      %2906 = vst [vmem:[#allocation2 + $0x70] sm:$0xf] %v2846
      %2907 = vst [vmem:[#allocation2 + $0x74] sm:$0xf] %v2847
      %2908 = vst [vmem:[#allocation2 + $0x78] sm:$0xf] %v2848
      %2909 = vst [vmem:[#allocation2 + $0x7c] sm:$0xf] %v2849
      %2910 = vst [vmem:[#allocation2 + $0x80] sm:$0xf] %v2850
      %2911 = vst [vmem:[#allocation2 + $0x84] sm:$0xf] %v2851
      %v2912 = vld [vmem:[#allocation2 + $0xc] sm:$0x8]
      %v2913 = vld [vmem:[#allocation2 + $0x10] sm:$0xf]
      %v2914 = vld [vmem:[#allocation2 + $0x14] sm:$0xf]
      %v2915 = vld [vmem:[#allocation2 + $0x18] sm:$0xf]
      %v2916 = vld [vmem:[#allocation2 + $0x1c] sm:$0xf]
      %v2917 = vld [vmem:[#allocation2 + $0x20] sm:$0xf]
      %v2918 = vld [vmem:[#allocation2 + $0x24] sm:$0xf]
      %v2919 = vld [vmem:[#allocation2 + $0x28] sm:$0xf]
      %v2920 = vld [vmem:[#allocation2 + $0x2c] sm:$0xf]
      %v2921 = vld [vmem:[#allocation2 + $0x30] sm:$0xf]
      %v2922 = vld [vmem:[#allocation2 + $0x34] sm:$0xf]
      %v2923 = vld [vmem:[#allocation2 + $0x38] sm:$0xf]
      %v2924 = vld [vmem:[#allocation2 + $0x3c] sm:$0xf]
      %v2925 = vld [vmem:[#allocation2 + $0x40] sm:$0xf]
      %v2926 = vld [vmem:[#allocation2 + $0x44] sm:$0xf]
      %v2927 = vld [vmem:[#allocation2 + $0x48] sm:$0xf]
      %v2928 = vld [vmem:[#allocation2 + $0x4c] sm:$0xf]
      %v2929 = vld [vmem:[#allocation2 + $0x50] sm:$0xf]
      %v2930 = vld [vmem:[#allocation2 + $0x54] sm:$0xf]
      %v2931 = vld [vmem:[#allocation2 + $0x58] sm:$0xf]
      %v2932 = vld [vmem:[#allocation2 + $0x5c] sm:$0xf]
      %v2933 = vld [vmem:[#allocation2 + $0x60] sm:$0xf]
      %v2934 = vld [vmem:[#allocation2 + $0x64] sm:$0xf]
      %v2935 = vld [vmem:[#allocation2 + $0x68] sm:$0xf]
      %v2936 = vld [vmem:[#allocation2 + $0x6c] sm:$0xf]
      %v2937 = vld [vmem:[#allocation2 + $0x70] sm:$0x1]
      %v2938 = vld [vmem:[#allocation2 + $0x18] sm:$0x8]
      %v2939 = vld [vmem:[#allocation2 + $0x70] sm:$0xf]
      %v2940 = vld [vmem:[#allocation2 + $0x74] sm:$0xf]
      %v2941 = vld [vmem:[#allocation2 + $0x78] sm:$0xf]
      %v2942 = vld [vmem:[#allocation2 + $0x7c] sm:$0x1]
      %v2943 = vld [vmem:[#allocation2 + $0x24] sm:$0x8]
      %v2944 = vld [vmem:[#allocation2 + $0x7c] sm:$0xf]
      %v2945 = vld [vmem:[#allocation2 + $0x80] sm:$0xf]
      %v2946 = vld [vmem:[#allocation2 + $0x84] sm:$0xf]
      %v2947 = vld [vmem:[#allocation2 + $0x28] sm:$0xf]
      %v2948 = vld [vmem:[#allocation2 + $0x2c] sm:$0xf]
      %v2949 = vld [vmem:[#allocation2 + $0x30] sm:$0xf]
      %v2950 = vld [vmem:[#allocation2 + $0x34] sm:$0xf]
      %v2951 = vld [vmem:[#allocation2 + $0x38] sm:$0xf]
      %v2952 = vld [vmem:[#allocation2 + $0x3c] sm:$0xf]
      %v2953 = vld [vmem:[#allocation2 + $0x40] sm:$0xf]
      %v2954 = vld [vmem:[#allocation2 + $0x44] sm:$0xf]
      %v2955 = vld [vmem:[#allocation2 + $0x48] sm:$0xf]
      %v2956 = vld [vmem:[#allocation2 + $0x4c] sm:$0xf]
      %v2957 = vld [vmem:[#allocation2 + $0x50] sm:$0xf]
      %v2958 = vld [vmem:[#allocation2 + $0x54] sm:$0xf]
      %v2959 = vld [vmem:[#allocation2 + $0x58] sm:$0xf]
      %v2960 = vld [vmem:[#allocation2 + $0x5c] sm:$0xf]
      %v2961 = vld [vmem:[#allocation2 + $0x60] sm:$0xf]
      %v2962 = vld [vmem:[#allocation2 + $0x64] sm:$0xf]
      %v2963 = vld [vmem:[#allocation2 + $0x68] sm:$0xf]
      %v2964 = vld [vmem:[#allocation2 + $0x6c] sm:$0xf]
      %v2965 = vld [vmem:[#allocation2 + $0x70] sm:$0xf]
      %v2966 = vld [vmem:[#allocation2 + $0x74] sm:$0xf]
      %v2967 = vld [vmem:[#allocation2 + $0x78] sm:$0xf]
      %v2968 = vld [vmem:[#allocation2 + $0x7c] sm:$0xf]
      %v2969 = vld [vmem:[#allocation2 + $0x80] sm:$0xf]
      %v2970 = vld [vmem:[#allocation2 + $0x84] sm:$0xf]
      %v2971 = vld [vmem:[#allocation2 + $0x88] sm:$0x1]
      %v2997 = vunpack.c.l.b16 %v2912
      %v2998 = vunpack.c.l.b16 %v2913
      %v2999 = vunpack.c.l.b16 %v2914
      %v3000 = vunpack.c.l.b16 %v2915
      %v3001 = vunpack.c.l.b16 %v2916
      %v3002 = vunpack.c.l.b16 %v2917
      %v3003 = vunpack.c.l.b16 %v2918
      %v3004 = vunpack.c.l.b16 %v2919
      %v3005 = vunpack.c.l.b16 %v2920
      %v3006 = vunpack.c.l.b16 %v2921
      %v3007 = vunpack.c.l.b16 %v2922
      %v3008 = vunpack.c.l.b16 %v2923
      %v3009 = vunpack.c.l.b16 %v2924
      %v3010 = vunpack.c.l.b16 %v2925
      %v3011 = vunpack.c.l.b16 %v2926
      %v3012 = vunpack.c.l.b16 %v2927
      %v3013 = vunpack.c.l.b16 %v2928
      %v3014 = vunpack.c.l.b16 %v2929
      %v3015 = vunpack.c.l.b16 %v2930
      %v3016 = vunpack.c.l.b16 %v2931
      %v3017 = vunpack.c.l.b16 %v2932
      %v3018 = vunpack.c.l.b16 %v2933
      %v3019 = vunpack.c.l.b16 %v2934
      %v3020 = vunpack.c.l.b16 %v2935
      %v3021 = vunpack.c.l.b16 %v2936
      %v3022 = vpack.c.b16 %v2998, %v2997
      %v3023 = vpack.c.b16 %v3000, %v2999
      %v3024 = vpack.c.b16 %v3002, %v3001
      %v3025 = vpack.c.b16 %v3004, %v3003
      %v3026 = vpack.c.b16 %v3006, %v3005
      %v3027 = vpack.c.b16 %v3008, %v3007
      %v3028 = vpack.c.b16 %v3010, %v3009
      %v3029 = vpack.c.b16 %v3012, %v3011
      %v3030 = vpack.c.b16 %v3014, %v3013
      %v3031 = vpack.c.b16 %v3016, %v3015
      %v3032 = vpack.c.b16 %v3018, %v3017
      %v3033 = vpack.c.b16 %v3020, %v3019
      %v3034 = vpack.c.b16 %v3021, %v3021
      %v3035 = vpack.c.b16 %v2999, %v2998
      %v3036 = vpack.c.b16 %v3001, %v3000
      %v3037 = vpack.c.b16 %v3003, %v3002
      %v3038 = vpack.c.b16 %v3005, %v3004
      %v3039 = vpack.c.b16 %v3007, %v3006
      %v3040 = vpack.c.b16 %v3009, %v3008
      %v3041 = vpack.c.b16 %v3011, %v3010
      %v3042 = vpack.c.b16 %v3013, %v3012
      %v3043 = vpack.c.b16 %v3015, %v3014
      %v3044 = vpack.c.b16 %v3017, %v3016
      %v3045 = vpack.c.b16 %v3019, %v3018
      %v3046 = vpack.c.b16 %v3021, %v3020
      %vm3047 = vsmask.f32 3328
      %v3049 = vshrl.u32 %v3035, 16
      %v3051 = vrot.slane %v3049, 4
      %v3052 = vshll.u32 %v3035, 16
      %v3054 = vrot.slane %v3052, 5
      %v3055 = vor.u32 %v3051, %v3054
      %v3057 = vshrl.u32 %v3036, 16
      %v3059 = vrot.slane %v3057, 4
      %v3060 = vshll.u32 %v3036, 16
      %v3062 = vrot.slane %v3060, 5
      %v3063 = vor.u32 %v3059, %v3062
      %v3064 = vsel %vm3047, %v3055, %v3063
      %v3066 = vshrl.u32 %v3037, 16
      %v3068 = vrot.slane %v3066, 4
      %v3069 = vshll.u32 %v3037, 16
      %v3071 = vrot.slane %v3069, 5
      %v3072 = vor.u32 %v3068, %v3071
      %v3073 = vsel %vm3047, %v3063, %v3072
      %v3075 = vshrl.u32 %v3038, 16
      %v3077 = vrot.slane %v3075, 4
      %v3078 = vshll.u32 %v3038, 16
      %v3080 = vrot.slane %v3078, 5
      %v3081 = vor.u32 %v3077, %v3080
      %v3082 = vsel %vm3047, %v3072, %v3081
      %v3084 = vshrl.u32 %v3039, 16
      %v3086 = vrot.slane %v3084, 4
      %v3087 = vshll.u32 %v3039, 16
      %v3089 = vrot.slane %v3087, 5
      %v3090 = vor.u32 %v3086, %v3089
      %v3091 = vsel %vm3047, %v3081, %v3090
      %v3093 = vshrl.u32 %v3040, 16
      %v3095 = vrot.slane %v3093, 4
      %v3096 = vshll.u32 %v3040, 16
      %v3098 = vrot.slane %v3096, 5
      %v3099 = vor.u32 %v3095, %v3098
      %v3100 = vsel %vm3047, %v3090, %v3099
      %v3102 = vshrl.u32 %v3041, 16
      %v3104 = vrot.slane %v3102, 4
      %v3105 = vshll.u32 %v3041, 16
      %v3107 = vrot.slane %v3105, 5
      %v3108 = vor.u32 %v3104, %v3107
      %v3109 = vsel %vm3047, %v3099, %v3108
      %v3111 = vshrl.u32 %v3042, 16
      %v3113 = vrot.slane %v3111, 4
      %v3114 = vshll.u32 %v3042, 16
      %v3116 = vrot.slane %v3114, 5
      %v3117 = vor.u32 %v3113, %v3116
      %v3118 = vsel %vm3047, %v3108, %v3117
      %v3120 = vshrl.u32 %v3043, 16
      %v3122 = vrot.slane %v3120, 4
      %v3123 = vshll.u32 %v3043, 16
      %v3125 = vrot.slane %v3123, 5
      %v3126 = vor.u32 %v3122, %v3125
      %v3127 = vsel %vm3047, %v3117, %v3126
      %v3129 = vshrl.u32 %v3044, 16
      %v3131 = vrot.slane %v3129, 4
      %v3132 = vshll.u32 %v3044, 16
      %v3134 = vrot.slane %v3132, 5
      %v3135 = vor.u32 %v3131, %v3134
      %v3136 = vsel %vm3047, %v3126, %v3135
      %v3138 = vshrl.u32 %v3045, 16
      %v3140 = vrot.slane %v3138, 4
      %v3141 = vshll.u32 %v3045, 16
      %v3143 = vrot.slane %v3141, 5
      %v3144 = vor.u32 %v3140, %v3143
      %v3145 = vsel %vm3047, %v3135, %v3144
      %v3147 = vshrl.u32 %v3046, 16
      %v3149 = vrot.slane %v3147, 4
      %v3150 = vshll.u32 %v3046, 16
      %v3152 = vrot.slane %v3150, 5
      %v3153 = vor.u32 %v3149, %v3152
      %v3154 = vsel %vm3047, %v3144, %v3153
      %v3156 = vunpack.c.l.b16 %v2937
      %v3157 = vpack.c.b16 %v3156, %v3156
      %vm3158 = vcmask 1042432
      %v3159 = vrot.slane %v3035, 5
      %v3160 = vrot.slane %v3036, 5
      %v3161 = vsel %vm3158, %v3159, %v3160
      %v3162 = vrot.slane %v3037, 5
      %v3163 = vsel %vm3158, %v3160, %v3162
      %v3164 = vrot.slane %v3038, 5
      %v3165 = vsel %vm3158, %v3162, %v3164
      %v3166 = vrot.slane %v3039, 5
      %v3167 = vsel %vm3158, %v3164, %v3166
      %v3168 = vrot.slane %v3040, 5
      %v3169 = vsel %vm3158, %v3166, %v3168
      %v3170 = vrot.slane %v3041, 5
      %v3171 = vsel %vm3158, %v3168, %v3170
      %v3172 = vrot.slane %v3042, 5
      %v3173 = vsel %vm3158, %v3170, %v3172
      %v3174 = vrot.slane %v3043, 5
      %v3175 = vsel %vm3158, %v3172, %v3174
      %v3176 = vrot.slane %v3044, 5
      %v3177 = vsel %vm3158, %v3174, %v3176
      %v3178 = vrot.slane %v3045, 5
      %v3179 = vsel %vm3158, %v3176, %v3178
      %v3180 = vrot.slane %v3046, 5
      %v3181 = vsel %vm3158, %v3178, %v3180
      %v3182 = vrot.slane %v3157, 5
      %v3183 = vsel %vm3158, %v3180, %v3182
      %v3188 = vunpack.c.l.b16 %v2938
      %v3189 = vunpack.c.l.b16 %v2939
      %v3190 = vunpack.c.l.b16 %v2940
      %v3191 = vunpack.c.l.b16 %v2941
      %v3192 = vpack.c.b16 %v3001, %v3188
      %v3193 = vpack.c.b16 %v3190, %v3189
      %v3194 = vpack.c.b16 %v3191, %v3191
      %v3195 = vpack.c.b16 %v3189, %v3021
      %v3196 = vpack.c.b16 %v3191, %v3190
      %v3198 = vshrl.u32 %v3024, 16
      %v3200 = vrot.slane %v3198, 4
      %v3201 = vshll.u32 %v3024, 16
      %v3203 = vrot.slane %v3201, 5
      %v3204 = vor.u32 %v3200, %v3203
      %v3206 = vshrl.u32 %v3025, 16
      %v3208 = vrot.slane %v3206, 4
      %v3209 = vshll.u32 %v3025, 16
      %v3211 = vrot.slane %v3209, 5
      %v3212 = vor.u32 %v3208, %v3211
      %v3213 = vsel %vm3047, %v3204, %v3212
      %v3215 = vshrl.u32 %v3026, 16
      %v3217 = vrot.slane %v3215, 4
      %v3218 = vshll.u32 %v3026, 16
      %v3220 = vrot.slane %v3218, 5
      %v3221 = vor.u32 %v3217, %v3220
      %v3222 = vsel %vm3047, %v3212, %v3221
      %v3224 = vshrl.u32 %v3027, 16
      %v3226 = vrot.slane %v3224, 4
      %v3227 = vshll.u32 %v3027, 16
      %v3229 = vrot.slane %v3227, 5
      %v3230 = vor.u32 %v3226, %v3229
      %v3231 = vsel %vm3047, %v3221, %v3230
      %v3233 = vshrl.u32 %v3028, 16
      %v3235 = vrot.slane %v3233, 4
      %v3236 = vshll.u32 %v3028, 16
      %v3238 = vrot.slane %v3236, 5
      %v3239 = vor.u32 %v3235, %v3238
      %v3240 = vsel %vm3047, %v3230, %v3239
      %v3242 = vshrl.u32 %v3029, 16
      %v3244 = vrot.slane %v3242, 4
      %v3245 = vshll.u32 %v3029, 16
      %v3247 = vrot.slane %v3245, 5
      %v3248 = vor.u32 %v3244, %v3247
      %v3249 = vsel %vm3047, %v3239, %v3248
      %v3251 = vshrl.u32 %v3030, 16
      %v3253 = vrot.slane %v3251, 4
      %v3254 = vshll.u32 %v3030, 16
      %v3256 = vrot.slane %v3254, 5
      %v3257 = vor.u32 %v3253, %v3256
      %v3258 = vsel %vm3047, %v3248, %v3257
      %v3260 = vshrl.u32 %v3031, 16
      %v3262 = vrot.slane %v3260, 4
      %v3263 = vshll.u32 %v3031, 16
      %v3265 = vrot.slane %v3263, 5
      %v3266 = vor.u32 %v3262, %v3265
      %v3267 = vsel %vm3047, %v3257, %v3266
      %v3269 = vshrl.u32 %v3032, 16
      %v3271 = vrot.slane %v3269, 4
      %v3272 = vshll.u32 %v3032, 16
      %v3274 = vrot.slane %v3272, 5
      %v3275 = vor.u32 %v3271, %v3274
      %v3276 = vsel %vm3047, %v3266, %v3275
      %v3278 = vshrl.u32 %v3033, 16
      %v3280 = vrot.slane %v3278, 4
      %v3281 = vshll.u32 %v3033, 16
      %v3283 = vrot.slane %v3281, 5
      %v3284 = vor.u32 %v3280, %v3283
      %v3285 = vsel %vm3047, %v3275, %v3284
      %v3287 = vshrl.u32 %v3195, 16
      %v3289 = vrot.slane %v3287, 4
      %v3290 = vshll.u32 %v3195, 16
      %v3292 = vrot.slane %v3290, 5
      %v3293 = vor.u32 %v3289, %v3292
      %v3294 = vsel %vm3047, %v3284, %v3293
      %v3296 = vshrl.u32 %v3196, 16
      %v3298 = vrot.slane %v3296, 4
      %v3299 = vshll.u32 %v3196, 16
      %v3301 = vrot.slane %v3299, 5
      %v3302 = vor.u32 %v3298, %v3301
      %v3303 = vsel %vm3047, %v3293, %v3302
      %v3305 = vunpack.c.l.b16 %v2942
      %v3306 = vpack.c.b16 %v3305, %v3305
      %v3307 = vrot.slane %v3024, 5
      %v3308 = vrot.slane %v3025, 5
      %v3309 = vsel %vm3158, %v3307, %v3308
      %v3310 = vrot.slane %v3026, 5
      %v3311 = vsel %vm3158, %v3308, %v3310
      %v3312 = vrot.slane %v3027, 5
      %v3313 = vsel %vm3158, %v3310, %v3312
      %v3314 = vrot.slane %v3028, 5
      %v3315 = vsel %vm3158, %v3312, %v3314
      %v3316 = vrot.slane %v3029, 5
      %v3317 = vsel %vm3158, %v3314, %v3316
      %v3318 = vrot.slane %v3030, 5
      %v3319 = vsel %vm3158, %v3316, %v3318
      %v3320 = vrot.slane %v3031, 5
      %v3321 = vsel %vm3158, %v3318, %v3320
      %v3322 = vrot.slane %v3032, 5
      %v3323 = vsel %vm3158, %v3320, %v3322
      %v3324 = vrot.slane %v3033, 5
      %v3325 = vsel %vm3158, %v3322, %v3324
      %v3326 = vrot.slane %v3195, 5
      %v3327 = vsel %vm3158, %v3324, %v3326
      %v3328 = vrot.slane %v3196, 5
      %v3329 = vsel %vm3158, %v3326, %v3328
      %v3330 = vrot.slane %v3306, 5
      %v3331 = vsel %vm3158, %v3328, %v3330
      %v3336 = vunpack.c.l.b16 %v2943
      %v3337 = vunpack.c.l.b16 %v2944
      %v3338 = vunpack.c.l.b16 %v2945
      %v3339 = vunpack.c.l.b16 %v2946
      %v3340 = vpack.c.b16 %v3004, %v3336
      %v3341 = vpack.c.b16 %v3338, %v3337
      %v3342 = vpack.c.b16 %v3339, %v3339
      %v3343 = vpack.c.b16 %v3337, %v3191
      %v3344 = vpack.c.b16 %v3339, %v3338
      %v3346 = vshrl.u32 %v3193, 16
      %v3348 = vrot.slane %v3346, 4
      %v3349 = vshll.u32 %v3193, 16
      %v3351 = vrot.slane %v3349, 5
      %v3352 = vor.u32 %v3348, %v3351
      %v3353 = vsel %vm3047, %v3153, %v3352
      %v3355 = vshrl.u32 %v3343, 16
      %v3357 = vrot.slane %v3355, 4
      %v3358 = vshll.u32 %v3343, 16
      %v3360 = vrot.slane %v3358, 5
      %v3361 = vor.u32 %v3357, %v3360
      %v3362 = vsel %vm3047, %v3352, %v3361
      %v3364 = vshrl.u32 %v3344, 16
      %v3366 = vrot.slane %v3364, 4
      %v3367 = vshll.u32 %v3344, 16
      %v3369 = vrot.slane %v3367, 5
      %v3370 = vor.u32 %v3366, %v3369
      %v3371 = vsel %vm3047, %v3361, %v3370
      %v3397 = vunpack.c.l.b16 %v2947
      %v3398 = vunpack.c.l.b16 %v2948
      %v3399 = vunpack.c.l.b16 %v2949
      %v3400 = vunpack.c.l.b16 %v2950
      %v3401 = vunpack.c.l.b16 %v2951
      %v3402 = vunpack.c.l.b16 %v2952
      %v3403 = vunpack.c.l.b16 %v2953
      %v3404 = vunpack.c.l.b16 %v2954
      %v3405 = vunpack.c.l.b16 %v2955
      %v3406 = vunpack.c.l.b16 %v2956
      %v3407 = vunpack.c.l.b16 %v2957
      %v3408 = vunpack.c.l.b16 %v2958
      %v3409 = vunpack.c.l.b16 %v2959
      %v3410 = vunpack.c.l.b16 %v2960
      %v3411 = vunpack.c.l.b16 %v2961
      %v3412 = vunpack.c.l.b16 %v2962
      %v3413 = vunpack.c.l.b16 %v2963
      %v3414 = vunpack.c.l.b16 %v2964
      %v3415 = vunpack.c.l.b16 %v2965
      %v3416 = vunpack.c.l.b16 %v2966
      %v3417 = vunpack.c.l.b16 %v2967
      %v3418 = vunpack.c.l.b16 %v2968
      %v3419 = vunpack.c.l.b16 %v2969
      %v3420 = vunpack.c.l.b16 %v2970
      %v3421 = vunpack.c.l.b16 %v2971
      %v3422 = vpack.c.b16 %v3398, %v3397
      %v3423 = vpack.c.b16 %v3400, %v3399
      %v3424 = vpack.c.b16 %v3402, %v3401
      %v3425 = vpack.c.b16 %v3404, %v3403
      %v3426 = vpack.c.b16 %v3406, %v3405
      %v3427 = vpack.c.b16 %v3408, %v3407
      %v3428 = vpack.c.b16 %v3410, %v3409
      %v3429 = vpack.c.b16 %v3412, %v3411
      %v3430 = vpack.c.b16 %v3414, %v3413
      %v3431 = vpack.c.b16 %v3416, %v3415
      %v3432 = vpack.c.b16 %v3418, %v3417
      %v3433 = vpack.c.b16 %v3420, %v3419
      %v3434 = vpack.c.b16 %v3421, %v3421
      %v3435 = vrot.slane %v3422, 5
      %v3436 = vrot.slane %v3423, 5
      %v3437 = vsel %vm3158, %v3435, %v3436
      %v3438 = vrot.slane %v3424, 5
      %v3439 = vsel %vm3158, %v3436, %v3438
      %v3440 = vrot.slane %v3425, 5
      %v3441 = vsel %vm3158, %v3438, %v3440
      %v3442 = vrot.slane %v3426, 5
      %v3443 = vsel %vm3158, %v3440, %v3442
      %v3444 = vrot.slane %v3427, 5
      %v3445 = vsel %vm3158, %v3442, %v3444
      %v3446 = vrot.slane %v3428, 5
      %v3447 = vsel %vm3158, %v3444, %v3446
      %v3448 = vrot.slane %v3429, 5
      %v3449 = vsel %vm3158, %v3446, %v3448
      %v3450 = vrot.slane %v3430, 5
      %v3451 = vsel %vm3158, %v3448, %v3450
      %v3452 = vrot.slane %v3431, 5
      %v3453 = vsel %vm3158, %v3450, %v3452
      %v3454 = vrot.slane %v3432, 5
      %v3455 = vsel %vm3158, %v3452, %v3454
      %v3456 = vrot.slane %v3433, 5
      %v3457 = vsel %vm3158, %v3454, %v3456
      %v3458 = vrot.slane %v3434, 5
      %v3459 = vsel %vm3158, %v3456, %v3458
      %v3460 = vld [vmem:[%s3] sm:$0xf]
      %v3461 = vld [vmem:[%s3 + $0x4] sm:$0xf]
      %v3462 = vld [vmem:[%s3 + $0x8] sm:$0xf]
      %v3463 = vld [vmem:[%s3 + $0xc] sm:$0xf]
      %v3464 = vld [vmem:[%s3 + $0x10] sm:$0xf]
      %v3465 = vld [vmem:[%s3 + $0x14] sm:$0xf]
      %v3466 = vld [vmem:[%s3 + $0x18] sm:$0xf]
      %v3467 = vld [vmem:[%s3 + $0x1c] sm:$0xf]
      %v3468 = vld [vmem:[%s3 + $0x20] sm:$0xf]
      %v3469 = vld [vmem:[%s3 + $0x24] sm:$0xf]
      %v3470 = vld [vmem:[%s3 + $0x28] sm:$0xf]
      %v3471 = vld [vmem:[%s3 + $0x2c] sm:$0xf]
      %v3472 = vld [vmem:[%s3 + $0x30] sm:$0xf]
      %v3473 = vld [vmem:[%s3 + $0x34] sm:$0xf]
      %v3474 = vld [vmem:[%s3 + $0x38] sm:$0xf]
      %v3475 = vld [vmem:[%s3 + $0x3c] sm:$0xf]
      %v3476 = vld [vmem:[%s3 + $0x40] sm:$0xf]
      %v3477 = vld [vmem:[%s3 + $0x44] sm:$0xf]
      %v3478 = vld [vmem:[%s3 + $0x48] sm:$0xf]
      %v3479 = vld [vmem:[%s3 + $0x4c] sm:$0xf]
      %v3480 = vld [vmem:[%s3 + $0x50] sm:$0xf]
      %v3481 = vld [vmem:[%s3 + $0x54] sm:$0xf]
      %v3482 = vld [vmem:[%s3 + $0x58] sm:$0xf]
      %v3483 = vld [vmem:[%s3 + $0x5c] sm:$0xf]
      %v3484 = vld [vmem:[%s3 + $0x60] sm:$0xf]
      %v3485 = vld [vmem:[%s3 + $0x64] sm:$0xf]
      %v3486 = vld [vmem:[%s3 + $0x68] sm:$0xf]
      %v3487 = vld [vmem:[%s3 + $0x6c] sm:$0xf]
      %v3488 = vld [vmem:[%s3 + $0x70] sm:$0xf]
      %v3489 = vld [vmem:[%s3 + $0x74] sm:$0xf]
      %v3490 = vld [vmem:[%s3 + $0x78] sm:$0xf]
      %v3491 = vld [vmem:[%s3 + $0x7c] sm:$0xf]
      %v3492 = vld [vmem:[%s3 + $0x80] sm:$0xf]
      %v3493 = vld [vmem:[%s3 + $0x84] sm:$0xf]
      %v3494 = vld [vmem:[%s3 + $0x88] sm:$0xf]
      %v3495 = vld [vmem:[%s3 + $0x8c] sm:$0xf]
      %v3496 = vld [vmem:[%s3 + $0x90] sm:$0xf]
      %v3497 = vld [vmem:[%s3 + $0x94] sm:$0xf]
      %v3498 = vld [vmem:[%s3 + $0x98] sm:$0xf]
      %v3499 = vld [vmem:[%s3 + $0x9c] sm:$0xf]
      %v3500 = vld [vmem:[%s3 + $0xa0] sm:$0xf]
      %v3501 = vld [vmem:[%s3 + $0xa4] sm:$0xf]
      %v3502 = vld [vmem:[%s3 + $0xa8] sm:$0xf]
      %v3503 = vld [vmem:[%s3 + $0xac] sm:$0xf]
      %v3504 = vld [vmem:[%s3 + $0xb0] sm:$0xf]
      %v3505 = vld [vmem:[%s3 + $0xb4] sm:$0xf]
      %v3506 = vld [vmem:[%s3 + $0xb8] sm:$0xf]
      %v3507 = vld [vmem:[%s3 + $0xbc] sm:$0xf]
      %v3508 = vld [vmem:[%s3 + $0xc0] sm:$0xf]
      %v3509 = vld [vmem:[%s3 + $0xc4] sm:$0xf]
      %v3510 = vld [vmem:[%s3 + $0xc8] sm:$0xf]
      %v3511 = vld [vmem:[%s3 + $0xcc] sm:$0xf]
      %v3512 = vld [vmem:[%s3 + $0xd0] sm:$0xf]
      %v3513 = vld [vmem:[%s3 + $0xd4] sm:$0xf]
      %v3514 = vld [vmem:[%s3 + $0xd8] sm:$0xf]
      %v3515 = vld [vmem:[%s3 + $0xdc] sm:$0xf]
      %v3516 = vld [vmem:[%s3 + $0xe0] sm:$0xf]
      %v3517 = vld [vmem:[%s3 + $0xe4] sm:$0xf]
      %v3518 = vld [vmem:[%s3 + $0xe8] sm:$0xf]
      %v3519 = vld [vmem:[%s3 + $0xec] sm:$0xf]
      %v3520 = vld [vmem:[%s3 + $0xf0] sm:$0xf]
      %v3521 = vld [vmem:[%s3 + $0xf4] sm:$0xf]
      %v3522 = vld [vmem:[%s3 + $0xf8] sm:$0xf]
      %v3523 = vld [vmem:[%s3 + $0xfc] sm:$0xf]
      %v3524 = vld [vmem:[%s3 + $0x100] sm:$0xf]
      %v3525 = vld [vmem:[%s3 + $0x104] sm:$0xf]
      %v3526 = vld [vmem:[%s3 + $0x108] sm:$0xf]
      %v3527 = vld [vmem:[%s3 + $0x10c] sm:$0xf]
      %v3528 = vld [vmem:[%s3 + $0x110] sm:$0xf]
      %v3529 = vld [vmem:[%s3 + $0x114] sm:$0xf]
      %v3530 = vld [vmem:[%s3 + $0x118] sm:$0xf]
      %v3531 = vld [vmem:[%s3 + $0x11c] sm:$0xf]
      %v3532 = vld [vmem:[%s3 + $0x120] sm:$0xf]
      %v3533 = vld [vmem:[%s3 + $0x124] sm:$0xf]
      %v3534 = vld [vmem:[%s3 + $0x128] sm:$0xf]
      %v3535 = vld [vmem:[%s3 + $0x12c] sm:$0xf]
      %v3536 = vld [vmem:[%s3 + $0x130] sm:$0xf]
      %v3537 = vld [vmem:[%s3 + $0x134] sm:$0xf]
      %v3538 = vld [vmem:[%s3 + $0x138] sm:$0xf]
      %v3539 = vld [vmem:[%s3 + $0x13c] sm:$0xf]
      %v3540 = vld [vmem:[%s3 + $0x140] sm:$0xf]
      %v3541 = vld [vmem:[%s3 + $0x144] sm:$0xf]
      %v3542 = vld [vmem:[%s3 + $0x148] sm:$0xf]
      %v3543 = vld [vmem:[%s3 + $0x14c] sm:$0xf]
      %v3544 = vld [vmem:[%s3 + $0x150] sm:$0xf]
      %v3545 = vld [vmem:[%s3 + $0x154] sm:$0xf]
      %v3546 = vld [vmem:[%s3 + $0x158] sm:$0xf]
      %v3547 = vld [vmem:[%s3 + $0x15c] sm:$0xf]
      %v3548 = vld [vmem:[%s3 + $0x160] sm:$0xf]
      %v3549 = vld [vmem:[%s3 + $0x164] sm:$0xf]
      %v3550 = vld [vmem:[%s3 + $0x168] sm:$0xf]
      %v3551 = vld [vmem:[%s3 + $0x16c] sm:$0xf]
      %v3552 = vld [vmem:[%s3 + $0x170] sm:$0xf]
      %v3553 = vld [vmem:[%s3 + $0x174] sm:$0xf]
      %v3554 = vld [vmem:[%s3 + $0x178] sm:$0xf]
      %v3555 = vld [vmem:[%s3 + $0x17c] sm:$0xf]
      %v3556 = vld [vmem:[%s3 + $0x180] sm:$0xf]
      %v3557 = vld [vmem:[%s3 + $0x184] sm:$0xf]
      %v3558 = vld [vmem:[%s3 + $0x188] sm:$0xf]
      %v3559 = vld [vmem:[%s3 + $0x18c] sm:$0xf]
      %v3560 = vld [vmem:[%s3 + $0x190] sm:$0xf]
      %v3561 = vld [vmem:[%s3 + $0x194] sm:$0xf]
      %v3562 = vld [vmem:[%s3 + $0x198] sm:$0xf]
      %v3563 = vld [vmem:[%s3 + $0x19c] sm:$0xf]
      %v3564 = vld [vmem:[%s3 + $0x1a0] sm:$0xf]
      %v3565 = vld [vmem:[%s3 + $0x1a4] sm:$0xf]
      %v3566 = vld [vmem:[%s3 + $0x1a8] sm:$0xf]
      %v3567 = vld [vmem:[%s3 + $0x1ac] sm:$0xf]
      %v3568 = vld [vmem:[%s3 + $0x1b0] sm:$0xf]
      %v3569 = vld [vmem:[%s3 + $0x1b4] sm:$0xf]
      %v3570 = vld [vmem:[%s3 + $0x1b8] sm:$0xf]
      %v3571 = vld [vmem:[%s3 + $0x1bc] sm:$0xf]
      %v3572 = vld [vmem:[%s3 + $0x1c0] sm:$0xf]
      %v3573 = vld [vmem:[%s3 + $0x1c4] sm:$0xf]
      %v3574 = vld [vmem:[%s3 + $0x1c8] sm:$0xf]
      %v3575 = vld [vmem:[%s3 + $0x1cc] sm:$0xf]
      %v3576 = vld [vmem:[%s3 + $0x1d0] sm:$0xf]
      %v3577 = vld [vmem:[%s3 + $0x1d4] sm:$0xf]
      %v3578 = vld [vmem:[%s3 + $0x1d8] sm:$0xf]
      %v3579 = vld [vmem:[%s3 + $0x1dc] sm:$0xf]
      %v3580 = vld [vmem:[%s3 + $0x1e0] sm:$0xf]
      %v3581 = vld [vmem:[%s3 + $0x1e4] sm:$0xf]
      %v3582 = vld [vmem:[%s3 + $0x1e8] sm:$0xf]
      %v3583 = vld [vmem:[%s3 + $0x1ec] sm:$0xf]
      %v3584 = vld [vmem:[%s3 + $0x1f0] sm:$0xf]
      %v3585 = vld [vmem:[%s3 + $0x1f4] sm:$0xf]
      %v3586 = vld [vmem:[%s3 + $0x1f8] sm:$0xf]
      %v3587 = vld [vmem:[%s3 + $0x1fc] sm:$0xf]
      %v3588 = vld [vmem:[%s3 + $0x200] sm:$0xf]
      %v3589 = vld [vmem:[%s3 + $0x204] sm:$0xf]
      %v3590 = vld [vmem:[%s3 + $0x208] sm:$0xf]
      %v3591 = vld [vmem:[%s3 + $0x20c] sm:$0xf]
      %v3592 = vld [vmem:[%s3 + $0x210] sm:$0xf]
      %v3593 = vld [vmem:[%s3 + $0x214] sm:$0xf]
      %v3594 = vld [vmem:[%s3 + $0x218] sm:$0xf]
      %v3595 = vld [vmem:[%s3 + $0x21c] sm:$0xf]
      %v3596 = vld [vmem:[%s3 + $0x220] sm:$0xf]
      %v3597 = vld [vmem:[%s3 + $0x224] sm:$0xf]
      %v3598 = vld [vmem:[%s3 + $0x228] sm:$0xf]
      %v3599 = vld [vmem:[%s3 + $0x22c] sm:$0xf]
      %v3600 = vld [vmem:[%s3 + $0x230] sm:$0xf]
      %v3601 = vld [vmem:[%s3 + $0x234] sm:$0xf]
      %v3602 = vld [vmem:[%s3 + $0x238] sm:$0xf]
      %v3603 = vld [vmem:[%s3 + $0x23c] sm:$0xf]
      %v3604 = vld [vmem:[%s4] sm:$0x1]
      %v3606 = vlaneseq
      %v3607 = vshrl.u32 %v3606, 7
      %v3608 = vsub.s32 0, %v3607
      %v3609 = vrot.slane %v3604, %v3608
      %vm3611 = vsmask.f32 4352
      %v3613 = vshrl.u32 %v3022, 16
      %v3615 = vrot.slane %v3613, 3
      %v3616 = vshll.u32 %v3022, 16
      %v3618 = vrot.slane %v3616, 4
      %v3619 = vor.u32 %v3615, %v3618
      %v3621 = vshrl.u32 %v3023, 16
      %v3623 = vrot.slane %v3621, 3
      %v3624 = vshll.u32 %v3023, 16
      %v3626 = vrot.slane %v3624, 4
      %v3627 = vor.u32 %v3623, %v3626
      %v3628 = vsel %vm3611, %v3619, %v3627
      %v3630 = vshrl.u32 %v3055, 16
      %v3632 = vrot.slane %v3630, 3
      %v3633 = vshll.u32 %v3055, 16
      %v3635 = vrot.slane %v3633, 4
      %v3636 = vor.u32 %v3632, %v3635
      %v3638 = vshrl.u32 %v3064, 16
      %v3640 = vrot.slane %v3638, 3
      %v3641 = vshll.u32 %v3064, 16
      %v3643 = vrot.slane %v3641, 4
      %v3644 = vor.u32 %v3640, %v3643
      %v3645 = vsel %vm3611, %v3636, %v3644
      %v3647 = vshrl.u32 %v3159, 16
      %v3649 = vrot.slane %v3647, 3
      %v3650 = vshll.u32 %v3159, 16
      %v3652 = vrot.slane %v3650, 4
      %v3653 = vor.u32 %v3649, %v3652
      %v3655 = vshrl.u32 %v3161, 16
      %v3657 = vrot.slane %v3655, 3
      %v3658 = vshll.u32 %v3161, 16
      %v3660 = vrot.slane %v3658, 4
      %v3661 = vor.u32 %v3657, %v3660
      %v3662 = vsel %vm3611, %v3653, %v3661
      %v3664 = vshrl.u32 %v3192, 16
      %v3666 = vrot.slane %v3664, 3
      %v3667 = vshll.u32 %v3192, 16
      %v3669 = vrot.slane %v3667, 4
      %v3670 = vor.u32 %v3666, %v3669
      %v3671 = vrot.slane %v3066, 3
      %v3672 = vrot.slane %v3069, 4
      %v3673 = vor.u32 %v3671, %v3672
      %v3674 = vsel %vm3611, %v3670, %v3673
      %v3676 = vshrl.u32 %v3204, 16
      %v3678 = vrot.slane %v3676, 3
      %v3679 = vshll.u32 %v3204, 16
      %v3681 = vrot.slane %v3679, 4
      %v3682 = vor.u32 %v3678, %v3681
      %v3684 = vshrl.u32 %v3213, 16
      %v3686 = vrot.slane %v3684, 3
      %v3687 = vshll.u32 %v3213, 16
      %v3689 = vrot.slane %v3687, 4
      %v3690 = vor.u32 %v3686, %v3689
      %v3691 = vsel %vm3611, %v3682, %v3690
      %v3693 = vshrl.u32 %v3307, 16
      %v3695 = vrot.slane %v3693, 3
      %v3696 = vshll.u32 %v3307, 16
      %v3698 = vrot.slane %v3696, 4
      %v3699 = vor.u32 %v3695, %v3698
      %v3701 = vshrl.u32 %v3309, 16
      %v3703 = vrot.slane %v3701, 3
      %v3704 = vshll.u32 %v3309, 16
      %v3706 = vrot.slane %v3704, 4
      %v3707 = vor.u32 %v3703, %v3706
      %v3708 = vsel %vm3611, %v3699, %v3707
      %v3710 = vshrl.u32 %v3340, 16
      %v3712 = vrot.slane %v3710, 3
      %v3713 = vshll.u32 %v3340, 16
      %v3715 = vrot.slane %v3713, 4
      %v3716 = vor.u32 %v3712, %v3715
      %v3717 = vrot.slane %v3215, 3
      %v3718 = vrot.slane %v3218, 4
      %v3719 = vor.u32 %v3717, %v3718
      %v3720 = vsel %vm3611, %v3716, %v3719
      %v3722 = vshrl.u32 %v3081, 16
      %v3724 = vrot.slane %v3722, 3
      %v3725 = vshll.u32 %v3081, 16
      %v3727 = vrot.slane %v3725, 4
      %v3728 = vor.u32 %v3724, %v3727
      %v3730 = vshrl.u32 %v3091, 16
      %v3732 = vrot.slane %v3730, 3
      %v3733 = vshll.u32 %v3091, 16
      %v3735 = vrot.slane %v3733, 4
      %v3736 = vor.u32 %v3732, %v3735
      %v3737 = vsel %vm3611, %v3728, %v3736
      %v3739 = vshrl.u32 %v3435, 16
      %v3741 = vrot.slane %v3739, 3
      %v3742 = vshll.u32 %v3435, 16
      %v3744 = vrot.slane %v3742, 4
      %v3745 = vor.u32 %v3741, %v3744
      %v3747 = vshrl.u32 %v3437, 16
      %v3749 = vrot.slane %v3747, 3
      %v3750 = vshll.u32 %v3437, 16
      %v3752 = vrot.slane %v3750, 4
      %v3753 = vor.u32 %v3749, %v3752
      %v3754 = vsel %vm3611, %v3745, %v3753
      %v3755 = vrot.slane %v3198, 3
      %v3756 = vrot.slane %v3201, 4
      %v3757 = vor.u32 %v3755, %v3756
      %v3758 = vsel %vm3611, %v3627, %v3757
      %v3760 = vshrl.u32 %v3073, 16
      %v3762 = vrot.slane %v3760, 3
      %v3763 = vshll.u32 %v3073, 16
      %v3765 = vrot.slane %v3763, 4
      %v3766 = vor.u32 %v3762, %v3765
      %v3767 = vsel %vm3611, %v3644, %v3766
      %v3769 = vshrl.u32 %v3163, 16
      %v3771 = vrot.slane %v3769, 3
      %v3772 = vshll.u32 %v3163, 16
      %v3774 = vrot.slane %v3772, 4
      %v3775 = vor.u32 %v3771, %v3774
      %v3776 = vsel %vm3611, %v3661, %v3775
      %v3777 = vrot.slane %v3075, 3
      %v3778 = vrot.slane %v3078, 4
      %v3779 = vor.u32 %v3777, %v3778
      %v3780 = vsel %vm3611, %v3673, %v3779
      %v3782 = vshrl.u32 %v3222, 16
      %v3784 = vrot.slane %v3782, 3
      %v3785 = vshll.u32 %v3222, 16
      %v3787 = vrot.slane %v3785, 4
      %v3788 = vor.u32 %v3784, %v3787
      %v3789 = vsel %vm3611, %v3690, %v3788
      %v3791 = vshrl.u32 %v3311, 16
      %v3793 = vrot.slane %v3791, 3
      %v3794 = vshll.u32 %v3311, 16
      %v3796 = vrot.slane %v3794, 4
      %v3797 = vor.u32 %v3793, %v3796
      %v3798 = vsel %vm3611, %v3707, %v3797
      %v3799 = vrot.slane %v3224, 3
      %v3800 = vrot.slane %v3227, 4
      %v3801 = vor.u32 %v3799, %v3800
      %v3802 = vsel %vm3611, %v3719, %v3801
      %v3804 = vshrl.u32 %v3100, 16
      %v3806 = vrot.slane %v3804, 3
      %v3807 = vshll.u32 %v3100, 16
      %v3809 = vrot.slane %v3807, 4
      %v3810 = vor.u32 %v3806, %v3809
      %v3811 = vsel %vm3611, %v3736, %v3810
      %v3813 = vshrl.u32 %v3439, 16
      %v3815 = vrot.slane %v3813, 3
      %v3816 = vshll.u32 %v3439, 16
      %v3818 = vrot.slane %v3816, 4
      %v3819 = vor.u32 %v3815, %v3818
      %v3820 = vsel %vm3611, %v3753, %v3819
      %v3821 = vrot.slane %v3206, 3
      %v3822 = vrot.slane %v3209, 4
      %v3823 = vor.u32 %v3821, %v3822
      %v3824 = vsel %vm3611, %v3757, %v3823
      %v3826 = vshrl.u32 %v3082, 16
      %v3828 = vrot.slane %v3826, 3
      %v3829 = vshll.u32 %v3082, 16
      %v3831 = vrot.slane %v3829, 4
      %v3832 = vor.u32 %v3828, %v3831
      %v3833 = vsel %vm3611, %v3766, %v3832
      %v3835 = vshrl.u32 %v3165, 16
      %v3837 = vrot.slane %v3835, 3
      %v3838 = vshll.u32 %v3165, 16
      %v3840 = vrot.slane %v3838, 4
      %v3841 = vor.u32 %v3837, %v3840
      %v3842 = vsel %vm3611, %v3775, %v3841
      %v3843 = vrot.slane %v3084, 3
      %v3844 = vrot.slane %v3087, 4
      %v3845 = vor.u32 %v3843, %v3844
      %v3846 = vsel %vm3611, %v3779, %v3845
      %v3848 = vshrl.u32 %v3231, 16
      %v3850 = vrot.slane %v3848, 3
      %v3851 = vshll.u32 %v3231, 16
      %v3853 = vrot.slane %v3851, 4
      %v3854 = vor.u32 %v3850, %v3853
      %v3855 = vsel %vm3611, %v3788, %v3854
      %v3857 = vshrl.u32 %v3313, 16
      %v3859 = vrot.slane %v3857, 3
      %v3860 = vshll.u32 %v3313, 16
      %v3862 = vrot.slane %v3860, 4
      %v3863 = vor.u32 %v3859, %v3862
      %v3864 = vsel %vm3611, %v3797, %v3863
      %v3865 = vrot.slane %v3233, 3
      %v3866 = vrot.slane %v3236, 4
      %v3867 = vor.u32 %v3865, %v3866
      %v3868 = vsel %vm3611, %v3801, %v3867
      %v3870 = vshrl.u32 %v3109, 16
      %v3872 = vrot.slane %v3870, 3
      %v3873 = vshll.u32 %v3109, 16
      %v3875 = vrot.slane %v3873, 4
      %v3876 = vor.u32 %v3872, %v3875
      %v3877 = vsel %vm3611, %v3810, %v3876
      %v3879 = vshrl.u32 %v3441, 16
      %v3881 = vrot.slane %v3879, 3
      %v3882 = vshll.u32 %v3441, 16
      %v3884 = vrot.slane %v3882, 4
      %v3885 = vor.u32 %v3881, %v3884
      %v3886 = vsel %vm3611, %v3819, %v3885
      %v3887 = vsel %vm3611, %v3823, %v3719
      %v3888 = vsel %vm3611, %v3832, %v3736
      %v3890 = vshrl.u32 %v3167, 16
      %v3892 = vrot.slane %v3890, 3
      %v3893 = vshll.u32 %v3167, 16
      %v3895 = vrot.slane %v3893, 4
      %v3896 = vor.u32 %v3892, %v3895
      %v3897 = vsel %vm3611, %v3841, %v3896
      %v3898 = vrot.slane %v3093, 3
      %v3899 = vrot.slane %v3096, 4
      %v3900 = vor.u32 %v3898, %v3899
      %v3901 = vsel %vm3611, %v3845, %v3900
      %v3903 = vshrl.u32 %v3240, 16
      %v3905 = vrot.slane %v3903, 3
      %v3906 = vshll.u32 %v3240, 16
      %v3908 = vrot.slane %v3906, 4
      %v3909 = vor.u32 %v3905, %v3908
      %v3910 = vsel %vm3611, %v3854, %v3909
      %v3912 = vshrl.u32 %v3315, 16
      %v3914 = vrot.slane %v3912, 3
      %v3915 = vshll.u32 %v3315, 16
      %v3917 = vrot.slane %v3915, 4
      %v3918 = vor.u32 %v3914, %v3917
      %v3919 = vsel %vm3611, %v3863, %v3918
      %v3920 = vrot.slane %v3242, 3
      %v3921 = vrot.slane %v3245, 4
      %v3922 = vor.u32 %v3920, %v3921
      %v3923 = vsel %vm3611, %v3867, %v3922
      %v3925 = vshrl.u32 %v3118, 16
      %v3927 = vrot.slane %v3925, 3
      %v3928 = vshll.u32 %v3118, 16
      %v3930 = vrot.slane %v3928, 4
      %v3931 = vor.u32 %v3927, %v3930
      %v3932 = vsel %vm3611, %v3876, %v3931
      %v3934 = vshrl.u32 %v3443, 16
      %v3936 = vrot.slane %v3934, 3
      %v3937 = vshll.u32 %v3443, 16
      %v3939 = vrot.slane %v3937, 4
      %v3940 = vor.u32 %v3936, %v3939
      %v3941 = vsel %vm3611, %v3885, %v3940
      %v3943 = vshrl.u32 %v3169, 16
      %v3945 = vrot.slane %v3943, 3
      %v3946 = vshll.u32 %v3169, 16
      %v3948 = vrot.slane %v3946, 4
      %v3949 = vor.u32 %v3945, %v3948
      %v3950 = vsel %vm3611, %v3896, %v3949
      %v3951 = vrot.slane %v3102, 3
      %v3952 = vrot.slane %v3105, 4
      %v3953 = vor.u32 %v3951, %v3952
      %v3954 = vsel %vm3611, %v3900, %v3953
      %v3956 = vshrl.u32 %v3249, 16
      %v3958 = vrot.slane %v3956, 3
      %v3959 = vshll.u32 %v3249, 16
      %v3961 = vrot.slane %v3959, 4
      %v3962 = vor.u32 %v3958, %v3961
      %v3963 = vsel %vm3611, %v3909, %v3962
      %v3965 = vshrl.u32 %v3317, 16
      %v3967 = vrot.slane %v3965, 3
      %v3968 = vshll.u32 %v3317, 16
      %v3970 = vrot.slane %v3968, 4
      %v3971 = vor.u32 %v3967, %v3970
      %v3972 = vsel %vm3611, %v3918, %v3971
      %v3973 = vrot.slane %v3251, 3
      %v3974 = vrot.slane %v3254, 4
      %v3975 = vor.u32 %v3973, %v3974
      %v3976 = vsel %vm3611, %v3922, %v3975
      %v3978 = vshrl.u32 %v3127, 16
      %v3980 = vrot.slane %v3978, 3
      %v3981 = vshll.u32 %v3127, 16
      %v3983 = vrot.slane %v3981, 4
      %v3984 = vor.u32 %v3980, %v3983
      %v3985 = vsel %vm3611, %v3931, %v3984
      %v3987 = vshrl.u32 %v3445, 16
      %v3989 = vrot.slane %v3987, 3
      %v3990 = vshll.u32 %v3445, 16
      %v3992 = vrot.slane %v3990, 4
      %v3993 = vor.u32 %v3989, %v3992
      %v3994 = vsel %vm3611, %v3940, %v3993
      %v3996 = vshrl.u32 %v3171, 16
      %v3998 = vrot.slane %v3996, 3
      %v3999 = vshll.u32 %v3171, 16
      %v4001 = vrot.slane %v3999, 4
      %v4002 = vor.u32 %v3998, %v4001
      %v4003 = vsel %vm3611, %v3949, %v4002
      %v4004 = vrot.slane %v3111, 3
      %v4005 = vrot.slane %v3114, 4
      %v4006 = vor.u32 %v4004, %v4005
      %v4007 = vsel %vm3611, %v3953, %v4006
      %v4009 = vshrl.u32 %v3258, 16
      %v4011 = vrot.slane %v4009, 3
      %v4012 = vshll.u32 %v3258, 16
      %v4014 = vrot.slane %v4012, 4
      %v4015 = vor.u32 %v4011, %v4014
      %v4016 = vsel %vm3611, %v3962, %v4015
      %v4018 = vshrl.u32 %v3319, 16
      %v4020 = vrot.slane %v4018, 3
      %v4021 = vshll.u32 %v3319, 16
      %v4023 = vrot.slane %v4021, 4
      %v4024 = vor.u32 %v4020, %v4023
      %v4025 = vsel %vm3611, %v3971, %v4024
      %v4026 = vrot.slane %v3260, 3
      %v4027 = vrot.slane %v3263, 4
      %v4028 = vor.u32 %v4026, %v4027
      %v4029 = vsel %vm3611, %v3975, %v4028
      %v4031 = vshrl.u32 %v3136, 16
      %v4033 = vrot.slane %v4031, 3
      %v4034 = vshll.u32 %v3136, 16
      %v4036 = vrot.slane %v4034, 4
      %v4037 = vor.u32 %v4033, %v4036
      %v4038 = vsel %vm3611, %v3984, %v4037
      %v4040 = vshrl.u32 %v3447, 16
      %v4042 = vrot.slane %v4040, 3
      %v4043 = vshll.u32 %v3447, 16
      %v4045 = vrot.slane %v4043, 4
      %v4046 = vor.u32 %v4042, %v4045
      %v4047 = vsel %vm3611, %v3993, %v4046
      %v4049 = vshrl.u32 %v3173, 16
      %v4051 = vrot.slane %v4049, 3
      %v4052 = vshll.u32 %v3173, 16
      %v4054 = vrot.slane %v4052, 4
      %v4055 = vor.u32 %v4051, %v4054
      %v4056 = vsel %vm3611, %v4002, %v4055
      %v4057 = vrot.slane %v3120, 3
      %v4058 = vrot.slane %v3123, 4
      %v4059 = vor.u32 %v4057, %v4058
      %v4060 = vsel %vm3611, %v4006, %v4059
      %v4062 = vshrl.u32 %v3267, 16
      %v4064 = vrot.slane %v4062, 3
      %v4065 = vshll.u32 %v3267, 16
      %v4067 = vrot.slane %v4065, 4
      %v4068 = vor.u32 %v4064, %v4067
      %v4069 = vsel %vm3611, %v4015, %v4068
      %v4071 = vshrl.u32 %v3321, 16
      %v4073 = vrot.slane %v4071, 3
      %v4074 = vshll.u32 %v3321, 16
      %v4076 = vrot.slane %v4074, 4
      %v4077 = vor.u32 %v4073, %v4076
      %v4078 = vsel %vm3611, %v4024, %v4077
      %v4079 = vrot.slane %v3269, 3
      %v4080 = vrot.slane %v3272, 4
      %v4081 = vor.u32 %v4079, %v4080
      %v4082 = vsel %vm3611, %v4028, %v4081
      %v4084 = vshrl.u32 %v3145, 16
      %v4086 = vrot.slane %v4084, 3
      %v4087 = vshll.u32 %v3145, 16
      %v4089 = vrot.slane %v4087, 4
      %v4090 = vor.u32 %v4086, %v4089
      %v4091 = vsel %vm3611, %v4037, %v4090
      %v4093 = vshrl.u32 %v3449, 16
      %v4095 = vrot.slane %v4093, 3
      %v4096 = vshll.u32 %v3449, 16
      %v4098 = vrot.slane %v4096, 4
      %v4099 = vor.u32 %v4095, %v4098
      %v4100 = vsel %vm3611, %v4046, %v4099
      %v4102 = vshrl.u32 %v3175, 16
      %v4104 = vrot.slane %v4102, 3
      %v4105 = vshll.u32 %v3175, 16
      %v4107 = vrot.slane %v4105, 4
      %v4108 = vor.u32 %v4104, %v4107
      %v4109 = vsel %vm3611, %v4055, %v4108
      %v4110 = vrot.slane %v3129, 3
      %v4111 = vrot.slane %v3132, 4
      %v4112 = vor.u32 %v4110, %v4111
      %v4113 = vsel %vm3611, %v4059, %v4112
      %v4115 = vshrl.u32 %v3276, 16
      %v4117 = vrot.slane %v4115, 3
      %v4118 = vshll.u32 %v3276, 16
      %v4120 = vrot.slane %v4118, 4
      %v4121 = vor.u32 %v4117, %v4120
      %v4122 = vsel %vm3611, %v4068, %v4121
      %v4124 = vshrl.u32 %v3323, 16
      %v4126 = vrot.slane %v4124, 3
      %v4127 = vshll.u32 %v3323, 16
      %v4129 = vrot.slane %v4127, 4
      %v4130 = vor.u32 %v4126, %v4129
      %v4131 = vsel %vm3611, %v4077, %v4130
      %v4132 = vrot.slane %v3278, 3
      %v4133 = vrot.slane %v3281, 4
      %v4134 = vor.u32 %v4132, %v4133
      %v4135 = vsel %vm3611, %v4081, %v4134
      %v4137 = vshrl.u32 %v3154, 16
      %v4139 = vrot.slane %v4137, 3
      %v4140 = vshll.u32 %v3154, 16
      %v4142 = vrot.slane %v4140, 4
      %v4143 = vor.u32 %v4139, %v4142
      %v4144 = vsel %vm3611, %v4090, %v4143
      %v4146 = vshrl.u32 %v3451, 16
      %v4148 = vrot.slane %v4146, 3
      %v4149 = vshll.u32 %v3451, 16
      %v4151 = vrot.slane %v4149, 4
      %v4152 = vor.u32 %v4148, %v4151
      %v4153 = vsel %vm3611, %v4099, %v4152
      %v4155 = vshrl.u32 %v3177, 16
      %v4157 = vrot.slane %v4155, 3
      %v4158 = vshll.u32 %v3177, 16
      %v4160 = vrot.slane %v4158, 4
      %v4161 = vor.u32 %v4157, %v4160
      %v4162 = vsel %vm3611, %v4108, %v4161
      %v4163 = vrot.slane %v3138, 3
      %v4164 = vrot.slane %v3141, 4
      %v4165 = vor.u32 %v4163, %v4164
      %v4166 = vsel %vm3611, %v4112, %v4165
      %v4168 = vshrl.u32 %v3285, 16
      %v4170 = vrot.slane %v4168, 3
      %v4171 = vshll.u32 %v3285, 16
      %v4173 = vrot.slane %v4171, 4
      %v4174 = vor.u32 %v4170, %v4173
      %v4175 = vsel %vm3611, %v4121, %v4174
      %v4177 = vshrl.u32 %v3325, 16
      %v4179 = vrot.slane %v4177, 3
      %v4180 = vshll.u32 %v3325, 16
      %v4182 = vrot.slane %v4180, 4
      %v4183 = vor.u32 %v4179, %v4182
      %v4184 = vsel %vm3611, %v4130, %v4183
      %v4185 = vrot.slane %v3287, 3
      %v4186 = vrot.slane %v3290, 4
      %v4187 = vor.u32 %v4185, %v4186
      %v4188 = vsel %vm3611, %v4134, %v4187
      %v4190 = vshrl.u32 %v3353, 16
      %v4192 = vrot.slane %v4190, 3
      %v4193 = vshll.u32 %v3353, 16
      %v4195 = vrot.slane %v4193, 4
      %v4196 = vor.u32 %v4192, %v4195
      %v4197 = vsel %vm3611, %v4143, %v4196
      %v4199 = vshrl.u32 %v3453, 16
      %v4201 = vrot.slane %v4199, 3
      %v4202 = vshll.u32 %v3453, 16
      %v4204 = vrot.slane %v4202, 4
      %v4205 = vor.u32 %v4201, %v4204
      %v4206 = vsel %vm3611, %v4152, %v4205
      %v4208 = vshrl.u32 %v3179, 16
      %v4210 = vrot.slane %v4208, 3
      %v4211 = vshll.u32 %v3179, 16
      %v4213 = vrot.slane %v4211, 4
      %v4214 = vor.u32 %v4210, %v4213
      %v4215 = vsel %vm3611, %v4161, %v4214
      %v4216 = vrot.slane %v3147, 3
      %v4217 = vrot.slane %v3150, 4
      %v4218 = vor.u32 %v4216, %v4217
      %v4219 = vsel %vm3611, %v4165, %v4218
      %v4221 = vshrl.u32 %v3294, 16
      %v4223 = vrot.slane %v4221, 3
      %v4224 = vshll.u32 %v3294, 16
      %v4226 = vrot.slane %v4224, 4
      %v4227 = vor.u32 %v4223, %v4226
      %v4228 = vsel %vm3611, %v4174, %v4227
      %v4230 = vshrl.u32 %v3327, 16
      %v4232 = vrot.slane %v4230, 3
      %v4233 = vshll.u32 %v3327, 16
      %v4235 = vrot.slane %v4233, 4
      %v4236 = vor.u32 %v4232, %v4235
      %v4237 = vsel %vm3611, %v4183, %v4236
      %v4238 = vrot.slane %v3296, 3
      %v4239 = vrot.slane %v3299, 4
      %v4240 = vor.u32 %v4238, %v4239
      %v4241 = vsel %vm3611, %v4187, %v4240
      %v4243 = vshrl.u32 %v3362, 16
      %v4245 = vrot.slane %v4243, 3
      %v4246 = vshll.u32 %v3362, 16
      %v4248 = vrot.slane %v4246, 4
      %v4249 = vor.u32 %v4245, %v4248
      %v4250 = vsel %vm3611, %v4196, %v4249
      %v4252 = vshrl.u32 %v3455, 16
      %v4254 = vrot.slane %v4252, 3
      %v4255 = vshll.u32 %v3455, 16
      %v4257 = vrot.slane %v4255, 4
      %v4258 = vor.u32 %v4254, %v4257
      %v4259 = vsel %vm3611, %v4205, %v4258
      %v4261 = vshrl.u32 %v3181, 16
      %v4263 = vrot.slane %v4261, 3
      %v4264 = vshll.u32 %v3181, 16
      %v4266 = vrot.slane %v4264, 4
      %v4267 = vor.u32 %v4263, %v4266
      %v4268 = vsel %vm3611, %v4214, %v4267
      %v4269 = vrot.slane %v3346, 3
      %v4270 = vrot.slane %v3349, 4
      %v4271 = vor.u32 %v4269, %v4270
      %v4272 = vsel %vm3611, %v4218, %v4271
      %v4274 = vshrl.u32 %v3303, 16
      %v4276 = vrot.slane %v4274, 3
      %v4277 = vshll.u32 %v3303, 16
      %v4279 = vrot.slane %v4277, 4
      %v4280 = vor.u32 %v4276, %v4279
      %v4281 = vsel %vm3611, %v4227, %v4280
      %v4283 = vshrl.u32 %v3329, 16
      %v4285 = vrot.slane %v4283, 3
      %v4286 = vshll.u32 %v3329, 16
      %v4288 = vrot.slane %v4286, 4
      %v4289 = vor.u32 %v4285, %v4288
      %v4290 = vsel %vm3611, %v4236, %v4289
      %v4292 = vshrl.u32 %v3341, 16
      %v4294 = vrot.slane %v4292, 3
      %v4295 = vshll.u32 %v3341, 16
      %v4297 = vrot.slane %v4295, 4
      %v4298 = vor.u32 %v4294, %v4297
      %v4299 = vsel %vm3611, %v4240, %v4298
      %v4301 = vshrl.u32 %v3371, 16
      %v4303 = vrot.slane %v4301, 3
      %v4304 = vshll.u32 %v3371, 16
      %v4306 = vrot.slane %v4304, 4
      %v4307 = vor.u32 %v4303, %v4306
      %v4308 = vsel %vm3611, %v4249, %v4307
      %v4310 = vshrl.u32 %v3457, 16
      %v4312 = vrot.slane %v4310, 3
      %v4313 = vshll.u32 %v3457, 16
      %v4315 = vrot.slane %v4313, 4
      %v4316 = vor.u32 %v4312, %v4315
      %v4317 = vsel %vm3611, %v4258, %v4316
      %v4319 = vshrl.u32 %v3034, 16
      %v4321 = vrot.slane %v4319, 3
      %v4322 = vshll.u32 %v3034, 16
      %v4324 = vrot.slane %v4322, 4
      %v4325 = vor.u32 %v4321, %v4324
      %v4326 = vsel %vm3611, %v4134, %v4325
      %v4328 = vshrl.u32 %v3153, 16
      %v4330 = vrot.slane %v4328, 3
      %v4331 = vshll.u32 %v3153, 16
      %v4333 = vrot.slane %v4331, 4
      %v4334 = vor.u32 %v4330, %v4333
      %v4335 = vsel %vm3611, %v4143, %v4334
      %v4337 = vshrl.u32 %v3183, 16
      %v4339 = vrot.slane %v4337, 3
      %v4340 = vshll.u32 %v3183, 16
      %v4342 = vrot.slane %v4340, 4
      %v4343 = vor.u32 %v4339, %v4342
      %v4344 = vsel %vm3611, %v4267, %v4343
      %v4346 = vshrl.u32 %v3194, 16
      %v4348 = vrot.slane %v4346, 3
      %v4349 = vshll.u32 %v3194, 16
      %v4351 = vrot.slane %v4349, 4
      %v4352 = vor.u32 %v4348, %v4351
      %v4353 = vsel %vm3611, %v4271, %v4352
      %v4355 = vshrl.u32 %v3302, 16
      %v4357 = vrot.slane %v4355, 3
      %v4358 = vshll.u32 %v3302, 16
      %v4360 = vrot.slane %v4358, 4
      %v4361 = vor.u32 %v4357, %v4360
      %v4362 = vsel %vm3611, %v4280, %v4361
      %v4364 = vshrl.u32 %v3331, 16
      %v4366 = vrot.slane %v4364, 3
      %v4367 = vshll.u32 %v3331, 16
      %v4369 = vrot.slane %v4367, 4
      %v4370 = vor.u32 %v4366, %v4369
      %v4371 = vsel %vm3611, %v4289, %v4370
      %v4373 = vshrl.u32 %v3342, 16
      %v4375 = vrot.slane %v4373, 3
      %v4376 = vshll.u32 %v3342, 16
      %v4378 = vrot.slane %v4376, 4
      %v4379 = vor.u32 %v4375, %v4378
      %v4380 = vsel %vm3611, %v4298, %v4379
      %v4382 = vshrl.u32 %v3370, 16
      %v4384 = vrot.slane %v4382, 3
      %v4385 = vshll.u32 %v3370, 16
      %v4387 = vrot.slane %v4385, 4
      %v4388 = vor.u32 %v4384, %v4387
      %v4389 = vsel %vm3611, %v4307, %v4388
      %v4391 = vshrl.u32 %v3459, 16
      %v4393 = vrot.slane %v4391, 3
      %v4394 = vshll.u32 %v3459, 16
      %v4396 = vrot.slane %v4394, 4
      %v4397 = vor.u32 %v4393, %v4396
      %v4398 = vsel %vm3611, %v4316, %v4397
      %v4637 = vunpack.c.l.b16 %v3460
      %v4638 = vunpack.c.l.b16 %v3461
      %v4639 = vunpack.c.l.b16 %v3462
      %v4640 = vunpack.c.l.b16 %v3463
      %v4641 = vunpack.c.l.b16 %v3464
      %v4642 = vunpack.c.l.b16 %v3465
      %v4643 = vunpack.c.l.b16 %v3466
      %v4644 = vunpack.c.l.b16 %v3467
      %v4645 = vunpack.c.l.b16 %v3468
      %v4646 = vunpack.c.l.b16 %v3469
      %v4647 = vunpack.c.l.b16 %v3470
      %v4648 = vunpack.c.l.b16 %v3471
      %v4649 = vunpack.c.l.b16 %v3472
      %v4650 = vunpack.c.l.b16 %v3473
      %v4651 = vunpack.c.l.b16 %v3474
      %v4652 = vunpack.c.l.b16 %v3475
      %v4653 = vunpack.c.l.b16 %v3476
      %v4654 = vunpack.c.l.b16 %v3477
      %v4655 = vunpack.c.l.b16 %v3478
      %v4656 = vunpack.c.l.b16 %v3479
      %v4657 = vunpack.c.l.b16 %v3480
      %v4658 = vunpack.c.l.b16 %v3481
      %v4659 = vunpack.c.l.b16 %v3482
      %v4660 = vunpack.c.l.b16 %v3483
      %v4661 = vunpack.c.l.b16 %v3484
      %v4662 = vunpack.c.l.b16 %v3485
      %v4663 = vunpack.c.l.b16 %v3486
      %v4664 = vunpack.c.l.b16 %v3487
      %v4665 = vunpack.c.l.b16 %v3488
      %v4666 = vunpack.c.l.b16 %v3489
      %v4667 = vunpack.c.l.b16 %v3490
      %v4668 = vunpack.c.l.b16 %v3491
      %v4669 = vunpack.c.l.b16 %v3492
      %v4670 = vunpack.c.l.b16 %v3493
      %v4671 = vunpack.c.l.b16 %v3494
      %v4672 = vunpack.c.l.b16 %v3495
      %v4673 = vunpack.c.l.b16 %v3496
      %v4674 = vunpack.c.l.b16 %v3497
      %v4675 = vunpack.c.l.b16 %v3498
      %v4676 = vunpack.c.l.b16 %v3499
      %v4677 = vunpack.c.l.b16 %v3500
      %v4678 = vunpack.c.l.b16 %v3501
      %v4679 = vunpack.c.l.b16 %v3502
      %v4680 = vunpack.c.l.b16 %v3503
      %v4681 = vunpack.c.l.b16 %v3504
      %v4682 = vunpack.c.l.b16 %v3505
      %v4683 = vunpack.c.l.b16 %v3506
      %v4684 = vunpack.c.l.b16 %v3507
      %v4685 = vunpack.c.l.b16 %v3508
      %v4686 = vunpack.c.l.b16 %v3509
      %v4687 = vunpack.c.l.b16 %v3510
      %v4688 = vunpack.c.l.b16 %v3511
      %v4689 = vunpack.c.l.b16 %v3512
      %v4690 = vunpack.c.l.b16 %v3513
      %v4691 = vunpack.c.l.b16 %v3514
      %v4692 = vunpack.c.l.b16 %v3515
      %v4693 = vunpack.c.l.b16 %v3516
      %v4694 = vunpack.c.l.b16 %v3517
      %v4695 = vunpack.c.l.b16 %v3518
      %v4696 = vunpack.c.l.b16 %v3519
      %v4697 = vunpack.c.l.b16 %v3520
      %v4698 = vunpack.c.l.b16 %v3521
      %v4699 = vunpack.c.l.b16 %v3522
      %v4700 = vunpack.c.l.b16 %v3523
      %v4701 = vunpack.c.l.b16 %v3524
      %v4702 = vunpack.c.l.b16 %v3525
      %v4703 = vunpack.c.l.b16 %v3526
      %v4704 = vunpack.c.l.b16 %v3527
      %v4705 = vunpack.c.l.b16 %v3528
      %v4706 = vunpack.c.l.b16 %v3529
      %v4707 = vunpack.c.l.b16 %v3530
      %v4708 = vunpack.c.l.b16 %v3531
      %v4709 = vunpack.c.l.b16 %v3532
      %v4710 = vunpack.c.l.b16 %v3533
      %v4711 = vunpack.c.l.b16 %v3534
      %v4712 = vunpack.c.l.b16 %v3535
      %v4713 = vunpack.c.l.b16 %v3536
      %v4714 = vunpack.c.l.b16 %v3537
      %v4715 = vunpack.c.l.b16 %v3538
      %v4716 = vunpack.c.l.b16 %v3539
      %v4717 = vunpack.c.l.b16 %v3540
      %v4718 = vunpack.c.l.b16 %v3541
      %v4719 = vunpack.c.l.b16 %v3542
      %v4720 = vunpack.c.l.b16 %v3543
      %v4721 = vunpack.c.l.b16 %v3544
      %v4722 = vunpack.c.l.b16 %v3545
      %v4723 = vunpack.c.l.b16 %v3546
      %v4724 = vunpack.c.l.b16 %v3547
      %v4725 = vunpack.c.l.b16 %v3548
      %v4726 = vunpack.c.l.b16 %v3549
      %v4727 = vunpack.c.l.b16 %v3550
      %v4728 = vunpack.c.l.b16 %v3551
      %v4729 = vunpack.c.l.b16 %v3552
      %v4730 = vunpack.c.l.b16 %v3553
      %v4731 = vunpack.c.l.b16 %v3554
      %v4732 = vunpack.c.l.b16 %v3555
      %v4733 = vunpack.c.l.b16 %v3556
      %v4734 = vunpack.c.l.b16 %v3557
      %v4735 = vunpack.c.l.b16 %v3558
      %v4736 = vunpack.c.l.b16 %v3559
      %v4737 = vunpack.c.l.b16 %v3560
      %v4738 = vunpack.c.l.b16 %v3561
      %v4739 = vunpack.c.l.b16 %v3562
      %v4740 = vunpack.c.l.b16 %v3563
      %v4741 = vunpack.c.l.b16 %v3564
      %v4742 = vunpack.c.l.b16 %v3565
      %v4743 = vunpack.c.l.b16 %v3566
      %v4744 = vunpack.c.l.b16 %v3567
      %v4745 = vunpack.c.l.b16 %v3568
      %v4746 = vunpack.c.l.b16 %v3569
      %v4747 = vunpack.c.l.b16 %v3570
      %v4748 = vunpack.c.l.b16 %v3571
      %v4749 = vunpack.c.l.b16 %v3572
      %v4750 = vunpack.c.l.b16 %v3573
      %v4751 = vunpack.c.l.b16 %v3574
      %v4752 = vunpack.c.l.b16 %v3575
      %v4753 = vunpack.c.l.b16 %v3576
      %v4754 = vunpack.c.l.b16 %v3577
      %v4755 = vunpack.c.l.b16 %v3578
      %v4756 = vunpack.c.l.b16 %v3579
      %v4757 = vunpack.c.l.b16 %v3580
      %v4758 = vunpack.c.l.b16 %v3581
      %v4759 = vunpack.c.l.b16 %v3582
      %v4760 = vunpack.c.l.b16 %v3583
      %v4761 = vunpack.c.l.b16 %v3584
      %v4762 = vunpack.c.l.b16 %v3585
      %v4763 = vunpack.c.l.b16 %v3586
      %v4764 = vunpack.c.l.b16 %v3587
      %v4765 = vunpack.c.l.b16 %v3588
      %v4766 = vunpack.c.l.b16 %v3589
      %v4767 = vunpack.c.l.b16 %v3590
      %v4768 = vunpack.c.l.b16 %v3591
      %v4769 = vunpack.c.l.b16 %v3592
      %v4770 = vunpack.c.l.b16 %v3593
      %v4771 = vunpack.c.l.b16 %v3594
      %v4772 = vunpack.c.l.b16 %v3595
      %v4773 = vunpack.c.l.b16 %v3596
      %v4774 = vunpack.c.l.b16 %v3597
      %v4775 = vunpack.c.l.b16 %v3598
      %v4776 = vunpack.c.l.b16 %v3599
      %v4777 = vunpack.c.l.b16 %v3600
      %v4778 = vunpack.c.l.b16 %v3601
      %v4779 = vunpack.c.l.b16 %v3602
      %v4780 = vunpack.c.l.b16 %v3603
      %v4781 = vpack.c.b16 %v4638, %v4637
      %v4782 = vpack.c.b16 %v4640, %v4639
      %v4783 = vpack.c.b16 %v4642, %v4641
      %v4784 = vpack.c.b16 %v4644, %v4643
      %v4785 = vpack.c.b16 %v4646, %v4645
      %v4786 = vpack.c.b16 %v4648, %v4647
      %v4787 = vpack.c.b16 %v4650, %v4649
      %v4788 = vpack.c.b16 %v4652, %v4651
      %v4789 = vpack.c.b16 %v4654, %v4653
      %v4790 = vpack.c.b16 %v4656, %v4655
      %v4791 = vpack.c.b16 %v4658, %v4657
      %v4792 = vpack.c.b16 %v4660, %v4659
      %v4793 = vpack.c.b16 %v4662, %v4661
      %v4794 = vpack.c.b16 %v4664, %v4663
      %v4795 = vpack.c.b16 %v4666, %v4665
      %v4796 = vpack.c.b16 %v4668, %v4667
      %v4797 = vpack.c.b16 %v4670, %v4669
      %v4798 = vpack.c.b16 %v4672, %v4671
      %v4799 = vpack.c.b16 %v4674, %v4673
      %v4800 = vpack.c.b16 %v4676, %v4675
      %v4801 = vpack.c.b16 %v4678, %v4677
      %v4802 = vpack.c.b16 %v4680, %v4679
      %v4803 = vpack.c.b16 %v4682, %v4681
      %v4804 = vpack.c.b16 %v4684, %v4683
      %v4805 = vpack.c.b16 %v4686, %v4685
      %v4806 = vpack.c.b16 %v4688, %v4687
      %v4807 = vpack.c.b16 %v4690, %v4689
      %v4808 = vpack.c.b16 %v4692, %v4691
      %v4809 = vpack.c.b16 %v4694, %v4693
      %v4810 = vpack.c.b16 %v4696, %v4695
      %v4811 = vpack.c.b16 %v4698, %v4697
      %v4812 = vpack.c.b16 %v4700, %v4699
      %v4813 = vpack.c.b16 %v4702, %v4701
      %v4814 = vpack.c.b16 %v4704, %v4703
      %v4815 = vpack.c.b16 %v4706, %v4705
      %v4816 = vpack.c.b16 %v4708, %v4707
      %v4817 = vpack.c.b16 %v4710, %v4709
      %v4818 = vpack.c.b16 %v4712, %v4711
      %v4819 = vpack.c.b16 %v4714, %v4713
      %v4820 = vpack.c.b16 %v4716, %v4715
      %v4821 = vpack.c.b16 %v4718, %v4717
      %v4822 = vpack.c.b16 %v4720, %v4719
      %v4823 = vpack.c.b16 %v4722, %v4721
      %v4824 = vpack.c.b16 %v4724, %v4723
      %v4825 = vpack.c.b16 %v4726, %v4725
      %v4826 = vpack.c.b16 %v4728, %v4727
      %v4827 = vpack.c.b16 %v4730, %v4729
      %v4828 = vpack.c.b16 %v4732, %v4731
      %v4829 = vpack.c.b16 %v4734, %v4733
      %v4830 = vpack.c.b16 %v4736, %v4735
      %v4831 = vpack.c.b16 %v4738, %v4737
      %v4832 = vpack.c.b16 %v4740, %v4739
      %v4833 = vpack.c.b16 %v4742, %v4741
      %v4834 = vpack.c.b16 %v4744, %v4743
      %v4835 = vpack.c.b16 %v4746, %v4745
      %v4836 = vpack.c.b16 %v4748, %v4747
      %v4837 = vpack.c.b16 %v4750, %v4749
      %v4838 = vpack.c.b16 %v4752, %v4751
      %v4839 = vpack.c.b16 %v4754, %v4753
      %v4840 = vpack.c.b16 %v4756, %v4755
      %v4841 = vpack.c.b16 %v4758, %v4757
      %v4842 = vpack.c.b16 %v4760, %v4759
      %v4843 = vpack.c.b16 %v4762, %v4761
      %v4844 = vpack.c.b16 %v4764, %v4763
      %v4845 = vpack.c.b16 %v4766, %v4765
      %v4846 = vpack.c.b16 %v4768, %v4767
      %v4847 = vpack.c.b16 %v4770, %v4769
      %v4848 = vpack.c.b16 %v4772, %v4771
      %v4849 = vpack.c.b16 %v4774, %v4773
      %v4850 = vpack.c.b16 %v4776, %v4775
      %v4851 = vpack.c.b16 %v4778, %v4777
      %v4852 = vpack.c.b16 %v4780, %v4779
      %4925 = vmatprep.subr.bf16.mxu0 0
      %4926 = vmatpush1.bf16.msra.mxu0 %v4781
      %4927 = vmatprep.subr.bf16.mxu0 0
      %4928 = vmatpush1.bf16.msra.mxu0 %v4782
      %4929 = vmatprep.subr.bf16.mxu0 0
      %4930 = vmatpush1.bf16.msra.mxu0 %v4783
      %4931 = vmatprep.subr.bf16.mxu0 0
      %4932 = vmatpush1.bf16.msra.mxu0 %v4784
      %4933 = vmatprep.subr.bf16.mxu0 0
      %4934 = vmatpush1.bf16.msra.mxu0 %v4785
      %4935 = vmatprep.subr.bf16.mxu0 0
      %4936 = vmatpush1.bf16.msra.mxu0 %v4786
      %4937 = vmatprep.subr.bf16.mxu0 0
      %4938 = vmatpush1.bf16.msra.mxu0 %v4787
      %4939 = vmatprep.subr.bf16.mxu0 0
      %4940 = vmatpush1.bf16.msra.mxu0 %v4788
      %4941 = vmatprep.subr.bf16.mxu0 0
      %4942 = vmatpush1.bf16.msra.mxu0 %v4789
      %4943 = vmatprep.subr.bf16.mxu0 0
      %4944 = vmatpush1.bf16.msra.mxu0 %v4790
      %4945 = vmatprep.subr.bf16.mxu0 0
      %4946 = vmatpush1.bf16.msra.mxu0 %v4791
      %4947 = vmatprep.subr.bf16.mxu0 0
      %4948 = vmatpush1.bf16.msra.mxu0 %v4792
      %4949 = vmatprep.subr.bf16.mxu0 0
      %4950 = vmatpush1.bf16.msra.mxu0 %v4793
      %4951 = vmatprep.subr.bf16.mxu0 0
      %4952 = vmatpush1.bf16.msra.mxu0 %v4794
      %4953 = vmatprep.subr.bf16.mxu0 0
      %4954 = vmatpush1.bf16.msra.mxu0 %v4795
      %4955 = vmatprep.subr.bf16.mxu0 0
      %4956 = vmatpush1.bf16.msra.mxu0 %v4796
      %4957 = vmatprep.mubr.bf16.mxu0 %v3645
      %4958 = vmatmul.mubr.bf16.gmra.mrb[0].mxu0 %v3628
      %v4959 = vpop.f32.mrb[0].mxu0
      %v4960 = vadd.f32 %v3609, %v4959
      %v4961 = vpop.f32.mrb[0].mxu0
      %v4962 = vpop.f32.mrb[0].mxu0
      %v4963 = vadd.f32 %v3609, %v4962
      %v4964 = vpop.f32.mrb[0].mxu0
      %4965 = vmatprep.mubr.bf16.mxu0 %v3767
      %4966 = vmatmul.mubr.bf16.gmra.mrb[0].mxu0 %v3758
      %v4967 = vpop.f32.mrb[0].mxu0
      %v4968 = vadd.f32 %v3609, %v4967
      %v4969 = vpop.f32.mrb[0].mxu0
      %v4970 = vpop.f32.mrb[0].mxu0
      %v4971 = vadd.f32 %v3609, %v4970
      %v4972 = vpop.f32.mrb[0].mxu0
      %4973 = vmatprep.mubr.bf16.mxu0 %v3833
      %4974 = vmatmul.mubr.bf16.gmra.mrb[0].mxu0 %v3824
      %v4975 = vpop.f32.mrb[0].mxu0
      %v4976 = vadd.f32 %v3609, %v4975
      %v4977 = vpop.f32.mrb[0].mxu0
      %v4978 = vpop.f32.mrb[0].mxu0
      %v4979 = vadd.f32 %v3609, %v4978
      %v4980 = vpop.f32.mrb[0].mxu0
      %4981 = vmatprep.mubr.bf16.mxu0 %v3888
      %4982 = vmatmul.mubr.bf16.gmra.mrb[0].mxu0 %v3887
      %v4983 = vpop.f32.mrb[0].mxu0
      %v4984 = vadd.f32 %v3609, %v4983
      %v4985 = vpop.f32.mrb[0].mxu0
      %v4986 = vpop.f32.mrb[0].mxu0
      %v4987 = vadd.f32 %v3609, %v4986
      %v4988 = vpop.f32.mrb[0].mxu0
      %4989 = vmatprep.mubr.bf16.mxu0 %v3811
      %4990 = vmatmul.mubr.bf16.gmra.mrb[0].mxu0 %v3802
      %v4991 = vpop.f32.mrb[0].mxu0
      %v4992 = vadd.f32 %v3609, %v4991
      %v4993 = vpop.f32.mrb[0].mxu0
      %v4994 = vpop.f32.mrb[0].mxu0
      %v4995 = vadd.f32 %v3609, %v4994
      %v4996 = vpop.f32.mrb[0].mxu0
      %4997 = vmatprep.mubr.bf16.mxu0 %v3877
      %4998 = vmatmul.mubr.bf16.gmra.mrb[0].mxu0 %v3868
      %v4999 = vpop.f32.mrb[0].mxu0
      %v5000 = vadd.f32 %v3609, %v4999
      %v5001 = vpop.f32.mrb[0].mxu0
      %v5002 = vpop.f32.mrb[0].mxu0
      %v5003 = vadd.f32 %v3609, %v5002
      %v5004 = vpop.f32.mrb[0].mxu0
      %5005 = vmatprep.mubr.bf16.mxu0 %v3932
      %5006 = vmatmul.mubr.bf16.gmra.mrb[0].mxu0 %v3923
      %v5007 = vpop.f32.mrb[0].mxu0
      %v5008 = vadd.f32 %v3609, %v5007
      %v5009 = vpop.f32.mrb[0].mxu0
      %v5010 = vpop.f32.mrb[0].mxu0
      %v5011 = vadd.f32 %v3609, %v5010
      %v5012 = vpop.f32.mrb[0].mxu0
      %5013 = vmatprep.mubr.bf16.mxu0 %v3985
      %5014 = vmatmul.mubr.bf16.gmra.mrb[0].mxu0 %v3976
      %v5015 = vpop.f32.mrb[0].mxu0
      %v5016 = vadd.f32 %v3609, %v5015
      %v5017 = vpop.f32.mrb[0].mxu0
      %v5018 = vpop.f32.mrb[0].mxu0
      %v5019 = vadd.f32 %v3609, %v5018
      %v5020 = vpop.f32.mrb[0].mxu0
      %5021 = vmatprep.mubr.bf16.mxu0 %v4038
      %5022 = vmatmul.mubr.bf16.gmra.mrb[0].mxu0 %v4029
      %v5023 = vpop.f32.mrb[0].mxu0
      %v5024 = vadd.f32 %v3609, %v5023
      %v5025 = vpop.f32.mrb[0].mxu0
      %v5026 = vpop.f32.mrb[0].mxu0
      %v5027 = vadd.f32 %v3609, %v5026
      %v5028 = vpop.f32.mrb[0].mxu0
      %5029 = vmatprep.mubr.bf16.mxu0 %v4091
      %5030 = vmatmul.mubr.bf16.gmra.mrb[0].mxu0 %v4082
      %v5031 = vpop.f32.mrb[0].mxu0
      %v5032 = vadd.f32 %v3609, %v5031
      %v5033 = vpop.f32.mrb[0].mxu0
      %v5034 = vpop.f32.mrb[0].mxu0
      %v5035 = vadd.f32 %v3609, %v5034
      %v5036 = vpop.f32.mrb[0].mxu0
      %5037 = vmatprep.mubr.bf16.mxu0 %v4144
      %5038 = vmatmul.mubr.bf16.gmra.mrb[0].mxu0 %v4135
      %v5039 = vpop.f32.mrb[0].mxu0
      %v5040 = vadd.f32 %v3609, %v5039
      %v5041 = vpop.f32.mrb[0].mxu0
      %v5042 = vpop.f32.mrb[0].mxu0
      %v5043 = vadd.f32 %v3609, %v5042
      %v5044 = vpop.f32.mrb[0].mxu0
      %5045 = vmatprep.mubr.bf16.mxu0 %v4335
      %5046 = vmatmul.mubr.bf16.gmra.mrb[0].mxu0 %v4326
      %v5047 = vpop.f32.mrb[0].mxu0
      %v5048 = vadd.f32 %v3609, %v5047
      %v5049 = vpop.f32.mrb[0].mxu0
      %v5050 = vpop.f32.mrb[0].mxu0
      %v5051 = vadd.f32 %v3609, %v5050
      %v5052 = vpop.f32.mrb[0].mxu0
      %5053 = vdwg.mxu0
      %5054 = vmatprep.subr.bf16.mxu0 0
      %5055 = vmatpush1.bf16.msra.mxu0 %v4797
      %5056 = vmatprep.subr.bf16.mxu0 0
      %5057 = vmatpush1.bf16.msra.mxu0 %v4798
      %5058 = vmatprep.subr.bf16.mxu0 0
      %5059 = vmatpush1.bf16.msra.mxu0 %v4799
      %5060 = vmatprep.subr.bf16.mxu0 0
      %5061 = vmatpush1.bf16.msra.mxu0 %v4800
      %5062 = vmatprep.subr.bf16.mxu0 0
      %5063 = vmatpush1.bf16.msra.mxu0 %v4801
      %5064 = vmatprep.subr.bf16.mxu0 0
      %5065 = vmatpush1.bf16.msra.mxu0 %v4802
      %5066 = vmatprep.subr.bf16.mxu0 0
      %5067 = vmatpush1.bf16.msra.mxu0 %v4803
      %5068 = vmatprep.subr.bf16.mxu0 0
      %5069 = vmatpush1.bf16.msra.mxu0 %v4804
      %5070 = vmatprep.subr.bf16.mxu0 0
      %5071 = vmatpush1.bf16.msra.mxu0 %v4805
      %5072 = vmatprep.subr.bf16.mxu0 0
      %5073 = vmatpush1.bf16.msra.mxu0 %v4806
      %5074 = vmatprep.subr.bf16.mxu0 0
      %5075 = vmatpush1.bf16.msra.mxu0 %v4807
      %5076 = vmatprep.subr.bf16.mxu0 0
      %5077 = vmatpush1.bf16.msra.mxu0 %v4808
      %5078 = vmatprep.subr.bf16.mxu0 0
      %5079 = vmatpush1.bf16.msra.mxu0 %v4809
      %5080 = vmatprep.subr.bf16.mxu0 0
      %5081 = vmatpush1.bf16.msra.mxu0 %v4810
      %5082 = vmatprep.subr.bf16.mxu0 0
      %5083 = vmatpush1.bf16.msra.mxu0 %v4811
      %5084 = vmatprep.subr.bf16.mxu0 0
      %5085 = vmatpush1.bf16.msra.mxu0 %v4812
      %5086 = vmatprep.mubr.bf16.mxu0 %v3674
      %5087 = vmatmul.mubr.bf16.gmra.mrb[0].mxu0 %v3662
      %v5088 = vpop.f32.mrb[0].mxu0
      %v5089 = vadd.f32 %v4960, %v5088
      %v5090 = vpop.f32.mrb[0].mxu0
      %v5091 = vpop.f32.mrb[0].mxu0
      %v5092 = vadd.f32 %v4963, %v5091
      %v5093 = vpop.f32.mrb[0].mxu0
      %5094 = vmatprep.mubr.bf16.mxu0 %v3780
      %5095 = vmatmul.mubr.bf16.gmra.mrb[0].mxu0 %v3776
      %v5096 = vpop.f32.mrb[0].mxu0
      %v5097 = vadd.f32 %v4968, %v5096
      %v5098 = vpop.f32.mrb[0].mxu0
      %v5099 = vpop.f32.mrb[0].mxu0
      %v5100 = vadd.f32 %v4971, %v5099
      %v5101 = vpop.f32.mrb[0].mxu0
      %5102 = vmatprep.mubr.bf16.mxu0 %v3846
      %5103 = vmatmul.mubr.bf16.gmra.mrb[0].mxu0 %v3842
      %v5104 = vpop.f32.mrb[0].mxu0
      %v5105 = vadd.f32 %v4976, %v5104
      %v5106 = vpop.f32.mrb[0].mxu0
      %v5107 = vpop.f32.mrb[0].mxu0
      %v5108 = vadd.f32 %v4979, %v5107
      %v5109 = vpop.f32.mrb[0].mxu0
      %5110 = vmatprep.mubr.bf16.mxu0 %v3901
      %5111 = vmatmul.mubr.bf16.gmra.mrb[0].mxu0 %v3897
      %v5112 = vpop.f32.mrb[0].mxu0
      %v5113 = vadd.f32 %v4984, %v5112
      %v5114 = vpop.f32.mrb[0].mxu0
      %v5115 = vpop.f32.mrb[0].mxu0
      %v5116 = vadd.f32 %v4987, %v5115
      %v5117 = vpop.f32.mrb[0].mxu0
      %5118 = vmatprep.mubr.bf16.mxu0 %v3954
      %5119 = vmatmul.mubr.bf16.gmra.mrb[0].mxu0 %v3950
      %v5120 = vpop.f32.mrb[0].mxu0
      %v5121 = vadd.f32 %v4992, %v5120
      %v5122 = vpop.f32.mrb[0].mxu0
      %v5123 = vpop.f32.mrb[0].mxu0
      %v5124 = vadd.f32 %v4995, %v5123
      %v5125 = vpop.f32.mrb[0].mxu0
      %5126 = vmatprep.mubr.bf16.mxu0 %v4007
      %5127 = vmatmul.mubr.bf16.gmra.mrb[0].mxu0 %v4003
      %v5128 = vpop.f32.mrb[0].mxu0
      %v5129 = vadd.f32 %v5000, %v5128
      %v5130 = vpop.f32.mrb[0].mxu0
      %v5131 = vpop.f32.mrb[0].mxu0
      %v5132 = vadd.f32 %v5003, %v5131
      %v5133 = vpop.f32.mrb[0].mxu0
      %5134 = vmatprep.mubr.bf16.mxu0 %v4060
      %5135 = vmatmul.mubr.bf16.gmra.mrb[0].mxu0 %v4056
      %v5136 = vpop.f32.mrb[0].mxu0
      %v5137 = vadd.f32 %v5008, %v5136
      %v5138 = vpop.f32.mrb[0].mxu0
      %v5139 = vpop.f32.mrb[0].mxu0
      %v5140 = vadd.f32 %v5011, %v5139
      %v5141 = vpop.f32.mrb[0].mxu0
      %5142 = vmatprep.mubr.bf16.mxu0 %v4113
      %5143 = vmatmul.mubr.bf16.gmra.mrb[0].mxu0 %v4109
      %v5144 = vpop.f32.mrb[0].mxu0
      %v5145 = vadd.f32 %v5016, %v5144
      %v5146 = vpop.f32.mrb[0].mxu0
      %v5147 = vpop.f32.mrb[0].mxu0
      %v5148 = vadd.f32 %v5019, %v5147
      %v5149 = vpop.f32.mrb[0].mxu0
      %5150 = vmatprep.mubr.bf16.mxu0 %v4166
      %5151 = vmatmul.mubr.bf16.gmra.mrb[0].mxu0 %v4162
      %v5152 = vpop.f32.mrb[0].mxu0
      %v5153 = vadd.f32 %v5024, %v5152
      %v5154 = vpop.f32.mrb[0].mxu0
      %v5155 = vpop.f32.mrb[0].mxu0
      %v5156 = vadd.f32 %v5027, %v5155
      %v5157 = vpop.f32.mrb[0].mxu0
      %5158 = vmatprep.mubr.bf16.mxu0 %v4219
      %5159 = vmatmul.mubr.bf16.gmra.mrb[0].mxu0 %v4215
      %v5160 = vpop.f32.mrb[0].mxu0
      %v5161 = vadd.f32 %v5032, %v5160
      %v5162 = vpop.f32.mrb[0].mxu0
      %v5163 = vpop.f32.mrb[0].mxu0
      %v5164 = vadd.f32 %v5035, %v5163
      %v5165 = vpop.f32.mrb[0].mxu0
      %5166 = vmatprep.mubr.bf16.mxu0 %v4272
      %5167 = vmatmul.mubr.bf16.gmra.mrb[0].mxu0 %v4268
      %v5168 = vpop.f32.mrb[0].mxu0
      %v5169 = vadd.f32 %v5040, %v5168
      %v5170 = vpop.f32.mrb[0].mxu0
      %v5171 = vpop.f32.mrb[0].mxu0
      %v5172 = vadd.f32 %v5043, %v5171
      %v5173 = vpop.f32.mrb[0].mxu0
      %5174 = vmatprep.mubr.bf16.mxu0 %v4353
      %5175 = vmatmul.mubr.bf16.gmra.mrb[0].mxu0 %v4344
      %v5176 = vpop.f32.mrb[0].mxu0
      %v5177 = vadd.f32 %v5048, %v5176
      %v5178 = vpop.f32.mrb[0].mxu0
      %v5179 = vpop.f32.mrb[0].mxu0
      %v5180 = vadd.f32 %v5051, %v5179
      %v5181 = vpop.f32.mrb[0].mxu0
      %5182 = vdwg.mxu0
      %5183 = vmatprep.subr.bf16.mxu0 0
      %5184 = vmatpush1.bf16.msra.mxu0 %v4813
      %5185 = vmatprep.subr.bf16.mxu0 0
      %5186 = vmatpush1.bf16.msra.mxu0 %v4814
      %5187 = vmatprep.subr.bf16.mxu0 0
      %5188 = vmatpush1.bf16.msra.mxu0 %v4815
      %5189 = vmatprep.subr.bf16.mxu0 0
      %5190 = vmatpush1.bf16.msra.mxu0 %v4816
      %5191 = vmatprep.subr.bf16.mxu0 0
      %5192 = vmatpush1.bf16.msra.mxu0 %v4817
      %5193 = vmatprep.subr.bf16.mxu0 0
      %5194 = vmatpush1.bf16.msra.mxu0 %v4818
      %5195 = vmatprep.subr.bf16.mxu0 0
      %5196 = vmatpush1.bf16.msra.mxu0 %v4819
      %5197 = vmatprep.subr.bf16.mxu0 0
      %5198 = vmatpush1.bf16.msra.mxu0 %v4820
      %5199 = vmatprep.subr.bf16.mxu0 0
      %5200 = vmatpush1.bf16.msra.mxu0 %v4821
      %5201 = vmatprep.subr.bf16.mxu0 0
      %5202 = vmatpush1.bf16.msra.mxu0 %v4822
      %5203 = vmatprep.subr.bf16.mxu0 0
      %5204 = vmatpush1.bf16.msra.mxu0 %v4823
      %5205 = vmatprep.subr.bf16.mxu0 0
      %5206 = vmatpush1.bf16.msra.mxu0 %v4824
      %5207 = vmatprep.subr.bf16.mxu0 0
      %5208 = vmatpush1.bf16.msra.mxu0 %v4825
      %5209 = vmatprep.subr.bf16.mxu0 0
      %5210 = vmatpush1.bf16.msra.mxu0 %v4826
      %5211 = vmatprep.subr.bf16.mxu0 0
      %5212 = vmatpush1.bf16.msra.mxu0 %v4827
      %5213 = vmatprep.subr.bf16.mxu0 0
      %5214 = vmatpush1.bf16.msra.mxu0 %v4828
      %5215 = vmatprep.mubr.bf16.mxu0 %v3708
      %5216 = vmatmul.mubr.bf16.gmra.mrb[0].mxu0 %v3691
      %v5217 = vpop.f32.mrb[0].mxu0
      %v5218 = vadd.f32 %v5089, %v5217
      %v5219 = vpop.f32.mrb[0].mxu0
      %v5220 = vpop.f32.mrb[0].mxu0
      %v5221 = vadd.f32 %v5092, %v5220
      %v5222 = vpop.f32.mrb[0].mxu0
      %5223 = vmatprep.mubr.bf16.mxu0 %v3798
      %5224 = vmatmul.mubr.bf16.gmra.mrb[0].mxu0 %v3789
      %v5225 = vpop.f32.mrb[0].mxu0
      %v5226 = vadd.f32 %v5097, %v5225
      %v5227 = vpop.f32.mrb[0].mxu0
      %v5228 = vpop.f32.mrb[0].mxu0
      %v5229 = vadd.f32 %v5100, %v5228
      %v5230 = vpop.f32.mrb[0].mxu0
      %5231 = vmatprep.mubr.bf16.mxu0 %v3864
      %5232 = vmatmul.mubr.bf16.gmra.mrb[0].mxu0 %v3855
      %v5233 = vpop.f32.mrb[0].mxu0
      %v5234 = vadd.f32 %v5105, %v5233
      %v5235 = vpop.f32.mrb[0].mxu0
      %v5236 = vpop.f32.mrb[0].mxu0
      %v5237 = vadd.f32 %v5108, %v5236
      %v5238 = vpop.f32.mrb[0].mxu0
      %5239 = vmatprep.mubr.bf16.mxu0 %v3919
      %5240 = vmatmul.mubr.bf16.gmra.mrb[0].mxu0 %v3910
      %v5241 = vpop.f32.mrb[0].mxu0
      %v5242 = vadd.f32 %v5113, %v5241
      %v5243 = vpop.f32.mrb[0].mxu0
      %v5244 = vpop.f32.mrb[0].mxu0
      %v5245 = vadd.f32 %v5116, %v5244
      %v5246 = vpop.f32.mrb[0].mxu0
      %5247 = vmatprep.mubr.bf16.mxu0 %v3972
      %5248 = vmatmul.mubr.bf16.gmra.mrb[0].mxu0 %v3963
      %v5249 = vpop.f32.mrb[0].mxu0
      %v5250 = vadd.f32 %v5121, %v5249
      %v5251 = vpop.f32.mrb[0].mxu0
      %v5252 = vpop.f32.mrb[0].mxu0
      %v5253 = vadd.f32 %v5124, %v5252
      %v5254 = vpop.f32.mrb[0].mxu0
      %5255 = vmatprep.mubr.bf16.mxu0 %v4025
      %5256 = vmatmul.mubr.bf16.gmra.mrb[0].mxu0 %v4016
      %v5257 = vpop.f32.mrb[0].mxu0
      %v5258 = vadd.f32 %v5129, %v5257
      %v5259 = vpop.f32.mrb[0].mxu0
      %v5260 = vpop.f32.mrb[0].mxu0
      %v5261 = vadd.f32 %v5132, %v5260
      %v5262 = vpop.f32.mrb[0].mxu0
      %5263 = vmatprep.mubr.bf16.mxu0 %v4078
      %5264 = vmatmul.mubr.bf16.gmra.mrb[0].mxu0 %v4069
      %v5265 = vpop.f32.mrb[0].mxu0
      %v5266 = vadd.f32 %v5137, %v5265
      %v5267 = vpop.f32.mrb[0].mxu0
      %v5268 = vpop.f32.mrb[0].mxu0
      %v5269 = vadd.f32 %v5140, %v5268
      %v5270 = vpop.f32.mrb[0].mxu0
      %5271 = vmatprep.mubr.bf16.mxu0 %v4131
      %5272 = vmatmul.mubr.bf16.gmra.mrb[0].mxu0 %v4122
      %v5273 = vpop.f32.mrb[0].mxu0
      %v5274 = vadd.f32 %v5145, %v5273
      %v5275 = vpop.f32.mrb[0].mxu0
      %v5276 = vpop.f32.mrb[0].mxu0
      %v5277 = vadd.f32 %v5148, %v5276
      %v5278 = vpop.f32.mrb[0].mxu0
      %5279 = vmatprep.mubr.bf16.mxu0 %v4184
      %5280 = vmatmul.mubr.bf16.gmra.mrb[0].mxu0 %v4175
      %v5281 = vpop.f32.mrb[0].mxu0
      %v5282 = vadd.f32 %v5153, %v5281
      %v5283 = vpop.f32.mrb[0].mxu0
      %v5284 = vpop.f32.mrb[0].mxu0
      %v5285 = vadd.f32 %v5156, %v5284
      %v5286 = vpop.f32.mrb[0].mxu0
      %5287 = vmatprep.mubr.bf16.mxu0 %v4237
      %5288 = vmatmul.mubr.bf16.gmra.mrb[0].mxu0 %v4228
      %v5289 = vpop.f32.mrb[0].mxu0
      %v5290 = vadd.f32 %v5161, %v5289
      %v5291 = vpop.f32.mrb[0].mxu0
      %v5292 = vpop.f32.mrb[0].mxu0
      %v5293 = vadd.f32 %v5164, %v5292
      %v5294 = vpop.f32.mrb[0].mxu0
      %5295 = vmatprep.mubr.bf16.mxu0 %v4290
      %5296 = vmatmul.mubr.bf16.gmra.mrb[0].mxu0 %v4281
      %v5297 = vpop.f32.mrb[0].mxu0
      %v5298 = vadd.f32 %v5169, %v5297
      %v5299 = vpop.f32.mrb[0].mxu0
      %v5300 = vpop.f32.mrb[0].mxu0
      %v5301 = vadd.f32 %v5172, %v5300
      %v5302 = vpop.f32.mrb[0].mxu0
      %5303 = vmatprep.mubr.bf16.mxu0 %v4371
      %5304 = vmatmul.mubr.bf16.gmra.mrb[0].mxu0 %v4362
      %v5305 = vpop.f32.mrb[0].mxu0
      %v5306 = vadd.f32 %v5177, %v5305
      %v5307 = vpop.f32.mrb[0].mxu0
      %v5308 = vpop.f32.mrb[0].mxu0
      %v5309 = vadd.f32 %v5180, %v5308
      %v5310 = vpop.f32.mrb[0].mxu0
      %5311 = vdwg.mxu0
      %5312 = vmatprep.subr.bf16.mxu0 0
      %5313 = vmatpush1.bf16.msra.mxu0 %v4829
      %5314 = vmatprep.subr.bf16.mxu0 0
      %5315 = vmatpush1.bf16.msra.mxu0 %v4830
      %5316 = vmatprep.subr.bf16.mxu0 0
      %5317 = vmatpush1.bf16.msra.mxu0 %v4831
      %5318 = vmatprep.subr.bf16.mxu0 0
      %5319 = vmatpush1.bf16.msra.mxu0 %v4832
      %5320 = vmatprep.subr.bf16.mxu0 0
      %5321 = vmatpush1.bf16.msra.mxu0 %v4833
      %5322 = vmatprep.subr.bf16.mxu0 0
      %5323 = vmatpush1.bf16.msra.mxu0 %v4834
      %5324 = vmatprep.subr.bf16.mxu0 0
      %5325 = vmatpush1.bf16.msra.mxu0 %v4835
      %5326 = vmatprep.subr.bf16.mxu0 0
      %5327 = vmatpush1.bf16.msra.mxu0 %v4836
      %5328 = vmatprep.subr.bf16.mxu0 0
      %5329 = vmatpush1.bf16.msra.mxu0 %v4837
      %5330 = vmatprep.subr.bf16.mxu0 0
      %5331 = vmatpush1.bf16.msra.mxu0 %v4838
      %5332 = vmatprep.subr.bf16.mxu0 0
      %5333 = vmatpush1.bf16.msra.mxu0 %v4839
      %5334 = vmatprep.subr.bf16.mxu0 0
      %5335 = vmatpush1.bf16.msra.mxu0 %v4840
      %5336 = vmatprep.subr.bf16.mxu0 0
      %5337 = vmatpush1.bf16.msra.mxu0 %v4841
      %5338 = vmatprep.subr.bf16.mxu0 0
      %5339 = vmatpush1.bf16.msra.mxu0 %v4842
      %5340 = vmatprep.subr.bf16.mxu0 0
      %5341 = vmatpush1.bf16.msra.mxu0 %v4843
      %5342 = vmatprep.subr.bf16.mxu0 0
      %5343 = vmatpush1.bf16.msra.mxu0 %v4844
      %5344 = vmatprep.mubr.bf16.mxu0 %v3737
      %5345 = vmatmul.mubr.bf16.gmra.mrb[0].mxu0 %v3720
      %v5346 = vpop.f32.mrb[0].mxu0
      %v5347 = vadd.f32 %v5218, %v5346
      %v5348 = vpop.f32.mrb[0].mxu0
      %v5349 = vpop.f32.mrb[0].mxu0
      %v5350 = vadd.f32 %v5221, %v5349
      %v5351 = vpop.f32.mrb[0].mxu0
      %5352 = vmatprep.mubr.bf16.mxu0 %v3811
      %5353 = vmatmul.mubr.bf16.gmra.mrb[0].mxu0 %v3802
      %v5354 = vpop.f32.mrb[0].mxu0
      %v5355 = vadd.f32 %v5226, %v5354
      %v5356 = vpop.f32.mrb[0].mxu0
      %v5357 = vpop.f32.mrb[0].mxu0
      %v5358 = vadd.f32 %v5229, %v5357
      %v5359 = vpop.f32.mrb[0].mxu0
      %5360 = vmatprep.mubr.bf16.mxu0 %v3877
      %5361 = vmatmul.mubr.bf16.gmra.mrb[0].mxu0 %v3868
      %v5362 = vpop.f32.mrb[0].mxu0
      %v5363 = vadd.f32 %v5234, %v5362
      %v5364 = vpop.f32.mrb[0].mxu0
      %v5365 = vpop.f32.mrb[0].mxu0
      %v5366 = vadd.f32 %v5237, %v5365
      %v5367 = vpop.f32.mrb[0].mxu0
      %5368 = vmatprep.mubr.bf16.mxu0 %v3932
      %5369 = vmatmul.mubr.bf16.gmra.mrb[0].mxu0 %v3923
      %v5370 = vpop.f32.mrb[0].mxu0
      %v5371 = vadd.f32 %v5242, %v5370
      %v5372 = vpop.f32.mrb[0].mxu0
      %v5373 = vpop.f32.mrb[0].mxu0
      %v5374 = vadd.f32 %v5245, %v5373
      %v5375 = vpop.f32.mrb[0].mxu0
      %5376 = vmatprep.mubr.bf16.mxu0 %v3985
      %5377 = vmatmul.mubr.bf16.gmra.mrb[0].mxu0 %v3976
      %v5378 = vpop.f32.mrb[0].mxu0
      %v5379 = vadd.f32 %v5250, %v5378
      %v5380 = vpop.f32.mrb[0].mxu0
      %v5381 = vpop.f32.mrb[0].mxu0
      %v5382 = vadd.f32 %v5253, %v5381
      %v5383 = vpop.f32.mrb[0].mxu0
      %5384 = vmatprep.mubr.bf16.mxu0 %v4038
      %5385 = vmatmul.mubr.bf16.gmra.mrb[0].mxu0 %v4029
      %v5386 = vpop.f32.mrb[0].mxu0
      %v5387 = vadd.f32 %v5258, %v5386
      %v5388 = vpop.f32.mrb[0].mxu0
      %v5389 = vpop.f32.mrb[0].mxu0
      %v5390 = vadd.f32 %v5261, %v5389
      %v5391 = vpop.f32.mrb[0].mxu0
      %5392 = vmatprep.mubr.bf16.mxu0 %v4091
      %5393 = vmatmul.mubr.bf16.gmra.mrb[0].mxu0 %v4082
      %v5394 = vpop.f32.mrb[0].mxu0
      %v5395 = vadd.f32 %v5266, %v5394
      %v5396 = vpop.f32.mrb[0].mxu0
      %v5397 = vpop.f32.mrb[0].mxu0
      %v5398 = vadd.f32 %v5269, %v5397
      %v5399 = vpop.f32.mrb[0].mxu0
      %5400 = vmatprep.mubr.bf16.mxu0 %v4144
      %5401 = vmatmul.mubr.bf16.gmra.mrb[0].mxu0 %v4135
      %v5402 = vpop.f32.mrb[0].mxu0
      %v5403 = vadd.f32 %v5274, %v5402
      %v5404 = vpop.f32.mrb[0].mxu0
      %v5405 = vpop.f32.mrb[0].mxu0
      %v5406 = vadd.f32 %v5277, %v5405
      %v5407 = vpop.f32.mrb[0].mxu0
      %5408 = vmatprep.mubr.bf16.mxu0 %v4197
      %5409 = vmatmul.mubr.bf16.gmra.mrb[0].mxu0 %v4188
      %v5410 = vpop.f32.mrb[0].mxu0
      %v5411 = vadd.f32 %v5282, %v5410
      %v5412 = vpop.f32.mrb[0].mxu0
      %v5413 = vpop.f32.mrb[0].mxu0
      %v5414 = vadd.f32 %v5285, %v5413
      %v5415 = vpop.f32.mrb[0].mxu0
      %5416 = vmatprep.mubr.bf16.mxu0 %v4250
      %5417 = vmatmul.mubr.bf16.gmra.mrb[0].mxu0 %v4241
      %v5418 = vpop.f32.mrb[0].mxu0
      %v5419 = vadd.f32 %v5290, %v5418
      %v5420 = vpop.f32.mrb[0].mxu0
      %v5421 = vpop.f32.mrb[0].mxu0
      %v5422 = vadd.f32 %v5293, %v5421
      %v5423 = vpop.f32.mrb[0].mxu0
      %5424 = vmatprep.mubr.bf16.mxu0 %v4308
      %5425 = vmatmul.mubr.bf16.gmra.mrb[0].mxu0 %v4299
      %v5426 = vpop.f32.mrb[0].mxu0
      %v5427 = vadd.f32 %v5298, %v5426
      %v5428 = vpop.f32.mrb[0].mxu0
      %v5429 = vpop.f32.mrb[0].mxu0
      %v5430 = vadd.f32 %v5301, %v5429
      %v5431 = vpop.f32.mrb[0].mxu0
      %5432 = vmatprep.mubr.bf16.mxu0 %v4389
      %5433 = vmatmul.mubr.bf16.gmra.mrb[0].mxu0 %v4380
      %v5434 = vpop.f32.mrb[0].mxu0
      %v5435 = vadd.f32 %v5306, %v5434
      %v5436 = vpop.f32.mrb[0].mxu0
      %v5437 = vpop.f32.mrb[0].mxu0
      %v5438 = vadd.f32 %v5309, %v5437
      %v5439 = vpop.f32.mrb[0].mxu0
      %5440 = vdwg.mxu0
      %5441 = vmatprep.subr.bf16.mxu0 0
      %5442 = vmatpush1.bf16.msra.mxu0 %v4845
      %5443 = vmatprep.subr.bf16.mxu0 0
      %5444 = vmatpush1.bf16.msra.mxu0 %v4846
      %5445 = vmatprep.subr.bf16.mxu0 0
      %5446 = vmatpush1.bf16.msra.mxu0 %v4847
      %5447 = vmatprep.subr.bf16.mxu0 0
      %5448 = vmatpush1.bf16.msra.mxu0 %v4848
      %5449 = vmatprep.subr.bf16.mxu0 0
      %5450 = vmatpush1.bf16.msra.mxu0 %v4849
      %5451 = vmatprep.subr.bf16.mxu0 0
      %5452 = vmatpush1.bf16.msra.mxu0 %v4850
      %5453 = vmatprep.subr.bf16.mxu0 0
      %5454 = vmatpush1.bf16.msra.mxu0 %v4851
      %5455 = vmatprep.subr.bf16.mxu0 0
      %5456 = vmatpush1.bf16.msra.mxu0 %v4852
      %5457 = vmatprep.subr.bf16.mxu0 0
      %5458 = vmatpush1.bf16.msra.mxu0 0
      %5459 = vmatprep.subr.bf16.mxu0 0
      %5460 = vmatpush1.bf16.msra.mxu0 0
      %5461 = vmatprep.subr.bf16.mxu0 0
      %5462 = vmatpush1.bf16.msra.mxu0 0
      %5463 = vmatprep.subr.bf16.mxu0 0
      %5464 = vmatpush1.bf16.msra.mxu0 0
      %5465 = vmatprep.subr.bf16.mxu0 0
      %5466 = vmatpush1.bf16.msra.mxu0 0
      %5467 = vmatprep.subr.bf16.mxu0 0
      %5468 = vmatpush1.bf16.msra.mxu0 0
      %5469 = vmatprep.subr.bf16.mxu0 0
      %5470 = vmatpush1.bf16.msra.mxu0 0
      %5471 = vmatprep.subr.bf16.mxu0 0
      %5472 = vmatpush1.bf16.msra.mxu0 0
      %5473 = vmatprep.mubr.bf16.mxu0 0
      %5474 = vmatmul.mubr.bf16.gmra.mrb[0].mxu0 %v3754
      %v5475 = vpop.f32.mrb[0].mxu0
      %v5476 = vadd.f32 %v5347, %v5475
      %v5477 = vpop.f32.mrb[0].mxu0
      %v5478 = vpop.f32.mrb[0].mxu0
      %v5479 = vadd.f32 %v5350, %v5478
      %v5480 = vpop.f32.mrb[0].mxu0
      %5481 = vmatprep.mubr.bf16.mxu0 0
      %5482 = vmatmul.mubr.bf16.gmra.mrb[0].mxu0 %v3820
      %v5483 = vpop.f32.mrb[0].mxu0
      %v5484 = vadd.f32 %v5355, %v5483
      %v5485 = vpop.f32.mrb[0].mxu0
      %v5486 = vpop.f32.mrb[0].mxu0
      %v5487 = vadd.f32 %v5358, %v5486
      %v5488 = vpop.f32.mrb[0].mxu0
      %5489 = vmatprep.mubr.bf16.mxu0 0
      %5490 = vmatmul.mubr.bf16.gmra.mrb[0].mxu0 %v3886
      %v5491 = vpop.f32.mrb[0].mxu0
      %v5492 = vadd.f32 %v5363, %v5491
      %v5493 = vpop.f32.mrb[0].mxu0
      %v5494 = vpop.f32.mrb[0].mxu0
      %v5495 = vadd.f32 %v5366, %v5494
      %v5496 = vpop.f32.mrb[0].mxu0
      %5497 = vmatprep.mubr.bf16.mxu0 0
      %5498 = vmatmul.mubr.bf16.gmra.mrb[0].mxu0 %v3941
      %v5499 = vpop.f32.mrb[0].mxu0
      %v5500 = vadd.f32 %v5371, %v5499
      %v5501 = vpop.f32.mrb[0].mxu0
      %v5502 = vpop.f32.mrb[0].mxu0
      %v5503 = vadd.f32 %v5374, %v5502
      %v5504 = vpop.f32.mrb[0].mxu0
      %5505 = vmatprep.mubr.bf16.mxu0 0
      %5506 = vmatmul.mubr.bf16.gmra.mrb[0].mxu0 %v3994
      %v5507 = vpop.f32.mrb[0].mxu0
      %v5508 = vadd.f32 %v5379, %v5507
      %v5509 = vpop.f32.mrb[0].mxu0
      %v5510 = vpop.f32.mrb[0].mxu0
      %v5511 = vadd.f32 %v5382, %v5510
      %v5512 = vpop.f32.mrb[0].mxu0
      %5513 = vmatprep.mubr.bf16.mxu0 0
      %5514 = vmatmul.mubr.bf16.gmra.mrb[0].mxu0 %v4047
      %v5515 = vpop.f32.mrb[0].mxu0
      %v5516 = vadd.f32 %v5387, %v5515
      %v5517 = vpop.f32.mrb[0].mxu0
      %v5518 = vpop.f32.mrb[0].mxu0
      %v5519 = vadd.f32 %v5390, %v5518
      %v5520 = vpop.f32.mrb[0].mxu0
      %5521 = vmatprep.mubr.bf16.mxu0 0
      %5522 = vmatmul.mubr.bf16.gmra.mrb[0].mxu0 %v4100
      %v5523 = vpop.f32.mrb[0].mxu0
      %v5524 = vadd.f32 %v5395, %v5523
      %v5525 = vpop.f32.mrb[0].mxu0
      %v5526 = vpop.f32.mrb[0].mxu0
      %v5527 = vadd.f32 %v5398, %v5526
      %v5528 = vpop.f32.mrb[0].mxu0
      %5529 = vmatprep.mubr.bf16.mxu0 0
      %5530 = vmatmul.mubr.bf16.gmra.mrb[0].mxu0 %v4153
      %v5531 = vpop.f32.mrb[0].mxu0
      %v5532 = vadd.f32 %v5403, %v5531
      %v5533 = vpop.f32.mrb[0].mxu0
      %v5534 = vpop.f32.mrb[0].mxu0
      %v5535 = vadd.f32 %v5406, %v5534
      %v5536 = vpop.f32.mrb[0].mxu0
      %5537 = vmatprep.mubr.bf16.mxu0 0
      %5538 = vmatmul.mubr.bf16.gmra.mrb[0].mxu0 %v4206
      %v5539 = vpop.f32.mrb[0].mxu0
      %v5540 = vadd.f32 %v5411, %v5539
      %v5541 = vpop.f32.mrb[0].mxu0
      %v5542 = vpop.f32.mrb[0].mxu0
      %v5543 = vadd.f32 %v5414, %v5542
      %v5544 = vpop.f32.mrb[0].mxu0
      %5545 = vmatprep.mubr.bf16.mxu0 0
      %5546 = vmatmul.mubr.bf16.gmra.mrb[0].mxu0 %v4259
      %v5547 = vpop.f32.mrb[0].mxu0
      %v5548 = vadd.f32 %v5419, %v5547
      %v5549 = vpop.f32.mrb[0].mxu0
      %v5550 = vpop.f32.mrb[0].mxu0
      %v5551 = vadd.f32 %v5422, %v5550
      %v5552 = vpop.f32.mrb[0].mxu0
      %5553 = vmatprep.mubr.bf16.mxu0 0
      %5554 = vmatmul.mubr.bf16.gmra.mrb[0].mxu0 %v4317
      %v5555 = vpop.f32.mrb[0].mxu0
      %v5556 = vadd.f32 %v5427, %v5555
      %v5557 = vpop.f32.mrb[0].mxu0
      %v5558 = vpop.f32.mrb[0].mxu0
      %v5559 = vadd.f32 %v5430, %v5558
      %v5560 = vpop.f32.mrb[0].mxu0
      %5561 = vmatprep.mubr.bf16.mxu0 0
      %5562 = vmatmul.mubr.bf16.gmra.mrb[0].mxu0 %v4398
      %v5563 = vpop.f32.mrb[0].mxu0
      %v5564 = vadd.f32 %v5435, %v5563
      %v5565 = vpop.f32.mrb[0].mxu0
      %v5566 = vpop.f32.mrb[0].mxu0
      %v5567 = vadd.f32 %v5438, %v5566
      %v5568 = vpop.f32.mrb[0].mxu0
      %5569 = vdwg.mxu0
      %v5570 = vunpack.c.l.bf16 %v349
      %v5571 = vunpack.c.l.bf16 %v350
      %v5572 = vunpack.c.l.bf16 %v351
      %v5573 = vunpack.c.l.bf16 %v352
      %v5574 = vunpack.c.l.bf16 %v353
      %v5575 = vunpack.c.l.bf16 %v354
      %v5576 = vunpack.c.l.bf16 %v355
      %v5577 = vunpack.c.l.bf16 %v356
      %v5578 = vunpack.c.l.bf16 %v357
      %v5579 = vunpack.c.l.bf16 %v358
      %v5580 = vunpack.c.l.bf16 %v359
      %v5581 = vunpack.c.l.bf16 %v360
      %v5582 = vunpack.c.l.bf16 %v361
      %v5583 = vunpack.c.l.bf16 %v362
      %v5584 = vunpack.c.l.bf16 %v363
      %v5585 = vunpack.c.l.bf16 %v364
      %v5586 = vunpack.c.l.bf16 %v365
      %v5587 = vunpack.c.l.bf16 %v366
      %v5588 = vunpack.c.l.bf16 %v367
      %v5589 = vunpack.c.l.bf16 %v368
      %v5590 = vunpack.c.l.bf16 %v369
      %v5591 = vunpack.c.l.bf16 %v370
      %v5592 = vunpack.c.l.bf16 %v371
      %v5593 = vunpack.c.l.bf16 %v372
      %v5594 = vunpack.c.l.bf16 %v373
      %vm5620 = vcmask 1046528
      %v5621 = vrot.slane %v5570, 1
      %v5622 = vrot.slane %v5571, 1
      %v5623 = vsel %vm5620, %v5621, %v5622
      %v5624 = vrot.slane %v5572, 1
      %v5625 = vsel %vm5620, %v5622, %v5624
      %v5626 = vrot.slane %v5573, 1
      %v5627 = vsel %vm5620, %v5624, %v5626
      %v5628 = vrot.slane %v5574, 1
      %v5629 = vsel %vm5620, %v5626, %v5628
      %v5630 = vrot.slane %v5575, 1
      %v5631 = vsel %vm5620, %v5628, %v5630
      %v5632 = vrot.slane %v5576, 1
      %v5633 = vsel %vm5620, %v5630, %v5632
      %v5634 = vrot.slane %v5577, 1
      %v5635 = vsel %vm5620, %v5632, %v5634
      %v5636 = vrot.slane %v5578, 1
      %v5637 = vsel %vm5620, %v5634, %v5636
      %v5638 = vrot.slane %v5579, 1
      %v5639 = vsel %vm5620, %v5636, %v5638
      %v5640 = vrot.slane %v5580, 1
      %v5641 = vsel %vm5620, %v5638, %v5640
      %v5642 = vrot.slane %v5581, 1
      %v5643 = vsel %vm5620, %v5640, %v5642
      %v5644 = vrot.slane %v5582, 1
      %v5645 = vsel %vm5620, %v5642, %v5644
      %v5646 = vrot.slane %v5583, 1
      %v5647 = vsel %vm5620, %v5644, %v5646
      %v5648 = vrot.slane %v5584, 1
      %v5649 = vsel %vm5620, %v5646, %v5648
      %v5650 = vrot.slane %v5585, 1
      %v5651 = vsel %vm5620, %v5648, %v5650
      %v5652 = vrot.slane %v5586, 1
      %v5653 = vsel %vm5620, %v5650, %v5652
      %v5654 = vrot.slane %v5587, 1
      %v5655 = vsel %vm5620, %v5652, %v5654
      %v5656 = vrot.slane %v5588, 1
      %v5657 = vsel %vm5620, %v5654, %v5656
      %v5658 = vrot.slane %v5589, 1
      %v5659 = vsel %vm5620, %v5656, %v5658
      %v5660 = vrot.slane %v5590, 1
      %v5661 = vsel %vm5620, %v5658, %v5660
      %v5662 = vrot.slane %v5591, 1
      %v5663 = vsel %vm5620, %v5660, %v5662
      %v5664 = vrot.slane %v5592, 1
      %v5665 = vsel %vm5620, %v5662, %v5664
      %v5666 = vrot.slane %v5593, 1
      %v5667 = vsel %vm5620, %v5664, %v5666
      %v5668 = vrot.slane %v5594, 1
      %v5669 = vsel %vm5620, %v5666, %v5668
      %v5694 = vadd.f32 %v5476, %v5623
      %v5695 = vadd.f32 %v5479, %v5625
      %v5696 = vadd.f32 %v5484, %v5627
      %v5697 = vadd.f32 %v5487, %v5629
      %v5698 = vadd.f32 %v5492, %v5631
      %v5699 = vadd.f32 %v5495, %v5633
      %v5700 = vadd.f32 %v5500, %v5635
      %v5701 = vadd.f32 %v5503, %v5637
      %v5702 = vadd.f32 %v5508, %v5639
      %v5703 = vadd.f32 %v5511, %v5641
      %v5704 = vadd.f32 %v5516, %v5643
      %v5705 = vadd.f32 %v5519, %v5645
      %v5706 = vadd.f32 %v5524, %v5647
      %v5707 = vadd.f32 %v5527, %v5649
      %v5708 = vadd.f32 %v5532, %v5651
      %v5709 = vadd.f32 %v5535, %v5653
      %v5710 = vadd.f32 %v5540, %v5655
      %v5711 = vadd.f32 %v5543, %v5657
      %v5712 = vadd.f32 %v5548, %v5659
      %v5713 = vadd.f32 %v5551, %v5661
      %v5714 = vadd.f32 %v5556, %v5663
      %v5715 = vadd.f32 %v5559, %v5665
      %v5716 = vadd.f32 %v5564, %v5667
      %v5717 = vadd.f32 %v5567, %v5669
      %v5718 = vmax.f32 %v5694, 0.0
      %v5719 = vmax.f32 %v5695, 0.0
      %v5720 = vmax.f32 %v5696, 0.0
      %v5721 = vmax.f32 %v5697, 0.0
      %v5722 = vmax.f32 %v5698, 0.0
      %v5723 = vmax.f32 %v5699, 0.0
      %v5724 = vmax.f32 %v5700, 0.0
      %v5725 = vmax.f32 %v5701, 0.0
      %v5726 = vmax.f32 %v5702, 0.0
      %v5727 = vmax.f32 %v5703, 0.0
      %v5728 = vmax.f32 %v5704, 0.0
      %v5729 = vmax.f32 %v5705, 0.0
      %v5730 = vmax.f32 %v5706, 0.0
      %v5731 = vmax.f32 %v5707, 0.0
      %v5732 = vmax.f32 %v5708, 0.0
      %v5733 = vmax.f32 %v5709, 0.0
      %v5734 = vmax.f32 %v5710, 0.0
      %v5735 = vmax.f32 %v5711, 0.0
      %v5736 = vmax.f32 %v5712, 0.0
      %v5737 = vmax.f32 %v5713, 0.0
      %v5738 = vmax.f32 %v5714, 0.0
      %v5739 = vmax.f32 %v5715, 0.0
      %v5740 = vmax.f32 %v5716, 0.0
      %v5741 = vmax.f32 %v5717, 0.0
      %5742 = vst [vmem:[%s307] sm:$0xff] %v5718
      %5743 = vst [vmem:[%s307 + $0x8] sm:$0xff] %v5719
      %5744 = vst [vmem:[%s307 + $0x10] sm:$0xff] %v5720
      %5745 = vst [vmem:[%s307 + $0x18] sm:$0xff] %v5721
      %5746 = vst [vmem:[%s307 + $0x20] sm:$0xff] %v5722
      %5747 = vst [vmem:[%s307 + $0x28] sm:$0xff] %v5723
      %5748 = vst [vmem:[%s307 + $0x30] sm:$0xff] %v5724
      %5749 = vst [vmem:[%s307 + $0x38] sm:$0xff] %v5725
      %5750 = vst [vmem:[%s307 + $0x40] sm:$0xff] %v5726
      %5751 = vst [vmem:[%s307 + $0x48] sm:$0xff] %v5727
      %5752 = vst [vmem:[%s307 + $0x50] sm:$0xff] %v5728
      %5753 = vst [vmem:[%s307 + $0x58] sm:$0xff] %v5729
      %5754 = vst [vmem:[%s307 + $0x60] sm:$0xff] %v5730
      %5755 = vst [vmem:[%s307 + $0x68] sm:$0xff] %v5731
      %5756 = vst [vmem:[%s307 + $0x70] sm:$0xff] %v5732
      %5757 = vst [vmem:[%s307 + $0x78] sm:$0xff] %v5733
      %5758 = vst [vmem:[%s307 + $0x80] sm:$0xff] %v5734
      %5759 = vst [vmem:[%s307 + $0x88] sm:$0xff] %v5735
      %5760 = vst [vmem:[%s307 + $0x90] sm:$0xff] %v5736
      %5761 = vst [vmem:[%s307 + $0x98] sm:$0xff] %v5737
      %5762 = vst [vmem:[%s307 + $0xa0] sm:$0xff] %v5738
      %5763 = vst [vmem:[%s307 + $0xa8] sm:$0xff] %v5739
      %5764 = vst [vmem:[%s307 + $0xb0] sm:$0xff] %v5740
      %5765 = vst [vmem:[%s307 + $0xb8] sm:$0xff] %v5741
      %p5766 = scmp.lt.s32.totalorder %s21, 1
      %s5767 = scalar_select %p5766, %s21, 1
      %p5768 = scmp.lt.s32.totalorder %s22, 1
      %s5769 = scalar_select %p5768, %s22, 1
      %s5770 = smul.addr %s5769, 24
      %s5771 = smul.addr %s5767, 48
      %s5772 = sadd.s32 %s5770, %s5771
      %s5773 = smul.addr %s5772, 8
      %s5774 = scalar_lea.vmem %s6, %s5773
      // Predicated region
      $region45: #{resblock_forward.1} parent=43 // pred_check
        %p5775 = pneg %p187
      $region46: #{resblock_forward.1} parent=43 // pred_check_branch
        %5777 = sbr.rel (%p5775) target = $region48
      $region47: #{resblock_forward.1} parent=43 // pred_region
        _
      $region48: #{resblock_forward.1} parent=43 // pred_fallthru
        _
    $region44: #{resblock_forward.1} parent=5 // pred_fallthru
      _
    %p5778 = scmp.le.s32.totalorder 2, %s12
    // Predicated region
    $region49: #{resblock_forward.1} parent=5 // pred_check
      %p5779 = pneg %p5778
    $region50: #{resblock_forward.1} parent=5 // pred_check_branch
      %5781 = sbr.rel (%p5779) target = $region52
    $region51: #{resblock_forward.1} parent=5 // pred_region
      %s5782 = ssub.s32 %s12, 2
      // Predicated region
      $region53: #{resblock_forward.1} parent=51 // pred_check
        %p5783 = pneg %p193
      $region54: #{resblock_forward.1} parent=51 // pred_check_branch
        %5785 = sbr.rel (%p5783) target = $region56
      $region55: #{resblock_forward.1} parent=51 // pred_region
        %p5786 = scmp.lt.s32.totalorder %s23, 1
        %s5787 = scalar_select %p5786, %s23, 1
        %p5788 = scmp.lt.s32.totalorder %s24, 1
        %s5789 = scalar_select %p5788, %s24, 1
        %s5790 = smul.addr %s5789, 24
        %s5791 = smul.addr %s5787, 48
        %s5792 = sadd.s32 %s5790, %s5791
        %s5793 = smul.addr %s5792, 8
        %s5794 = scalar_lea.vmem %s6, %s5793
      $region56: #{resblock_forward.1} parent=51 // pred_fallthru
        _
    $region52: #{resblock_forward.1} parent=5 // pred_fallthru
      _
  $region6: #{resblock_forward.1} parent=0 // loop_footer
    %s16 = sadd.s32 1, %s12
  $region7: #{resblock_forward.1} parent=0 // loop_footer_branch
    %11 = sbr.rel target = $region3
  $region8: #{resblock_forward.1} parent=0 // loop_exit
    _

</llo_original>
